<compile_context>
chip_gen: v6e
topology: v6e:2x2x1
jax: 0.10.0
libtpu: 0.0.40
codegen_flags: <defaults>
</compile_context>

<pallas_src>
import functools

import jax
import jax.numpy as jnp
import numpy as np
from jax import lax
from jax.experimental import pallas as pl
from jax.experimental.pallas import tpu as pltpu


# ----------------------- banded-weight preparation (runs once, outside jit) -----------------------

def _band_stride2(w1, w_in):
    """Fold the 3 stride-2 column taps of a 3x3 conv into per-row-tap dense matrices.
    w1: (3,3,cin,cout) HWIO -> (3, (w_in+2)*cin, (w_in//2)*cout).
    Input lanes are padded-column-major (j*cin + c); output lanes are (x*cout + d)."""
    kh, kw, cin, cout = w1.shape
    wp, wo = w_in + 2, w_in // 2
    sel = np.zeros((kw, wp, wo), np.float32)
    for kj in range(kw):
        for x in range(wo):
            sel[kj, 2 * x + kj, x] = 1.0
    return jnp.einsum('kjx,Kkcd->Kjcxd', jnp.asarray(sel), w1,
                      precision=lax.Precision.HIGHEST).reshape(kh, wp * cin, wo * cout)


def _band_shortcut(w_sc, w_in):
    """1x1 stride-2 shortcut as a banded matrix: reads padded column 2x+1 (= original 2x)."""
    cin, cout = w_sc.shape
    wp, wo = w_in + 2, w_in // 2
    sel = np.zeros((wp, wo), np.float32)
    for x in range(wo):
        sel[2 * x + 1, x] = 1.0
    return jnp.einsum('jx,cd->jcxd', jnp.asarray(sel), w_sc,
                      precision=lax.Precision.HIGHEST).reshape(wp * cin, wo * cout)


def _band_stride1(w2, wo):
    """3x3 stride-1 conv2 banded per row tap, with the left/right zero columns baked in:
    maps unpadded (wo*cin) lanes -> (wo*cout) lanes."""
    kh, kw, cin, cout = w2.shape
    sel = np.zeros((kw, wo, wo), np.float32)
    for kj in range(kw):
        for x in range(wo):
            j = x + kj - 1
            if 0 <= j < wo:
                sel[kj, j, x] = 1.0
    return jnp.einsum('kjx,Kkcd->Kjcxd', jnp.asarray(sel), w2,
                      precision=lax.Precision.HIGHEST).reshape(kh, wo * cin, wo * cout)


def prepare_params(params, x_hw=16):
    """One-time parameter prep (hoisted out of the jitted forward, per the perf review):
    banded GEMM weights + packed Fixup scalars."""
    w1e_l, w1o_l, w2_l, scal = [], [], [], []
    w = x_hw
    for p in params['units']:
        w1b = _band_stride2(p['w1'], w)            # (3, (w+2)*cin, (w//2)*cout)
        wscb = _band_shortcut(p['w_sc'], w)        # ((w+2)*cin, (w//2)*cout)
        w2b = _band_stride1(p['w2'], w // 2)       # (3, (w//2)*cout, (w//2)*cout)
        # even plane drives row-taps 0 & 2; odd plane drives row-tap 1 + the shortcut.
        w1e_l.append(jnp.concatenate([w1b[0], w1b[2]], axis=-1))
        w1o_l.append(jnp.concatenate([w1b[1], wscb], axis=-1))
        # conv2's 3 row taps stacked along N -> a single in-kernel GEMM.
        w2_l.append(jnp.concatenate([w2b[0], w2b[1], w2b[2]], axis=-1))
        scal += [p['bias1a'], p['bias1b'], p['bias2a'], p['scale'], p['bias2b']]
        w //= 2
    scal.append(params['fc_b'])
    return dict(scal=jnp.stack(scal).astype(jnp.float32),
                w1e=w1e_l, w1o=w1o_l, w2=w2_l,
                fc_w=params['fc_w'].astype(jnp.float32))


# ----------------------------------- fused kernel body -----------------------------------

def _fixup_unit(xb, w1e, w1o, w2cat, b1b, b2a, scale, b2b, n_img, H, W, cin, cout):
    """One FixupResUnit on the flat batched layout.
    xb: (n_img*H, W*cin) with bias1a already added (interior only; padding stays zero).
    Returns (n_img*(H//2), (W//2)*cout)."""
    Ho, Wo = H // 2, W // 2
    Hp, Nw = Ho + 1, Wo * cout

    # zero-pad W on lanes; build the stride-2 parity row planes (zero-padded in H).
    zlane = jnp.zeros((n_img * H, cin), jnp.float32)
    xp = jnp.concatenate([zlane, xb, zlane], axis=-1)           # lanes = padded col j*cin + c
    Kp = (W + 2) * cin
    zrow = jnp.zeros((1, Kp), jnp.float32)
    e_parts, o_parts = [], []
    for i in range(n_img):
        base = i * H
        e_parts.append(zrow)                                    # padded row 0 (top pad)
        for r in range(1, H, 2):                                # padded rows 2,4,...,2*Ho
            e_parts.append(xp[base + r:base + r + 1, :])
        for r in range(0, H, 2):                                # padded rows 1,3,...,2*Ho-1
            o_parts.append(xp[base + r:base + r + 1, :])
        o_parts.append(zrow)                                    # padded row 2*Ho+1 (keeps Hp uniform)
    a_e = jnp.concatenate(e_parts, axis=0)                      # (n_img*Hp, Kp)
    a_o = jnp.concatenate(o_parts, axis=0)                      # (n_img*Hp, Kp)

    # conv1 + shortcut: 2 batched GEMMs (M = n_img*Hp), taps / shortcut concatenated along N.
    Re = jnp.dot(a_e, w1e, preferred_element_type=jnp.float32)  # [row-tap0 | row-tap2]
    Ro = jnp.dot(a_o, w1o, preferred_element_type=jnp.float32)  # [row-tap1 | 1x1 shortcut]
    T01 = Re[:, 0:Nw] + Ro[:, 0:Nw]
    T2 = Re[:, Nw:2 * Nw]
    Scut = Ro[:, Nw:2 * Nw]
    h_parts, sc_parts = [], []
    for i in range(n_img):                                      # per-image row realignment (cheap)
        b0 = i * Hp
        h_parts.append(T01[b0:b0 + Ho, :] + T2[b0 + 1:b0 + Ho + 1, :])
        sc_parts.append(Scut[b0:b0 + Ho, :])
    conv1 = jnp.concatenate(h_parts, axis=0)                    # (n_img*Ho, Nw)
    sc = jnp.concatenate(sc_parts, axis=0)
    h = jnp.maximum(conv1 + b1b, 0.0) + b2a

    # conv2: one batched GEMM; the 3 row taps sit side by side along N.
    S = jnp.dot(h, w2cat, preferred_element_type=jnp.float32)   # (n_img*Ho, 3*Nw)
    zr = jnp.zeros((1, Nw), jnp.float32)
    out_parts = []
    for i in range(n_img):
        b0 = i * Ho
        s0 = S[b0:b0 + Ho, 0:Nw]
        s1 = S[b0:b0 + Ho, Nw:2 * Nw]
        s2 = S[b0:b0 + Ho, 2 * Nw:3 * Nw]
        out_parts.append(s1
                         + jnp.concatenate([zr, s0[0:Ho - 1, :]], axis=0)
                         + jnp.concatenate([s2[1:Ho, :], zr], axis=0))
    conv2 = jnp.concatenate(out_parts, axis=0)                  # (n_img*Ho, Nw)
    return jnp.maximum(conv2 * scale + b2b + sc, 0.0)


def _find_cluster_kernel(scal_ref, x1_ref, x2_ref, *rest, npair, unit_dims):
    o_ref, fcw_ref = rest[-1], rest[-2]
    wrefs = rest[:-2]
    n_img = 2 * npair

    # Siamese: both branches stacked along the flat row axis and encoded once.
    act = jnp.concatenate([x1_ref[...], x2_ref[...]], axis=0)   # (n_img*H0, W0*cin0)

    for u, (H, W, cin, cout) in enumerate(unit_dims):
        b1a = scal_ref[5 * u + 0]
        b1b = scal_ref[5 * u + 1]
        b2a = scal_ref[5 * u + 2]
        scale = scal_ref[5 * u + 3]
        b2b = scal_ref[5 * u + 4]
        act = _fixup_unit(act + b1a,
                          wrefs[3 * u][...], wrefs[3 * u + 1][...], wrefs[3 * u + 2][...],
                          b1b, b2a, scale, b2b, n_img, H, W, cin, cout)

    # AdaptiveAvgPool2d(1) + (f1 - f2)^2 @ fc_w + fc_b, all on the VPU/XLU.
    Hf, Wf = unit_dims[-1][0] // 2, unit_dims[-1][1] // 2
    dimh = unit_dims[-1][3]
    feats = []
    for i in range(n_img):
        rsum = jnp.sum(act[i * Hf:(i + 1) * Hf, :], axis=0, keepdims=True)   # (1, Wf*dimh)
        fsum = rsum[:, 0:dimh]
        for x in range(1, Wf):
            fsum = fsum + rsum[:, x * dimh:(x + 1) * dimh]
        feats.append(fsum)
    feat = jnp.concatenate(feats, axis=0) * (1.0 / float(Hf * Wf))           # (n_img, dimh)

    diff2 = (feat[0:npair, :] - feat[npair:2 * npair, :]) ** 2
    fc_b = scal_ref[5 * len(unit_dims)]
    y = jnp.sum(diff2 * fcw_ref[...], axis=-1, keepdims=True) + fc_b         # (npair, 1)
    o_ref[...] = y.astype(o_ref.dtype)


# ----------------------------------------- forward -----------------------------------------

def find_cluster_forward(prep, x1, x2, mask=None):
    """Siamese forward; `mask` accepted but unused (matches the reference module)."""
    del mask
    B, C, H, W = x1.shape
    assert C == 1
    n_img = 2 * B
    x1f = x1.astype(jnp.float32).reshape(B * H, W)
    x2f = x2.astype(jnp.float32).reshape(B * H, W)

    # Static per-unit dims recovered from the pre-banded weight shapes.
    unit_dims, h, w = [], H, W
    for w1e in prep['w1e']:
        k1, n2 = w1e.shape
        cin = k1 // (w + 2)
        cout = (n2 // 2) // (w // 2)
        unit_dims.append((h, w, cin, cout))
        h, w = h // 2, w // 2
    unit_dims = tuple(unit_dims)

    flat_w = []
    for u in range(len(unit_dims)):
        flat_w += [prep['w1e'][u], prep['w1o'][u], prep['w2'][u]]
    args = [prep['scal'], x1f, x2f] + flat_w + [prep['fc_w']]

    smem = pl.BlockSpec(memory_space=pltpu.MemorySpace.SMEM)
    vmem = pl.BlockSpec(memory_space=pltpu.MemorySpace.VMEM)

    # Advisory cost so XLA schedules the few surrounding ops sensibly.
    flops = 0
    for (uh, uw, cin, cout) in unit_dims:
        hp, ho, nw, kp = uh // 2 + 1, uh // 2, (uw // 2) * cout, (uw + 2) * cin
        flops += 2 * n_img * (2 * hp * kp * (2 * nw) + ho * nw * (3 * nw))
    bytes_acc = 4 * (sum(int(np.prod(a.shape)) for a in args) + B)

    y = pl.pallas_call(
        functools.partial(_find_cluster_kernel, npair=B, unit_dims=unit_dims),
        out_shape=jax.ShapeDtypeStruct((B, 1), jnp.float32),
        in_specs=[smem] + [vmem] * (len(args) - 1),
        out_specs=vmem,
        compiler_params=pltpu.CompilerParams(vmem_limit_bytes=32 * 1024 * 1024),
        cost_estimate=pl.CostEstimate(flops=int(flops), transcendentals=0,
                                      bytes_accessed=int(bytes_acc)),
    )(*args)
    return y[:, 0]                                              # .squeeze(-1)


# ------------------------------ pure-JAX reference (for checking) ----------------------------

def _conv_ref(x, w, stride, pad):
    return lax.conv_general_dilated(
        x, w, window_strides=(stride, stride), padding=((pad, pad), (pad, pad)),
        dimension_numbers=('NHWC', 'HWIO', 'NHWC'), precision=lax.Precision.HIGHEST)


def reference_forward(params, x1_nchw, x2_nchw, mask=None):
    del mask
    def unit(x, p):
        xb = x + p['bias1a']
        hh = jax.nn.relu(_conv_ref(xb, p['w1'], 2, 1) + p['bias1b'])
        sc = _conv_ref(xb, p['w_sc'][None, None], 2, 0)
        return jax.nn.relu(_conv_ref(hh + p['bias2a'], p['w2'], 1, 1) * p['scale']
                           + p['bias2b'] + sc)
    def encode(x):
        hh = jnp.transpose(x, (0, 2, 3, 1)).astype(jnp.float32)
        for p in params['units']:
            hh = unit(hh, p)
        return jnp.mean(hh, axis=(1, 2))
    f1, f2 = encode(x1_nchw), encode(x2_nchw)
    d = (f1 - f2) ** 2
    return jnp.sum(d * params['fc_w'][0], axis=-1) + params['fc_b']


# ------------------------------------------ parameters ----------------------------------------

def init_params(key, dim_hids=32):
    chans = [(1, 16), (16, 32), (32, dim_hids)]
    keys = jax.random.split(key, len(chans) + 1)
    units = []
    for k, (cin, cout) in zip(keys[:-1], chans):
        ks = jax.random.split(k, 8)
        units.append(dict(
            w1=jax.random.normal(ks[0], (3, 3, cin, cout), jnp.float32) * (0.5 / np.sqrt(9 * cin)),
            w2=jax.random.normal(ks[1], (3, 3, cout, cout), jnp.float32) * (0.5 / np.sqrt(9 * cout)),
            w_sc=jax.random.normal(ks[2], (cin, cout), jnp.float32) * (0.5 / np.sqrt(cin)),
            bias1a=0.1 * jax.random.normal(ks[3], (), jnp.float32),
            bias1b=0.1 * jax.random.normal(ks[4], (), jnp.float32),
            bias2a=0.1 * jax.random.normal(ks[5], (), jnp.float32),
            bias2b=0.1 * jax.random.normal(ks[6], (), jnp.float32),
            scale=1.0 + 0.1 * jax.random.normal(ks[7], (), jnp.float32),
        ))
    kw, kb = jax.random.split(keys[-1], 2)
    return dict(
        units=units,
        fc_w=jax.random.normal(kw, (1, dim_hids), jnp.float32) / np.sqrt(dim_hids),
        fc_b=0.1 * jax.random.normal(kb, (), jnp.float32),
    )


# --------------------------------------------- main -------------------------------------------

if __name__ == "__main__":
    key = jax.random.PRNGKey(0)
    kp, kx1, kx2 = jax.random.split(key, 3)

    dim_hids = 32                                          # small FindCluster(dim_hids=32)
    params = init_params(kp, dim_hids=dim_hids)
    prep = prepare_params(params, x_hw=16)                 # one-time banding, hoisted out of jit

    # NCHW inputs like the PyTorch module (1-channel 16x16 images, batch 2)
    x1 = jax.random.normal(kx1, (2, 1, 16, 16), jnp.float32)
    x2 = jax.random.normal(kx2, (2, 1, 16, 16), jnp.float32)

    fwd = jax.jit(find_cluster_forward)
    out = jax.block_until_ready(fwd(prep, x1, x2))
    assert out.shape == (2,) and out.dtype == jnp.float32

    ref = jax.block_until_ready(jax.jit(reference_forward)(params, x1, x2))
    # Tightened 10x vs the previous self-test (f32 end-to-end; keeps headroom for the MXU's
    # f32 pass behaviour rather than assuming bit-level matmul equivalence).
    np.testing.assert_allclose(np.asarray(out), np.asarray(ref), rtol=1e-3, atol=1e-4)

    print("KERNEL_OK")
</pallas_src>

<mosaic_0001>
module attributes {stable_mosaic.version = 11 : i64} {
  func.func @_find_cluster_kernel(%arg0: memref<16xf32, #tpu.memory_space<smem>>, %arg1: memref<32x16xf32, #tpu.memory_space<vmem>>, %arg2: memref<32x16xf32, #tpu.memory_space<vmem>>, %arg3: memref<18x256xf32, #tpu.memory_space<vmem>>, %arg4: memref<18x256xf32, #tpu.memory_space<vmem>>, %arg5: memref<128x384xf32, #tpu.memory_space<vmem>>, %arg6: memref<160x256xf32, #tpu.memory_space<vmem>>, %arg7: memref<160x256xf32, #tpu.memory_space<vmem>>, %arg8: memref<128x384xf32, #tpu.memory_space<vmem>>, %arg9: memref<192x128xf32, #tpu.memory_space<vmem>>, %arg10: memref<192x128xf32, #tpu.memory_space<vmem>>, %arg11: memref<64x192xf32, #tpu.memory_space<vmem>>, %arg12: memref<1x32xf32, #tpu.memory_space<vmem>>, %arg13: memref<2x1xf32, #tpu.memory_space<vmem>>) attributes {dimension_semantics = [], scalar_prefetch = 0 : i64, scratch_operands = 0 : i64, tpu.core_type = #tpu.core_type<tc>} {
    %c0 = arith.constant 0 : index
    %c0_0 = arith.constant 0 : index
    %0 = vector.load %arg1[%c0, %c0_0] : memref<32x16xf32, #tpu.memory_space<vmem>>, vector<32x16xf32>
    %c0_1 = arith.constant 0 : index
    %c0_2 = arith.constant 0 : index
    %1 = vector.load %arg2[%c0_1, %c0_2] : memref<32x16xf32, #tpu.memory_space<vmem>>, vector<32x16xf32>
    %2 = tpu.concatenate %0, %1 in 0 : vector<32x16xf32>, vector<32x16xf32> -> vector<64x16xf32>
    %c0_3 = arith.constant 0 : index
    %3 = memref.load %arg0[%c0_3] : memref<16xf32, #tpu.memory_space<smem>>
    %c1 = arith.constant 1 : index
    %4 = memref.load %arg0[%c1] : memref<16xf32, #tpu.memory_space<smem>>
    %c2 = arith.constant 2 : index
    %5 = memref.load %arg0[%c2] : memref<16xf32, #tpu.memory_space<smem>>
    %c3 = arith.constant 3 : index
    %6 = memref.load %arg0[%c3] : memref<16xf32, #tpu.memory_space<smem>>
    %c4 = arith.constant 4 : index
    %7 = memref.load %arg0[%c4] : memref<16xf32, #tpu.memory_space<smem>>
    %8 = vector.broadcast %3 : f32 to vector<64x16xf32>
    %9 = arith.addf %2, %8 : vector<64x16xf32>
    %c0_4 = arith.constant 0 : index
    %c0_5 = arith.constant 0 : index
    %10 = vector.load %arg3[%c0_4, %c0_5] : memref<18x256xf32, #tpu.memory_space<vmem>>, vector<18x256xf32>
    %c0_6 = arith.constant 0 : index
    %c0_7 = arith.constant 0 : index
    %11 = vector.load %arg4[%c0_6, %c0_7] : memref<18x256xf32, #tpu.memory_space<vmem>>, vector<18x256xf32>
    %c0_8 = arith.constant 0 : index
    %c0_9 = arith.constant 0 : index
    %12 = vector.load %arg5[%c0_8, %c0_9] : memref<128x384xf32, #tpu.memory_space<vmem>>, vector<128x384xf32>
    %cst = arith.constant 0.000000e+00 : f32
    %13 = vector.broadcast %cst : f32 to vector<64x1xf32>
    %14 = tpu.concatenate %13, %9, %13 in 1 : vector<64x1xf32>, vector<64x16xf32>, vector<64x1xf32> -> vector<64x18xf32>
    %cst_10 = arith.constant 0.000000e+00 : f32
    %15 = vector.broadcast %cst_10 : f32 to vector<1x18xf32>
    %16 = vector.extract_strided_slice %14 {offsets = [1, 0], sizes = [1, 18], strides = [1, 1]} : vector<64x18xf32> to vector<1x18xf32>
    %17 = vector.extract_strided_slice %14 {offsets = [3, 0], sizes = [1, 18], strides = [1, 1]} : vector<64x18xf32> to vector<1x18xf32>
    %18 = vector.extract_strided_slice %14 {offsets = [5, 0], sizes = [1, 18], strides = [1, 1]} : vector<64x18xf32> to vector<1x18xf32>
    %19 = vector.extract_strided_slice %14 {offsets = [7, 0], sizes = [1, 18], strides = [1, 1]} : vector<64x18xf32> to vector<1x18xf32>
    %20 = vector.extract_strided_slice %14 {offsets = [9, 0], sizes = [1, 18], strides = [1, 1]} : vector<64x18xf32> to vector<1x18xf32>
    %21 = vector.extract_strided_slice %14 {offsets = [11, 0], sizes = [1, 18], strides = [1, 1]} : vector<64x18xf32> to vector<1x18xf32>
    %22 = vector.extract_strided_slice %14 {offsets = [13, 0], sizes = [1, 18], strides = [1, 1]} : vector<64x18xf32> to vector<1x18xf32>
    %23 = vector.extract_strided_slice %14 {offsets = [15, 0], sizes = [1, 18], strides = [1, 1]} : vector<64x18xf32> to vector<1x18xf32>
    %24 = vector.extract_strided_slice %14 {offsets = [0, 0], sizes = [1, 18], strides = [1, 1]} : vector<64x18xf32> to vector<1x18xf32>
    %25 = vector.extract_strided_slice %14 {offsets = [2, 0], sizes = [1, 18], strides = [1, 1]} : vector<64x18xf32> to vector<1x18xf32>
    %26 = vector.extract_strided_slice %14 {offsets = [4, 0], sizes = [1, 18], strides = [1, 1]} : vector<64x18xf32> to vector<1x18xf32>
    %27 = vector.extract_strided_slice %14 {offsets = [6, 0], sizes = [1, 18], strides = [1, 1]} : vector<64x18xf32> to vector<1x18xf32>
    %28 = vector.extract_strided_slice %14 {offsets = [8, 0], sizes = [1, 18], strides = [1, 1]} : vector<64x18xf32> to vector<1x18xf32>
    %29 = vector.extract_strided_slice %14 {offsets = [10, 0], sizes = [1, 18], strides = [1, 1]} : vector<64x18xf32> to vector<1x18xf32>
    %30 = vector.extract_strided_slice %14 {offsets = [12, 0], sizes = [1, 18], strides = [1, 1]} : vector<64x18xf32> to vector<1x18xf32>
    %31 = vector.extract_strided_slice %14 {offsets = [14, 0], sizes = [1, 18], strides = [1, 1]} : vector<64x18xf32> to vector<1x18xf32>
    %32 = vector.extract_strided_slice %14 {offsets = [17, 0], sizes = [1, 18], strides = [1, 1]} : vector<64x18xf32> to vector<1x18xf32>
    %33 = vector.extract_strided_slice %14 {offsets = [19, 0], sizes = [1, 18], strides = [1, 1]} : vector<64x18xf32> to vector<1x18xf32>
    %34 = vector.extract_strided_slice %14 {offsets = [21, 0], sizes = [1, 18], strides = [1, 1]} : vector<64x18xf32> to vector<1x18xf32>
    %35 = vector.extract_strided_slice %14 {offsets = [23, 0], sizes = [1, 18], strides = [1, 1]} : vector<64x18xf32> to vector<1x18xf32>
    %36 = vector.extract_strided_slice %14 {offsets = [25, 0], sizes = [1, 18], strides = [1, 1]} : vector<64x18xf32> to vector<1x18xf32>
    %37 = vector.extract_strided_slice %14 {offsets = [27, 0], sizes = [1, 18], strides = [1, 1]} : vector<64x18xf32> to vector<1x18xf32>
    %38 = vector.extract_strided_slice %14 {offsets = [29, 0], sizes = [1, 18], strides = [1, 1]} : vector<64x18xf32> to vector<1x18xf32>
    %39 = vector.extract_strided_slice %14 {offsets = [31, 0], sizes = [1, 18], strides = [1, 1]} : vector<64x18xf32> to vector<1x18xf32>
    %40 = vector.extract_strided_slice %14 {offsets = [16, 0], sizes = [1, 18], strides = [1, 1]} : vector<64x18xf32> to vector<1x18xf32>
    %41 = vector.extract_strided_slice %14 {offsets = [18, 0], sizes = [1, 18], strides = [1, 1]} : vector<64x18xf32> to vector<1x18xf32>
    %42 = vector.extract_strided_slice %14 {offsets = [20, 0], sizes = [1, 18], strides = [1, 1]} : vector<64x18xf32> to vector<1x18xf32>
    %43 = vector.extract_strided_slice %14 {offsets = [22, 0], sizes = [1, 18], strides = [1, 1]} : vector<64x18xf32> to vector<1x18xf32>
    %44 = vector.extract_strided_slice %14 {offsets = [24, 0], sizes = [1, 18], strides = [1, 1]} : vector<64x18xf32> to vector<1x18xf32>
    %45 = vector.extract_strided_slice %14 {offsets = [26, 0], sizes = [1, 18], strides = [1, 1]} : vector<64x18xf32> to vector<1x18xf32>
    %46 = vector.extract_strided_slice %14 {offsets = [28, 0], sizes = [1, 18], strides = [1, 1]} : vector<64x18xf32> to vector<1x18xf32>
    %47 = vector.extract_strided_slice %14 {offsets = [30, 0], sizes = [1, 18], strides = [1, 1]} : vector<64x18xf32> to vector<1x18xf32>
    %48 = vector.extract_strided_slice %14 {offsets = [33, 0], sizes = [1, 18], strides = [1, 1]} : vector<64x18xf32> to vector<1x18xf32>
    %49 = vector.extract_strided_slice %14 {offsets = [35, 0], sizes = [1, 18], strides = [1, 1]} : vector<64x18xf32> to vector<1x18xf32>
    %50 = vector.extract_strided_slice %14 {offsets = [37, 0], sizes = [1, 18], strides = [1, 1]} : vector<64x18xf32> to vector<1x18xf32>
    %51 = vector.extract_strided_slice %14 {offsets = [39, 0], sizes = [1, 18], strides = [1, 1]} : vector<64x18xf32> to vector<1x18xf32>
    %52 = vector.extract_strided_slice %14 {offsets = [41, 0], sizes = [1, 18], strides = [1, 1]} : vector<64x18xf32> to vector<1x18xf32>
    %53 = vector.extract_strided_slice %14 {offsets = [43, 0], sizes = [1, 18], strides = [1, 1]} : vector<64x18xf32> to vector<1x18xf32>
    %54 = vector.extract_strided_slice %14 {offsets = [45, 0], sizes = [1, 18], strides = [1, 1]} : vector<64x18xf32> to vector<1x18xf32>
    %55 = vector.extract_strided_slice %14 {offsets = [47, 0], sizes = [1, 18], strides = [1, 1]} : vector<64x18xf32> to vector<1x18xf32>
    %56 = vector.extract_strided_slice %14 {offsets = [32, 0], sizes = [1, 18], strides = [1, 1]} : vector<64x18xf32> to vector<1x18xf32>
    %57 = vector.extract_strided_slice %14 {offsets = [34, 0], sizes = [1, 18], strides = [1, 1]} : vector<64x18xf32> to vector<1x18xf32>
    %58 = vector.extract_strided_slice %14 {offsets = [36, 0], sizes = [1, 18], strides = [1, 1]} : vector<64x18xf32> to vector<1x18xf32>
    %59 = vector.extract_strided_slice %14 {offsets = [38, 0], sizes = [1, 18], strides = [1, 1]} : vector<64x18xf32> to vector<1x18xf32>
    %60 = vector.extract_strided_slice %14 {offsets = [40, 0], sizes = [1, 18], strides = [1, 1]} : vector<64x18xf32> to vector<1x18xf32>
    %61 = vector.extract_strided_slice %14 {offsets = [42, 0], sizes = [1, 18], strides = [1, 1]} : vector<64x18xf32> to vector<1x18xf32>
    %62 = vector.extract_strided_slice %14 {offsets = [44, 0], sizes = [1, 18], strides = [1, 1]} : vector<64x18xf32> to vector<1x18xf32>
    %63 = vector.extract_strided_slice %14 {offsets = [46, 0], sizes = [1, 18], strides = [1, 1]} : vector<64x18xf32> to vector<1x18xf32>
    %64 = vector.extract_strided_slice %14 {offsets = [49, 0], sizes = [1, 18], strides = [1, 1]} : vector<64x18xf32> to vector<1x18xf32>
    %65 = vector.extract_strided_slice %14 {offsets = [51, 0], sizes = [1, 18], strides = [1, 1]} : vector<64x18xf32> to vector<1x18xf32>
    %66 = vector.extract_strided_slice %14 {offsets = [53, 0], sizes = [1, 18], strides = [1, 1]} : vector<64x18xf32> to vector<1x18xf32>
    %67 = vector.extract_strided_slice %14 {offsets = [55, 0], sizes = [1, 18], strides = [1, 1]} : vector<64x18xf32> to vector<1x18xf32>
    %68 = vector.extract_strided_slice %14 {offsets = [57, 0], sizes = [1, 18], strides = [1, 1]} : vector<64x18xf32> to vector<1x18xf32>
    %69 = vector.extract_strided_slice %14 {offsets = [59, 0], sizes = [1, 18], strides = [1, 1]} : vector<64x18xf32> to vector<1x18xf32>
    %70 = vector.extract_strided_slice %14 {offsets = [61, 0], sizes = [1, 18], strides = [1, 1]} : vector<64x18xf32> to vector<1x18xf32>
    %71 = vector.extract_strided_slice %14 {offsets = [63, 0], sizes = [1, 18], strides = [1, 1]} : vector<64x18xf32> to vector<1x18xf32>
    %72 = vector.extract_strided_slice %14 {offsets = [48, 0], sizes = [1, 18], strides = [1, 1]} : vector<64x18xf32> to vector<1x18xf32>
    %73 = vector.extract_strided_slice %14 {offsets = [50, 0], sizes = [1, 18], strides = [1, 1]} : vector<64x18xf32> to vector<1x18xf32>
    %74 = vector.extract_strided_slice %14 {offsets = [52, 0], sizes = [1, 18], strides = [1, 1]} : vector<64x18xf32> to vector<1x18xf32>
    %75 = vector.extract_strided_slice %14 {offsets = [54, 0], sizes = [1, 18], strides = [1, 1]} : vector<64x18xf32> to vector<1x18xf32>
    %76 = vector.extract_strided_slice %14 {offsets = [56, 0], sizes = [1, 18], strides = [1, 1]} : vector<64x18xf32> to vector<1x18xf32>
    %77 = vector.extract_strided_slice %14 {offsets = [58, 0], sizes = [1, 18], strides = [1, 1]} : vector<64x18xf32> to vector<1x18xf32>
    %78 = vector.extract_strided_slice %14 {offsets = [60, 0], sizes = [1, 18], strides = [1, 1]} : vector<64x18xf32> to vector<1x18xf32>
    %79 = vector.extract_strided_slice %14 {offsets = [62, 0], sizes = [1, 18], strides = [1, 1]} : vector<64x18xf32> to vector<1x18xf32>
    %80 = tpu.concatenate %15, %16, %17, %18, %19, %20, %21, %22, %23, %15, %32, %33, %34, %35, %36, %37 in 0 : vector<1x18xf32>, vector<1x18xf32>, vector<1x18xf32>, vector<1x18xf32>, vector<1x18xf32>, vector<1x18xf32>, vector<1x18xf32>, vector<1x18xf32>, vector<1x18xf32>, vector<1x18xf32>, vector<1x18xf32>, vector<1x18xf32>, vector<1x18xf32>, vector<1x18xf32>, vector<1x18xf32>, vector<1x18xf32> -> vector<16x18xf32>
    %81 = tpu.concatenate %38, %39, %15, %48, %49, %50, %51, %52, %53, %54, %55, %15, %64, %65, %66, %67 in 0 : vector<1x18xf32>, vector<1x18xf32>, vector<1x18xf32>, vector<1x18xf32>, vector<1x18xf32>, vector<1x18xf32>, vector<1x18xf32>, vector<1x18xf32>, vector<1x18xf32>, vector<1x18xf32>, vector<1x18xf32>, vector<1x18xf32>, vector<1x18xf32>, vector<1x18xf32>, vector<1x18xf32>, vector<1x18xf32> -> vector<16x18xf32>
    %82 = tpu.concatenate %68, %69, %70, %71 in 0 : vector<1x18xf32>, vector<1x18xf32>, vector<1x18xf32>, vector<1x18xf32> -> vector<4x18xf32>
    %83 = tpu.concatenate %80, %81, %82 in 0 : vector<16x18xf32>, vector<16x18xf32>, vector<4x18xf32> -> vector<36x18xf32>
    %84 = tpu.concatenate %24, %25, %26, %27, %28, %29, %30, %31, %15, %40, %41, %42, %43, %44, %45, %46 in 0 : vector<1x18xf32>, vector<1x18xf32>, vector<1x18xf32>, vector<1x18xf32>, vector<1x18xf32>, vector<1x18xf32>, vector<1x18xf32>, vector<1x18xf32>, vector<1x18xf32>, vector<1x18xf32>, vector<1x18xf32>, vector<1x18xf32>, vector<1x18xf32>, vector<1x18xf32>, vector<1x18xf32>, vector<1x18xf32> -> vector<16x18xf32>
    %85 = tpu.concatenate %47, %15, %56, %57, %58, %59, %60, %61, %62, %63, %15, %72, %73, %74, %75, %76 in 0 : vector<1x18xf32>, vector<1x18xf32>, vector<1x18xf32>, vector<1x18xf32>, vector<1x18xf32>, vector<1x18xf32>, vector<1x18xf32>, vector<1x18xf32>, vector<1x18xf32>, vector<1x18xf32>, vector<1x18xf32>, vector<1x18xf32>, vector<1x18xf32>, vector<1x18xf32>, vector<1x18xf32>, vector<1x18xf32> -> vector<16x18xf32>
    %86 = tpu.concatenate %77, %78, %79, %15 in 0 : vector<1x18xf32>, vector<1x18xf32>, vector<1x18xf32>, vector<1x18xf32> -> vector<4x18xf32>
    %87 = tpu.concatenate %84, %85, %86 in 0 : vector<16x18xf32>, vector<16x18xf32>, vector<4x18xf32> -> vector<36x18xf32>
    %cst_11 = arith.constant dense<0.000000e+00> : vector<36x256xf32>
    %88 = tpu.matmul %83, %10, %cst_11 {dimension_numbers = #tpu.dot_dimension_numbers<[1], [0], [0], [1], [0, 0, 1, 1], [], []>} : vector<36x18xf32>, vector<18x256xf32>, vector<36x256xf32> -> vector<36x256xf32>
    %cst_12 = arith.constant dense<0.000000e+00> : vector<36x256xf32>
    %89 = tpu.matmul %87, %11, %cst_12 {dimension_numbers = #tpu.dot_dimension_numbers<[1], [0], [0], [1], [0, 0, 1, 1], [], []>} : vector<36x18xf32>, vector<18x256xf32>, vector<36x256xf32> -> vector<36x256xf32>
    %90 = vector.extract_strided_slice %88 {offsets = [0, 0], sizes = [36, 128], strides = [1, 1]} : vector<36x256xf32> to vector<36x128xf32>
    %91 = vector.extract_strided_slice %89 {offsets = [0, 0], sizes = [36, 128], strides = [1, 1]} : vector<36x256xf32> to vector<36x128xf32>
    %92 = arith.addf %90, %91 : vector<36x128xf32>
    %93 = vector.extract_strided_slice %88 {offsets = [0, 128], sizes = [36, 128], strides = [1, 1]} : vector<36x256xf32> to vector<36x128xf32>
    %94 = vector.extract_strided_slice %89 {offsets = [0, 128], sizes = [36, 128], strides = [1, 1]} : vector<36x256xf32> to vector<36x128xf32>
    %95 = vector.extract_strided_slice %92 {offsets = [0, 0], sizes = [8, 128], strides = [1, 1]} : vector<36x128xf32> to vector<8x128xf32>
    %96 = vector.extract_strided_slice %93 {offsets = [1, 0], sizes = [8, 128], strides = [1, 1]} : vector<36x128xf32> to vector<8x128xf32>
    %97 = arith.addf %95, %96 : vector<8x128xf32>
    %98 = vector.extract_strided_slice %94 {offsets = [0, 0], sizes = [8, 128], strides = [1, 1]} : vector<36x128xf32> to vector<8x128xf32>
    %99 = vector.extract_strided_slice %92 {offsets = [9, 0], sizes = [8, 128], strides = [1, 1]} : vector<36x128xf32> to vector<8x128xf32>
    %100 = vector.extract_strided_slice %93 {offsets = [10, 0], sizes = [8, 128], strides = [1, 1]} : vector<36x128xf32> to vector<8x128xf32>
    %101 = arith.addf %99, %100 : vector<8x128xf32>
    %102 = vector.extract_strided_slice %94 {offsets = [9, 0], sizes = [8, 128], strides = [1, 1]} : vector<36x128xf32> to vector<8x128xf32>
    %103 = vector.extract_strided_slice %92 {offsets = [18, 0], sizes = [8, 128], strides = [1, 1]} : vector<36x128xf32> to vector<8x128xf32>
    %104 = vector.extract_strided_slice %93 {offsets = [19, 0], sizes = [8, 128], strides = [1, 1]} : vector<36x128xf32> to vector<8x128xf32>
    %105 = arith.addf %103, %104 : vector<8x128xf32>
    %106 = vector.extract_strided_slice %94 {offsets = [18, 0], sizes = [8, 128], strides = [1, 1]} : vector<36x128xf32> to vector<8x128xf32>
    %107 = vector.extract_strided_slice %92 {offsets = [27, 0], sizes = [8, 128], strides = [1, 1]} : vector<36x128xf32> to vector<8x128xf32>
    %108 = vector.extract_strided_slice %93 {offsets = [28, 0], sizes = [8, 128], strides = [1, 1]} : vector<36x128xf32> to vector<8x128xf32>
    %109 = arith.addf %107, %108 : vector<8x128xf32>
    %110 = vector.extract_strided_slice %94 {offsets = [27, 0], sizes = [8, 128], strides = [1, 1]} : vector<36x128xf32> to vector<8x128xf32>
    %111 = tpu.concatenate %97, %101, %105, %109 in 0 : vector<8x128xf32>, vector<8x128xf32>, vector<8x128xf32>, vector<8x128xf32> -> vector<32x128xf32>
    %112 = tpu.concatenate %98, %102, %106, %110 in 0 : vector<8x128xf32>, vector<8x128xf32>, vector<8x128xf32>, vector<8x128xf32> -> vector<32x128xf32>
    %113 = vector.broadcast %4 : f32 to vector<32x128xf32>
    %114 = arith.addf %111, %113 : vector<32x128xf32>
    %cst_13 = arith.constant 0.000000e+00 : f32
    %115 = vector.broadcast %cst_13 : f32 to vector<32x128xf32>
    %116 = arith.maximumf %114, %115 : vector<32x128xf32>
    %117 = vector.broadcast %5 : f32 to vector<32x128xf32>
    %118 = arith.addf %116, %117 : vector<32x128xf32>
    %cst_14 = arith.constant dense<0.000000e+00> : vector<32x384xf32>
    %119 = tpu.matmul %118, %12, %cst_14 {dimension_numbers = #tpu.dot_dimension_numbers<[1], [0], [0], [1], [0, 0, 1, 1], [], []>} : vector<32x128xf32>, vector<128x384xf32>, vector<32x384xf32> -> vector<32x384xf32>
    %cst_15 = arith.constant 0.000000e+00 : f32
    %120 = vector.broadcast %cst_15 : f32 to vector<1x128xf32>
    %121 = vector.extract_strided_slice %119 {offsets = [0, 0], sizes = [8, 128], strides = [1, 1]} : vector<32x384xf32> to vector<8x128xf32>
    %122 = vector.extract_strided_slice %119 {offsets = [0, 128], sizes = [8, 128], strides = [1, 1]} : vector<32x384xf32> to vector<8x128xf32>
    %123 = vector.extract_strided_slice %119 {offsets = [0, 256], sizes = [8, 128], strides = [1, 1]} : vector<32x384xf32> to vector<8x128xf32>
    %124 = vector.extract_strided_slice %121 {offsets = [0, 0], sizes = [7, 128], strides = [1, 1]} : vector<8x128xf32> to vector<7x128xf32>
    %125 = tpu.concatenate %120, %124 in 0 : vector<1x128xf32>, vector<7x128xf32> -> vector<8x128xf32>
    %126 = arith.addf %122, %125 : vector<8x128xf32>
    %127 = vector.extract_strided_slice %123 {offsets = [1, 0], sizes = [7, 128], strides = [1, 1]} : vector<8x128xf32> to vector<7x128xf32>
    %128 = tpu.concatenate %127, %120 in 0 : vector<7x128xf32>, vector<1x128xf32> -> vector<8x128xf32>
    %129 = arith.addf %126, %128 : vector<8x128xf32>
    %130 = vector.extract_strided_slice %119 {offsets = [8, 0], sizes = [8, 128], strides = [1, 1]} : vector<32x384xf32> to vector<8x128xf32>
    %131 = vector.extract_strided_slice %119 {offsets = [8, 128], sizes = [8, 128], strides = [1, 1]} : vector<32x384xf32> to vector<8x128xf32>
    %132 = vector.extract_strided_slice %119 {offsets = [8, 256], sizes = [8, 128], strides = [1, 1]} : vector<32x384xf32> to vector<8x128xf32>
    %133 = vector.extract_strided_slice %130 {offsets = [0, 0], sizes = [7, 128], strides = [1, 1]} : vector<8x128xf32> to vector<7x128xf32>
    %134 = tpu.concatenate %120, %133 in 0 : vector<1x128xf32>, vector<7x128xf32> -> vector<8x128xf32>
    %135 = arith.addf %131, %134 : vector<8x128xf32>
    %136 = vector.extract_strided_slice %132 {offsets = [1, 0], sizes = [7, 128], strides = [1, 1]} : vector<8x128xf32> to vector<7x128xf32>
    %137 = tpu.concatenate %136, %120 in 0 : vector<7x128xf32>, vector<1x128xf32> -> vector<8x128xf32>
    %138 = arith.addf %135, %137 : vector<8x128xf32>
    %139 = vector.extract_strided_slice %119 {offsets = [16, 0], sizes = [8, 128], strides = [1, 1]} : vector<32x384xf32> to vector<8x128xf32>
    %140 = vector.extract_strided_slice %119 {offsets = [16, 128], sizes = [8, 128], strides = [1, 1]} : vector<32x384xf32> to vector<8x128xf32>
    %141 = vector.extract_strided_slice %119 {offsets = [16, 256], sizes = [8, 128], strides = [1, 1]} : vector<32x384xf32> to vector<8x128xf32>
    %142 = vector.extract_strided_slice %139 {offsets = [0, 0], sizes = [7, 128], strides = [1, 1]} : vector<8x128xf32> to vector<7x128xf32>
    %143 = tpu.concatenate %120, %142 in 0 : vector<1x128xf32>, vector<7x128xf32> -> vector<8x128xf32>
    %144 = arith.addf %140, %143 : vector<8x128xf32>
    %145 = vector.extract_strided_slice %141 {offsets = [1, 0], sizes = [7, 128], strides = [1, 1]} : vector<8x128xf32> to vector<7x128xf32>
    %146 = tpu.concatenate %145, %120 in 0 : vector<7x128xf32>, vector<1x128xf32> -> vector<8x128xf32>
    %147 = arith.addf %144, %146 : vector<8x128xf32>
    %148 = vector.extract_strided_slice %119 {offsets = [24, 0], sizes = [8, 128], strides = [1, 1]} : vector<32x384xf32> to vector<8x128xf32>
    %149 = vector.extract_strided_slice %119 {offsets = [24, 128], sizes = [8, 128], strides = [1, 1]} : vector<32x384xf32> to vector<8x128xf32>
    %150 = vector.extract_strided_slice %119 {offsets = [24, 256], sizes = [8, 128], strides = [1, 1]} : vector<32x384xf32> to vector<8x128xf32>
    %151 = vector.extract_strided_slice %148 {offsets = [0, 0], sizes = [7, 128], strides = [1, 1]} : vector<8x128xf32> to vector<7x128xf32>
    %152 = tpu.concatenate %120, %151 in 0 : vector<1x128xf32>, vector<7x128xf32> -> vector<8x128xf32>
    %153 = arith.addf %149, %152 : vector<8x128xf32>
    %154 = vector.extract_strided_slice %150 {offsets = [1, 0], sizes = [7, 128], strides = [1, 1]} : vector<8x128xf32> to vector<7x128xf32>
    %155 = tpu.concatenate %154, %120 in 0 : vector<7x128xf32>, vector<1x128xf32> -> vector<8x128xf32>
    %156 = arith.addf %153, %155 : vector<8x128xf32>
    %157 = tpu.concatenate %129, %138, %147, %156 in 0 : vector<8x128xf32>, vector<8x128xf32>, vector<8x128xf32>, vector<8x128xf32> -> vector<32x128xf32>
    %158 = vector.broadcast %6 : f32 to vector<32x128xf32>
    %159 = arith.mulf %157, %158 : vector<32x128xf32>
    %160 = vector.broadcast %7 : f32 to vector<32x128xf32>
    %161 = arith.addf %159, %160 : vector<32x128xf32>
    %162 = arith.addf %161, %112 : vector<32x128xf32>
    %cst_16 = arith.constant 0.000000e+00 : f32
    %163 = vector.broadcast %cst_16 : f32 to vector<32x128xf32>
    %164 = arith.maximumf %162, %163 : vector<32x128xf32>
    %c5 = arith.constant 5 : index
    %165 = memref.load %arg0[%c5] : memref<16xf32, #tpu.memory_space<smem>>
    %c6 = arith.constant 6 : index
    %166 = memref.load %arg0[%c6] : memref<16xf32, #tpu.memory_space<smem>>
    %c7 = arith.constant 7 : index
    %167 = memref.load %arg0[%c7] : memref<16xf32, #tpu.memory_space<smem>>
    %c8 = arith.constant 8 : index
    %168 = memref.load %arg0[%c8] : memref<16xf32, #tpu.memory_space<smem>>
    %c9 = arith.constant 9 : index
    %169 = memref.load %arg0[%c9] : memref<16xf32, #tpu.memory_space<smem>>
    %170 = vector.broadcast %165 : f32 to vector<32x128xf32>
    %171 = arith.addf %164, %170 : vector<32x128xf32>
    %c0_17 = arith.constant 0 : index
    %c0_18 = arith.constant 0 : index
    %172 = vector.load %arg6[%c0_17, %c0_18] : memref<160x256xf32, #tpu.memory_space<vmem>>, vector<160x256xf32>
    %c0_19 = arith.constant 0 : index
    %c0_20 = arith.constant 0 : index
    %173 = vector.load %arg7[%c0_19, %c0_20] : memref<160x256xf32, #tpu.memory_space<vmem>>, vector<160x256xf32>
    %c0_21 = arith.constant 0 : index
    %c0_22 = arith.constant 0 : index
    %174 = vector.load %arg8[%c0_21, %c0_22] : memref<128x384xf32, #tpu.memory_space<vmem>>, vector<128x384xf32>
    %cst_23 = arith.constant 0.000000e+00 : f32
    %175 = vector.broadcast %cst_23 : f32 to vector<32x16xf32>
    %176 = tpu.concatenate %175, %171, %175 in 1 : vector<32x16xf32>, vector<32x128xf32>, vector<32x16xf32> -> vector<32x160xf32>
    %cst_24 = arith.constant 0.000000e+00 : f32
    %177 = vector.broadcast %cst_24 : f32 to vector<1x160xf32>
    %178 = vector.extract_strided_slice %176 {offsets = [1, 0], sizes = [1, 160], strides = [1, 1]} : vector<32x160xf32> to vector<1x160xf32>
    %179 = vector.extract_strided_slice %176 {offsets = [3, 0], sizes = [1, 160], strides = [1, 1]} : vector<32x160xf32> to vector<1x160xf32>
    %180 = vector.extract_strided_slice %176 {offsets = [5, 0], sizes = [1, 160], strides = [1, 1]} : vector<32x160xf32> to vector<1x160xf32>
    %181 = vector.extract_strided_slice %176 {offsets = [7, 0], sizes = [1, 160], strides = [1, 1]} : vector<32x160xf32> to vector<1x160xf32>
    %182 = vector.extract_strided_slice %176 {offsets = [0, 0], sizes = [1, 160], strides = [1, 1]} : vector<32x160xf32> to vector<1x160xf32>
    %183 = vector.extract_strided_slice %176 {offsets = [2, 0], sizes = [1, 160], strides = [1, 1]} : vector<32x160xf32> to vector<1x160xf32>
    %184 = vector.extract_strided_slice %176 {offsets = [4, 0], sizes = [1, 160], strides = [1, 1]} : vector<32x160xf32> to vector<1x160xf32>
    %185 = vector.extract_strided_slice %176 {offsets = [6, 0], sizes = [1, 160], strides = [1, 1]} : vector<32x160xf32> to vector<1x160xf32>
    %186 = vector.extract_strided_slice %176 {offsets = [9, 0], sizes = [1, 160], strides = [1, 1]} : vector<32x160xf32> to vector<1x160xf32>
    %187 = vector.extract_strided_slice %176 {offsets = [11, 0], sizes = [1, 160], strides = [1, 1]} : vector<32x160xf32> to vector<1x160xf32>
    %188 = vector.extract_strided_slice %176 {offsets = [13, 0], sizes = [1, 160], strides = [1, 1]} : vector<32x160xf32> to vector<1x160xf32>
    %189 = vector.extract_strided_slice %176 {offsets = [15, 0], sizes = [1, 160], strides = [1, 1]} : vector<32x160xf32> to vector<1x160xf32>
    %190 = vector.extract_strided_slice %176 {offsets = [8, 0], sizes = [1, 160], strides = [1, 1]} : vector<32x160xf32> to vector<1x160xf32>
    %191 = vector.extract_strided_slice %176 {offsets = [10, 0], sizes = [1, 160], strides = [1, 1]} : vector<32x160xf32> to vector<1x160xf32>
    %192 = vector.extract_strided_slice %176 {offsets = [12, 0], sizes = [1, 160], strides = [1, 1]} : vector<32x160xf32> to vector<1x160xf32>
    %193 = vector.extract_strided_slice %176 {offsets = [14, 0], sizes = [1, 160], strides = [1, 1]} : vector<32x160xf32> to vector<1x160xf32>
    %194 = vector.extract_strided_slice %176 {offsets = [17, 0], sizes = [1, 160], strides = [1, 1]} : vector<32x160xf32> to vector<1x160xf32>
    %195 = vector.extract_strided_slice %176 {offsets = [19, 0], sizes = [1, 160], strides = [1, 1]} : vector<32x160xf32> to vector<1x160xf32>
    %196 = vector.extract_strided_slice %176 {offsets = [21, 0], sizes = [1, 160], strides = [1, 1]} : vector<32x160xf32> to vector<1x160xf32>
    %197 = vector.extract_strided_slice %176 {offsets = [23, 0], sizes = [1, 160], strides = [1, 1]} : vector<32x160xf32> to vector<1x160xf32>
    %198 = vector.extract_strided_slice %176 {offsets = [16, 0], sizes = [1, 160], strides = [1, 1]} : vector<32x160xf32> to vector<1x160xf32>
    %199 = vector.extract_strided_slice %176 {offsets = [18, 0], sizes = [1, 160], strides = [1, 1]} : vector<32x160xf32> to vector<1x160xf32>
    %200 = vector.extract_strided_slice %176 {offsets = [20, 0], sizes = [1, 160], strides = [1, 1]} : vector<32x160xf32> to vector<1x160xf32>
    %201 = vector.extract_strided_slice %176 {offsets = [22, 0], sizes = [1, 160], strides = [1, 1]} : vector<32x160xf32> to vector<1x160xf32>
    %202 = vector.extract_strided_slice %176 {offsets = [25, 0], sizes = [1, 160], strides = [1, 1]} : vector<32x160xf32> to vector<1x160xf32>
    %203 = vector.extract_strided_slice %176 {offsets = [27, 0], sizes = [1, 160], strides = [1, 1]} : vector<32x160xf32> to vector<1x160xf32>
    %204 = vector.extract_strided_slice %176 {offsets = [29, 0], sizes = [1, 160], strides = [1, 1]} : vector<32x160xf32> to vector<1x160xf32>
    %205 = vector.extract_strided_slice %176 {offsets = [31, 0], sizes = [1, 160], strides = [1, 1]} : vector<32x160xf32> to vector<1x160xf32>
    %206 = vector.extract_strided_slice %176 {offsets = [24, 0], sizes = [1, 160], strides = [1, 1]} : vector<32x160xf32> to vector<1x160xf32>
    %207 = vector.extract_strided_slice %176 {offsets = [26, 0], sizes = [1, 160], strides = [1, 1]} : vector<32x160xf32> to vector<1x160xf32>
    %208 = vector.extract_strided_slice %176 {offsets = [28, 0], sizes = [1, 160], strides = [1, 1]} : vector<32x160xf32> to vector<1x160xf32>
    %209 = vector.extract_strided_slice %176 {offsets = [30, 0], sizes = [1, 160], strides = [1, 1]} : vector<32x160xf32> to vector<1x160xf32>
    %210 = tpu.concatenate %177, %178, %179, %180, %181, %177, %186, %187, %188, %189, %177, %194, %195, %196, %197, %177 in 0 : vector<1x160xf32>, vector<1x160xf32>, vector<1x160xf32>, vector<1x160xf32>, vector<1x160xf32>, vector<1x160xf32>, vector<1x160xf32>, vector<1x160xf32>, vector<1x160xf32>, vector<1x160xf32>, vector<1x160xf32>, vector<1x160xf32>, vector<1x160xf32>, vector<1x160xf32>, vector<1x160xf32>, vector<1x160xf32> -> vector<16x160xf32>
    %211 = tpu.concatenate %202, %203, %204, %205 in 0 : vector<1x160xf32>, vector<1x160xf32>, vector<1x160xf32>, vector<1x160xf32> -> vector<4x160xf32>
    %212 = tpu.concatenate %210, %211 in 0 : vector<16x160xf32>, vector<4x160xf32> -> vector<20x160xf32>
    %213 = tpu.concatenate %182, %183, %184, %185, %177, %190, %191, %192, %193, %177, %198, %199, %200, %201, %177, %206 in 0 : vector<1x160xf32>, vector<1x160xf32>, vector<1x160xf32>, vector<1x160xf32>, vector<1x160xf32>, vector<1x160xf32>, vector<1x160xf32>, vector<1x160xf32>, vector<1x160xf32>, vector<1x160xf32>, vector<1x160xf32>, vector<1x160xf32>, vector<1x160xf32>, vector<1x160xf32>, vector<1x160xf32>, vector<1x160xf32> -> vector<16x160xf32>
    %214 = tpu.concatenate %207, %208, %209, %177 in 0 : vector<1x160xf32>, vector<1x160xf32>, vector<1x160xf32>, vector<1x160xf32> -> vector<4x160xf32>
    %215 = tpu.concatenate %213, %214 in 0 : vector<16x160xf32>, vector<4x160xf32> -> vector<20x160xf32>
    %cst_25 = arith.constant dense<0.000000e+00> : vector<20x256xf32>
    %216 = tpu.matmul %212, %172, %cst_25 {dimension_numbers = #tpu.dot_dimension_numbers<[1], [0], [0], [1], [0, 0, 1, 1], [], []>} : vector<20x160xf32>, vector<160x256xf32>, vector<20x256xf32> -> vector<20x256xf32>
    %cst_26 = arith.constant dense<0.000000e+00> : vector<20x256xf32>
    %217 = tpu.matmul %215, %173, %cst_26 {dimension_numbers = #tpu.dot_dimension_numbers<[1], [0], [0], [1], [0, 0, 1, 1], [], []>} : vector<20x160xf32>, vector<160x256xf32>, vector<20x256xf32> -> vector<20x256xf32>
    %218 = vector.extract_strided_slice %216 {offsets = [0, 0], sizes = [20, 128], strides = [1, 1]} : vector<20x256xf32> to vector<20x128xf32>
    %219 = vector.extract_strided_slice %217 {offsets = [0, 0], sizes = [20, 128], strides = [1, 1]} : vector<20x256xf32> to vector<20x128xf32>
    %220 = arith.addf %218, %219 : vector<20x128xf32>
    %221 = vector.extract_strided_slice %216 {offsets = [0, 128], sizes = [20, 128], strides = [1, 1]} : vector<20x256xf32> to vector<20x128xf32>
    %222 = vector.extract_strided_slice %217 {offsets = [0, 128], sizes = [20, 128], strides = [1, 1]} : vector<20x256xf32> to vector<20x128xf32>
    %223 = vector.extract_strided_slice %220 {offsets = [0, 0], sizes = [4, 128], strides = [1, 1]} : vector<20x128xf32> to vector<4x128xf32>
    %224 = vector.extract_strided_slice %221 {offsets = [1, 0], sizes = [4, 128], strides = [1, 1]} : vector<20x128xf32> to vector<4x128xf32>
    %225 = arith.addf %223, %224 : vector<4x128xf32>
    %226 = vector.extract_strided_slice %222 {offsets = [0, 0], sizes = [4, 128], strides = [1, 1]} : vector<20x128xf32> to vector<4x128xf32>
    %227 = vector.extract_strided_slice %220 {offsets = [5, 0], sizes = [4, 128], strides = [1, 1]} : vector<20x128xf32> to vector<4x128xf32>
    %228 = vector.extract_strided_slice %221 {offsets = [6, 0], sizes = [4, 128], strides = [1, 1]} : vector<20x128xf32> to vector<4x128xf32>
    %229 = arith.addf %227, %228 : vector<4x128xf32>
    %230 = vector.extract_strided_slice %222 {offsets = [5, 0], sizes = [4, 128], strides = [1, 1]} : vector<20x128xf32> to vector<4x128xf32>
    %231 = vector.extract_strided_slice %220 {offsets = [10, 0], sizes = [4, 128], strides = [1, 1]} : vector<20x128xf32> to vector<4x128xf32>
    %232 = vector.extract_strided_slice %221 {offsets = [11, 0], sizes = [4, 128], strides = [1, 1]} : vector<20x128xf32> to vector<4x128xf32>
    %233 = arith.addf %231, %232 : vector<4x128xf32>
    %234 = vector.extract_strided_slice %222 {offsets = [10, 0], sizes = [4, 128], strides = [1, 1]} : vector<20x128xf32> to vector<4x128xf32>
    %235 = vector.extract_strided_slice %220 {offsets = [15, 0], sizes = [4, 128], strides = [1, 1]} : vector<20x128xf32> to vector<4x128xf32>
    %236 = vector.extract_strided_slice %221 {offsets = [16, 0], sizes = [4, 128], strides = [1, 1]} : vector<20x128xf32> to vector<4x128xf32>
    %237 = arith.addf %235, %236 : vector<4x128xf32>
    %238 = vector.extract_strided_slice %222 {offsets = [15, 0], sizes = [4, 128], strides = [1, 1]} : vector<20x128xf32> to vector<4x128xf32>
    %239 = tpu.concatenate %225, %229, %233, %237 in 0 : vector<4x128xf32>, vector<4x128xf32>, vector<4x128xf32>, vector<4x128xf32> -> vector<16x128xf32>
    %240 = tpu.concatenate %226, %230, %234, %238 in 0 : vector<4x128xf32>, vector<4x128xf32>, vector<4x128xf32>, vector<4x128xf32> -> vector<16x128xf32>
    %241 = vector.broadcast %166 : f32 to vector<16x128xf32>
    %242 = arith.addf %239, %241 : vector<16x128xf32>
    %cst_27 = arith.constant 0.000000e+00 : f32
    %243 = vector.broadcast %cst_27 : f32 to vector<16x128xf32>
    %244 = arith.maximumf %242, %243 : vector<16x128xf32>
    %245 = vector.broadcast %167 : f32 to vector<16x128xf32>
    %246 = arith.addf %244, %245 : vector<16x128xf32>
    %cst_28 = arith.constant dense<0.000000e+00> : vector<16x384xf32>
    %247 = tpu.matmul %246, %174, %cst_28 {dimension_numbers = #tpu.dot_dimension_numbers<[1], [0], [0], [1], [0, 0, 1, 1], [], []>} : vector<16x128xf32>, vector<128x384xf32>, vector<16x384xf32> -> vector<16x384xf32>
    %cst_29 = arith.constant 0.000000e+00 : f32
    %248 = vector.broadcast %cst_29 : f32 to vector<1x128xf32>
    %249 = vector.extract_strided_slice %247 {offsets = [0, 0], sizes = [4, 128], strides = [1, 1]} : vector<16x384xf32> to vector<4x128xf32>
    %250 = vector.extract_strided_slice %247 {offsets = [0, 128], sizes = [4, 128], strides = [1, 1]} : vector<16x384xf32> to vector<4x128xf32>
    %251 = vector.extract_strided_slice %247 {offsets = [0, 256], sizes = [4, 128], strides = [1, 1]} : vector<16x384xf32> to vector<4x128xf32>
    %252 = vector.extract_strided_slice %249 {offsets = [0, 0], sizes = [3, 128], strides = [1, 1]} : vector<4x128xf32> to vector<3x128xf32>
    %253 = tpu.concatenate %248, %252 in 0 : vector<1x128xf32>, vector<3x128xf32> -> vector<4x128xf32>
    %254 = arith.addf %250, %253 : vector<4x128xf32>
    %255 = vector.extract_strided_slice %251 {offsets = [1, 0], sizes = [3, 128], strides = [1, 1]} : vector<4x128xf32> to vector<3x128xf32>
    %256 = tpu.concatenate %255, %248 in 0 : vector<3x128xf32>, vector<1x128xf32> -> vector<4x128xf32>
    %257 = arith.addf %254, %256 : vector<4x128xf32>
    %258 = vector.extract_strided_slice %247 {offsets = [4, 0], sizes = [4, 128], strides = [1, 1]} : vector<16x384xf32> to vector<4x128xf32>
    %259 = vector.extract_strided_slice %247 {offsets = [4, 128], sizes = [4, 128], strides = [1, 1]} : vector<16x384xf32> to vector<4x128xf32>
    %260 = vector.extract_strided_slice %247 {offsets = [4, 256], sizes = [4, 128], strides = [1, 1]} : vector<16x384xf32> to vector<4x128xf32>
    %261 = vector.extract_strided_slice %258 {offsets = [0, 0], sizes = [3, 128], strides = [1, 1]} : vector<4x128xf32> to vector<3x128xf32>
    %262 = tpu.concatenate %248, %261 in 0 : vector<1x128xf32>, vector<3x128xf32> -> vector<4x128xf32>
    %263 = arith.addf %259, %262 : vector<4x128xf32>
    %264 = vector.extract_strided_slice %260 {offsets = [1, 0], sizes = [3, 128], strides = [1, 1]} : vector<4x128xf32> to vector<3x128xf32>
    %265 = tpu.concatenate %264, %248 in 0 : vector<3x128xf32>, vector<1x128xf32> -> vector<4x128xf32>
    %266 = arith.addf %263, %265 : vector<4x128xf32>
    %267 = vector.extract_strided_slice %247 {offsets = [8, 0], sizes = [4, 128], strides = [1, 1]} : vector<16x384xf32> to vector<4x128xf32>
    %268 = vector.extract_strided_slice %247 {offsets = [8, 128], sizes = [4, 128], strides = [1, 1]} : vector<16x384xf32> to vector<4x128xf32>
    %269 = vector.extract_strided_slice %247 {offsets = [8, 256], sizes = [4, 128], strides = [1, 1]} : vector<16x384xf32> to vector<4x128xf32>
    %270 = vector.extract_strided_slice %267 {offsets = [0, 0], sizes = [3, 128], strides = [1, 1]} : vector<4x128xf32> to vector<3x128xf32>
    %271 = tpu.concatenate %248, %270 in 0 : vector<1x128xf32>, vector<3x128xf32> -> vector<4x128xf32>
    %272 = arith.addf %268, %271 : vector<4x128xf32>
    %273 = vector.extract_strided_slice %269 {offsets = [1, 0], sizes = [3, 128], strides = [1, 1]} : vector<4x128xf32> to vector<3x128xf32>
    %274 = tpu.concatenate %273, %248 in 0 : vector<3x128xf32>, vector<1x128xf32> -> vector<4x128xf32>
    %275 = arith.addf %272, %274 : vector<4x128xf32>
    %276 = vector.extract_strided_slice %247 {offsets = [12, 0], sizes = [4, 128], strides = [1, 1]} : vector<16x384xf32> to vector<4x128xf32>
    %277 = vector.extract_strided_slice %247 {offsets = [12, 128], sizes = [4, 128], strides = [1, 1]} : vector<16x384xf32> to vector<4x128xf32>
    %278 = vector.extract_strided_slice %247 {offsets = [12, 256], sizes = [4, 128], strides = [1, 1]} : vector<16x384xf32> to vector<4x128xf32>
    %279 = vector.extract_strided_slice %276 {offsets = [0, 0], sizes = [3, 128], strides = [1, 1]} : vector<4x128xf32> to vector<3x128xf32>
    %280 = tpu.concatenate %248, %279 in 0 : vector<1x128xf32>, vector<3x128xf32> -> vector<4x128xf32>
    %281 = arith.addf %277, %280 : vector<4x128xf32>
    %282 = vector.extract_strided_slice %278 {offsets = [1, 0], sizes = [3, 128], strides = [1, 1]} : vector<4x128xf32> to vector<3x128xf32>
    %283 = tpu.concatenate %282, %248 in 0 : vector<3x128xf32>, vector<1x128xf32> -> vector<4x128xf32>
    %284 = arith.addf %281, %283 : vector<4x128xf32>
    %285 = tpu.concatenate %257, %266, %275, %284 in 0 : vector<4x128xf32>, vector<4x128xf32>, vector<4x128xf32>, vector<4x128xf32> -> vector<16x128xf32>
    %286 = vector.broadcast %168 : f32 to vector<16x128xf32>
    %287 = arith.mulf %285, %286 : vector<16x128xf32>
    %288 = vector.broadcast %169 : f32 to vector<16x128xf32>
    %289 = arith.addf %287, %288 : vector<16x128xf32>
    %290 = arith.addf %289, %240 : vector<16x128xf32>
    %cst_30 = arith.constant 0.000000e+00 : f32
    %291 = vector.broadcast %cst_30 : f32 to vector<16x128xf32>
    %292 = arith.maximumf %290, %291 : vector<16x128xf32>
    %c10 = arith.constant 10 : index
    %293 = memref.load %arg0[%c10] : memref<16xf32, #tpu.memory_space<smem>>
    %c11 = arith.constant 11 : index
    %294 = memref.load %arg0[%c11] : memref<16xf32, #tpu.memory_space<smem>>
    %c12 = arith.constant 12 : index
    %295 = memref.load %arg0[%c12] : memref<16xf32, #tpu.memory_space<smem>>
    %c13 = arith.constant 13 : index
    %296 = memref.load %arg0[%c13] : memref<16xf32, #tpu.memory_space<smem>>
    %c14 = arith.constant 14 : index
    %297 = memref.load %arg0[%c14] : memref<16xf32, #tpu.memory_space<smem>>
    %298 = vector.broadcast %293 : f32 to vector<16x128xf32>
    %299 = arith.addf %292, %298 : vector<16x128xf32>
    %c0_31 = arith.constant 0 : index
    %c0_32 = arith.constant 0 : index
    %300 = vector.load %arg9[%c0_31, %c0_32] : memref<192x128xf32, #tpu.memory_space<vmem>>, vector<192x128xf32>
    %c0_33 = arith.constant 0 : index
    %c0_34 = arith.constant 0 : index
    %301 = vector.load %arg10[%c0_33, %c0_34] : memref<192x128xf32, #tpu.memory_space<vmem>>, vector<192x128xf32>
    %c0_35 = arith.constant 0 : index
    %c0_36 = arith.constant 0 : index
    %302 = vector.load %arg11[%c0_35, %c0_36] : memref<64x192xf32, #tpu.memory_space<vmem>>, vector<64x192xf32>
    %cst_37 = arith.constant 0.000000e+00 : f32
    %303 = vector.broadcast %cst_37 : f32 to vector<16x32xf32>
    %304 = tpu.concatenate %303, %299, %303 in 1 : vector<16x32xf32>, vector<16x128xf32>, vector<16x32xf32> -> vector<16x192xf32>
    %cst_38 = arith.constant 0.000000e+00 : f32
    %305 = vector.broadcast %cst_38 : f32 to vector<1x192xf32>
    %306 = vector.extract_strided_slice %304 {offsets = [1, 0], sizes = [1, 192], strides = [1, 1]} : vector<16x192xf32> to vector<1x192xf32>
    %307 = vector.extract_strided_slice %304 {offsets = [3, 0], sizes = [1, 192], strides = [1, 1]} : vector<16x192xf32> to vector<1x192xf32>
    %308 = vector.extract_strided_slice %304 {offsets = [0, 0], sizes = [1, 192], strides = [1, 1]} : vector<16x192xf32> to vector<1x192xf32>
    %309 = vector.extract_strided_slice %304 {offsets = [2, 0], sizes = [1, 192], strides = [1, 1]} : vector<16x192xf32> to vector<1x192xf32>
    %310 = vector.extract_strided_slice %304 {offsets = [5, 0], sizes = [1, 192], strides = [1, 1]} : vector<16x192xf32> to vector<1x192xf32>
    %311 = vector.extract_strided_slice %304 {offsets = [7, 0], sizes = [1, 192], strides = [1, 1]} : vector<16x192xf32> to vector<1x192xf32>
    %312 = vector.extract_strided_slice %304 {offsets = [4, 0], sizes = [1, 192], strides = [1, 1]} : vector<16x192xf32> to vector<1x192xf32>
    %313 = vector.extract_strided_slice %304 {offsets = [6, 0], sizes = [1, 192], strides = [1, 1]} : vector<16x192xf32> to vector<1x192xf32>
    %314 = vector.extract_strided_slice %304 {offsets = [9, 0], sizes = [1, 192], strides = [1, 1]} : vector<16x192xf32> to vector<1x192xf32>
    %315 = vector.extract_strided_slice %304 {offsets = [11, 0], sizes = [1, 192], strides = [1, 1]} : vector<16x192xf32> to vector<1x192xf32>
    %316 = vector.extract_strided_slice %304 {offsets = [8, 0], sizes = [1, 192], strides = [1, 1]} : vector<16x192xf32> to vector<1x192xf32>
    %317 = vector.extract_strided_slice %304 {offsets = [10, 0], sizes = [1, 192], strides = [1, 1]} : vector<16x192xf32> to vector<1x192xf32>
    %318 = vector.extract_strided_slice %304 {offsets = [13, 0], sizes = [1, 192], strides = [1, 1]} : vector<16x192xf32> to vector<1x192xf32>
    %319 = vector.extract_strided_slice %304 {offsets = [15, 0], sizes = [1, 192], strides = [1, 1]} : vector<16x192xf32> to vector<1x192xf32>
    %320 = vector.extract_strided_slice %304 {offsets = [12, 0], sizes = [1, 192], strides = [1, 1]} : vector<16x192xf32> to vector<1x192xf32>
    %321 = vector.extract_strided_slice %304 {offsets = [14, 0], sizes = [1, 192], strides = [1, 1]} : vector<16x192xf32> to vector<1x192xf32>
    %322 = tpu.concatenate %305, %306, %307, %305, %310, %311, %305, %314, %315, %305, %318, %319 in 0 : vector<1x192xf32>, vector<1x192xf32>, vector<1x192xf32>, vector<1x192xf32>, vector<1x192xf32>, vector<1x192xf32>, vector<1x192xf32>, vector<1x192xf32>, vector<1x192xf32>, vector<1x192xf32>, vector<1x192xf32>, vector<1x192xf32> -> vector<12x192xf32>
    %323 = tpu.concatenate %308, %309, %305, %312, %313, %305, %316, %317, %305, %320, %321, %305 in 0 : vector<1x192xf32>, vector<1x192xf32>, vector<1x192xf32>, vector<1x192xf32>, vector<1x192xf32>, vector<1x192xf32>, vector<1x192xf32>, vector<1x192xf32>, vector<1x192xf32>, vector<1x192xf32>, vector<1x192xf32>, vector<1x192xf32> -> vector<12x192xf32>
    %cst_39 = arith.constant dense<0.000000e+00> : vector<12x128xf32>
    %324 = tpu.matmul %322, %300, %cst_39 {dimension_numbers = #tpu.dot_dimension_numbers<[1], [0], [0], [1], [0, 0, 1, 1], [], []>} : vector<12x192xf32>, vector<192x128xf32>, vector<12x128xf32> -> vector<12x128xf32>
    %cst_40 = arith.constant dense<0.000000e+00> : vector<12x128xf32>
    %325 = tpu.matmul %323, %301, %cst_40 {dimension_numbers = #tpu.dot_dimension_numbers<[1], [0], [0], [1], [0, 0, 1, 1], [], []>} : vector<12x192xf32>, vector<192x128xf32>, vector<12x128xf32> -> vector<12x128xf32>
    %326 = vector.extract_strided_slice %324 {offsets = [0, 0], sizes = [12, 64], strides = [1, 1]} : vector<12x128xf32> to vector<12x64xf32>
    %327 = vector.extract_strided_slice %325 {offsets = [0, 0], sizes = [12, 64], strides = [1, 1]} : vector<12x128xf32> to vector<12x64xf32>
    %328 = arith.addf %326, %327 : vector<12x64xf32>
    %329 = vector.extract_strided_slice %324 {offsets = [0, 64], sizes = [12, 64], strides = [1, 1]} : vector<12x128xf32> to vector<12x64xf32>
    %330 = vector.extract_strided_slice %325 {offsets = [0, 64], sizes = [12, 64], strides = [1, 1]} : vector<12x128xf32> to vector<12x64xf32>
    %331 = vector.extract_strided_slice %328 {offsets = [0, 0], sizes = [2, 64], strides = [1, 1]} : vector<12x64xf32> to vector<2x64xf32>
    %332 = vector.extract_strided_slice %329 {offsets = [1, 0], sizes = [2, 64], strides = [1, 1]} : vector<12x64xf32> to vector<2x64xf32>
    %333 = arith.addf %331, %332 : vector<2x64xf32>
    %334 = vector.extract_strided_slice %330 {offsets = [0, 0], sizes = [2, 64], strides = [1, 1]} : vector<12x64xf32> to vector<2x64xf32>
    %335 = vector.extract_strided_slice %328 {offsets = [3, 0], sizes = [2, 64], strides = [1, 1]} : vector<12x64xf32> to vector<2x64xf32>
    %336 = vector.extract_strided_slice %329 {offsets = [4, 0], sizes = [2, 64], strides = [1, 1]} : vector<12x64xf32> to vector<2x64xf32>
    %337 = arith.addf %335, %336 : vector<2x64xf32>
    %338 = vector.extract_strided_slice %330 {offsets = [3, 0], sizes = [2, 64], strides = [1, 1]} : vector<12x64xf32> to vector<2x64xf32>
    %339 = vector.extract_strided_slice %328 {offsets = [6, 0], sizes = [2, 64], strides = [1, 1]} : vector<12x64xf32> to vector<2x64xf32>
    %340 = vector.extract_strided_slice %329 {offsets = [7, 0], sizes = [2, 64], strides = [1, 1]} : vector<12x64xf32> to vector<2x64xf32>
    %341 = arith.addf %339, %340 : vector<2x64xf32>
    %342 = vector.extract_strided_slice %330 {offsets = [6, 0], sizes = [2, 64], strides = [1, 1]} : vector<12x64xf32> to vector<2x64xf32>
    %343 = vector.extract_strided_slice %328 {offsets = [9, 0], sizes = [2, 64], strides = [1, 1]} : vector<12x64xf32> to vector<2x64xf32>
    %344 = vector.extract_strided_slice %329 {offsets = [10, 0], sizes = [2, 64], strides = [1, 1]} : vector<12x64xf32> to vector<2x64xf32>
    %345 = arith.addf %343, %344 : vector<2x64xf32>
    %346 = vector.extract_strided_slice %330 {offsets = [9, 0], sizes = [2, 64], strides = [1, 1]} : vector<12x64xf32> to vector<2x64xf32>
    %347 = tpu.concatenate %333, %337, %341, %345 in 0 : vector<2x64xf32>, vector<2x64xf32>, vector<2x64xf32>, vector<2x64xf32> -> vector<8x64xf32>
    %348 = tpu.concatenate %334, %338, %342, %346 in 0 : vector<2x64xf32>, vector<2x64xf32>, vector<2x64xf32>, vector<2x64xf32> -> vector<8x64xf32>
    %349 = vector.broadcast %294 : f32 to vector<8x64xf32>
    %350 = arith.addf %347, %349 : vector<8x64xf32>
    %cst_41 = arith.constant 0.000000e+00 : f32
    %351 = vector.broadcast %cst_41 : f32 to vector<8x64xf32>
    %352 = arith.maximumf %350, %351 : vector<8x64xf32>
    %353 = vector.broadcast %295 : f32 to vector<8x64xf32>
    %354 = arith.addf %352, %353 : vector<8x64xf32>
    %cst_42 = arith.constant dense<0.000000e+00> : vector<8x192xf32>
    %355 = tpu.matmul %354, %302, %cst_42 {dimension_numbers = #tpu.dot_dimension_numbers<[1], [0], [0], [1], [0, 0, 1, 1], [], []>} : vector<8x64xf32>, vector<64x192xf32>, vector<8x192xf32> -> vector<8x192xf32>
    %cst_43 = arith.constant 0.000000e+00 : f32
    %356 = vector.broadcast %cst_43 : f32 to vector<1x64xf32>
    %357 = vector.extract_strided_slice %355 {offsets = [0, 0], sizes = [2, 64], strides = [1, 1]} : vector<8x192xf32> to vector<2x64xf32>
    %358 = vector.extract_strided_slice %355 {offsets = [0, 64], sizes = [2, 64], strides = [1, 1]} : vector<8x192xf32> to vector<2x64xf32>
    %359 = vector.extract_strided_slice %355 {offsets = [0, 128], sizes = [2, 64], strides = [1, 1]} : vector<8x192xf32> to vector<2x64xf32>
    %360 = vector.extract_strided_slice %357 {offsets = [0, 0], sizes = [1, 64], strides = [1, 1]} : vector<2x64xf32> to vector<1x64xf32>
    %361 = tpu.concatenate %356, %360 in 0 : vector<1x64xf32>, vector<1x64xf32> -> vector<2x64xf32>
    %362 = arith.addf %358, %361 : vector<2x64xf32>
    %363 = vector.extract_strided_slice %359 {offsets = [1, 0], sizes = [1, 64], strides = [1, 1]} : vector<2x64xf32> to vector<1x64xf32>
    %364 = tpu.concatenate %363, %356 in 0 : vector<1x64xf32>, vector<1x64xf32> -> vector<2x64xf32>
    %365 = arith.addf %362, %364 : vector<2x64xf32>
    %366 = vector.extract_strided_slice %355 {offsets = [2, 0], sizes = [2, 64], strides = [1, 1]} : vector<8x192xf32> to vector<2x64xf32>
    %367 = vector.extract_strided_slice %355 {offsets = [2, 64], sizes = [2, 64], strides = [1, 1]} : vector<8x192xf32> to vector<2x64xf32>
    %368 = vector.extract_strided_slice %355 {offsets = [2, 128], sizes = [2, 64], strides = [1, 1]} : vector<8x192xf32> to vector<2x64xf32>
    %369 = vector.extract_strided_slice %366 {offsets = [0, 0], sizes = [1, 64], strides = [1, 1]} : vector<2x64xf32> to vector<1x64xf32>
    %370 = tpu.concatenate %356, %369 in 0 : vector<1x64xf32>, vector<1x64xf32> -> vector<2x64xf32>
    %371 = arith.addf %367, %370 : vector<2x64xf32>
    %372 = vector.extract_strided_slice %368 {offsets = [1, 0], sizes = [1, 64], strides = [1, 1]} : vector<2x64xf32> to vector<1x64xf32>
    %373 = tpu.concatenate %372, %356 in 0 : vector<1x64xf32>, vector<1x64xf32> -> vector<2x64xf32>
    %374 = arith.addf %371, %373 : vector<2x64xf32>
    %375 = vector.extract_strided_slice %355 {offsets = [4, 0], sizes = [2, 64], strides = [1, 1]} : vector<8x192xf32> to vector<2x64xf32>
    %376 = vector.extract_strided_slice %355 {offsets = [4, 64], sizes = [2, 64], strides = [1, 1]} : vector<8x192xf32> to vector<2x64xf32>
    %377 = vector.extract_strided_slice %355 {offsets = [4, 128], sizes = [2, 64], strides = [1, 1]} : vector<8x192xf32> to vector<2x64xf32>
    %378 = vector.extract_strided_slice %375 {offsets = [0, 0], sizes = [1, 64], strides = [1, 1]} : vector<2x64xf32> to vector<1x64xf32>
    %379 = tpu.concatenate %356, %378 in 0 : vector<1x64xf32>, vector<1x64xf32> -> vector<2x64xf32>
    %380 = arith.addf %376, %379 : vector<2x64xf32>
    %381 = vector.extract_strided_slice %377 {offsets = [1, 0], sizes = [1, 64], strides = [1, 1]} : vector<2x64xf32> to vector<1x64xf32>
    %382 = tpu.concatenate %381, %356 in 0 : vector<1x64xf32>, vector<1x64xf32> -> vector<2x64xf32>
    %383 = arith.addf %380, %382 : vector<2x64xf32>
    %384 = vector.extract_strided_slice %355 {offsets = [6, 0], sizes = [2, 64], strides = [1, 1]} : vector<8x192xf32> to vector<2x64xf32>
    %385 = vector.extract_strided_slice %355 {offsets = [6, 64], sizes = [2, 64], strides = [1, 1]} : vector<8x192xf32> to vector<2x64xf32>
    %386 = vector.extract_strided_slice %355 {offsets = [6, 128], sizes = [2, 64], strides = [1, 1]} : vector<8x192xf32> to vector<2x64xf32>
    %387 = vector.extract_strided_slice %384 {offsets = [0, 0], sizes = [1, 64], strides = [1, 1]} : vector<2x64xf32> to vector<1x64xf32>
    %388 = tpu.concatenate %356, %387 in 0 : vector<1x64xf32>, vector<1x64xf32> -> vector<2x64xf32>
    %389 = arith.addf %385, %388 : vector<2x64xf32>
    %390 = vector.extract_strided_slice %386 {offsets = [1, 0], sizes = [1, 64], strides = [1, 1]} : vector<2x64xf32> to vector<1x64xf32>
    %391 = tpu.concatenate %390, %356 in 0 : vector<1x64xf32>, vector<1x64xf32> -> vector<2x64xf32>
    %392 = arith.addf %389, %391 : vector<2x64xf32>
    %393 = tpu.concatenate %365, %374, %383, %392 in 0 : vector<2x64xf32>, vector<2x64xf32>, vector<2x64xf32>, vector<2x64xf32> -> vector<8x64xf32>
    %394 = vector.broadcast %296 : f32 to vector<8x64xf32>
    %395 = arith.mulf %393, %394 : vector<8x64xf32>
    %396 = vector.broadcast %297 : f32 to vector<8x64xf32>
    %397 = arith.addf %395, %396 : vector<8x64xf32>
    %398 = arith.addf %397, %348 : vector<8x64xf32>
    %cst_44 = arith.constant 0.000000e+00 : f32
    %399 = vector.broadcast %cst_44 : f32 to vector<8x64xf32>
    %400 = arith.maximumf %398, %399 : vector<8x64xf32>
    %401 = vector.extract_strided_slice %400 {offsets = [0, 0], sizes = [2, 64], strides = [1, 1]} : vector<8x64xf32> to vector<2x64xf32>
    %cst_45 = arith.constant dense<0.000000e+00> : vector<64xf32>
    %402 = vector.multi_reduction <add>, %401, %cst_45 [0] : vector<2x64xf32> to vector<64xf32>
    %403 = vector.shape_cast %402 : vector<64xf32> to vector<1x64xf32>
    %404 = vector.extract_strided_slice %403 {offsets = [0, 0], sizes = [1, 32], strides = [1, 1]} : vector<1x64xf32> to vector<1x32xf32>
    %405 = vector.extract_strided_slice %403 {offsets = [0, 32], sizes = [1, 32], strides = [1, 1]} : vector<1x64xf32> to vector<1x32xf32>
    %406 = arith.addf %404, %405 : vector<1x32xf32>
    %407 = vector.extract_strided_slice %400 {offsets = [2, 0], sizes = [2, 64], strides = [1, 1]} : vector<8x64xf32> to vector<2x64xf32>
    %cst_46 = arith.constant dense<0.000000e+00> : vector<64xf32>
    %408 = vector.multi_reduction <add>, %407, %cst_46 [0] : vector<2x64xf32> to vector<64xf32>
    %409 = vector.shape_cast %408 : vector<64xf32> to vector<1x64xf32>
    %410 = vector.extract_strided_slice %409 {offsets = [0, 0], sizes = [1, 32], strides = [1, 1]} : vector<1x64xf32> to vector<1x32xf32>
    %411 = vector.extract_strided_slice %409 {offsets = [0, 32], sizes = [1, 32], strides = [1, 1]} : vector<1x64xf32> to vector<1x32xf32>
    %412 = arith.addf %410, %411 : vector<1x32xf32>
    %413 = vector.extract_strided_slice %400 {offsets = [4, 0], sizes = [2, 64], strides = [1, 1]} : vector<8x64xf32> to vector<2x64xf32>
    %cst_47 = arith.constant dense<0.000000e+00> : vector<64xf32>
    %414 = vector.multi_reduction <add>, %413, %cst_47 [0] : vector<2x64xf32> to vector<64xf32>
    %415 = vector.shape_cast %414 : vector<64xf32> to vector<1x64xf32>
    %416 = vector.extract_strided_slice %415 {offsets = [0, 0], sizes = [1, 32], strides = [1, 1]} : vector<1x64xf32> to vector<1x32xf32>
    %417 = vector.extract_strided_slice %415 {offsets = [0, 32], sizes = [1, 32], strides = [1, 1]} : vector<1x64xf32> to vector<1x32xf32>
    %418 = arith.addf %416, %417 : vector<1x32xf32>
    %419 = vector.extract_strided_slice %400 {offsets = [6, 0], sizes = [2, 64], strides = [1, 1]} : vector<8x64xf32> to vector<2x64xf32>
    %cst_48 = arith.constant dense<0.000000e+00> : vector<64xf32>
    %420 = vector.multi_reduction <add>, %419, %cst_48 [0] : vector<2x64xf32> to vector<64xf32>
    %421 = vector.shape_cast %420 : vector<64xf32> to vector<1x64xf32>
    %422 = vector.extract_strided_slice %421 {offsets = [0, 0], sizes = [1, 32], strides = [1, 1]} : vector<1x64xf32> to vector<1x32xf32>
    %423 = vector.extract_strided_slice %421 {offsets = [0, 32], sizes = [1, 32], strides = [1, 1]} : vector<1x64xf32> to vector<1x32xf32>
    %424 = arith.addf %422, %423 : vector<1x32xf32>
    %425 = tpu.concatenate %406, %412, %418, %424 in 0 : vector<1x32xf32>, vector<1x32xf32>, vector<1x32xf32>, vector<1x32xf32> -> vector<4x32xf32>
    %cst_49 = arith.constant 2.500000e-01 : f32
    %426 = vector.broadcast %cst_49 : f32 to vector<4x32xf32>
    %427 = arith.mulf %425, %426 : vector<4x32xf32>
    %428 = vector.extract_strided_slice %427 {offsets = [0, 0], sizes = [2, 32], strides = [1, 1]} : vector<4x32xf32> to vector<2x32xf32>
    %429 = vector.extract_strided_slice %427 {offsets = [2, 0], sizes = [2, 32], strides = [1, 1]} : vector<4x32xf32> to vector<2x32xf32>
    %430 = arith.subf %428, %429 : vector<2x32xf32>
    %431 = arith.mulf %430, %430 : vector<2x32xf32>
    %c15 = arith.constant 15 : index
    %432 = memref.load %arg0[%c15] : memref<16xf32, #tpu.memory_space<smem>>
    %c0_50 = arith.constant 0 : index
    %c0_51 = arith.constant 0 : index
    %433 = vector.load %arg12[%c0_50, %c0_51] : memref<1x32xf32, #tpu.memory_space<vmem>>, vector<1x32xf32>
    %434 = vector.broadcast %433 : vector<1x32xf32> to vector<2x32xf32>
    %435 = arith.mulf %431, %434 : vector<2x32xf32>
    %cst_52 = arith.constant dense<0.000000e+00> : vector<2xf32>
    %436 = vector.multi_reduction <add>, %435, %cst_52 [1] : vector<2x32xf32> to vector<2xf32>
    %437 = vector.shape_cast %436 : vector<2xf32> to vector<2x1xf32>
    %438 = vector.broadcast %432 : f32 to vector<2x1xf32>
    %439 = arith.addf %437, %438 : vector<2x1xf32>
    %c0_53 = arith.constant 0 : index
    %c0_54 = arith.constant 0 : index
    %440 = vector.load %arg13[%c0_53, %c0_54] : memref<2x1xf32, #tpu.memory_space<vmem>>, vector<2x1xf32>
    tpu.vector_store %arg13[%c0_53, %c0_54], %439 {strides = array<i32>} : memref<2x1xf32, #tpu.memory_space<vmem>>, vector<2x1xf32>,
    return
  }
}

</mosaic_0001>

<llo_original>
// kernel: find_cluster_forward.1
$region0: #{find_cluster_forward.1}
  #allocation0 [shape = 'u32[]', space=smem, size = 0x4, offset = 0x4, fixed_abs, tag = 'smem constant byte address 0x4 - core index']
  #allocation1 [shape = 'u32[144,128]{1,0:T(1,128)}', space=vmem, size = 0x12000, scoped, tag = 'internal scratch']
  %s0 = inlined_call_operand.vmem [shape: f32[16], index: 0, kind: input, shape index: {}]
  %s1 = inlined_call_operand.hbm [shape: f32[32,16], index: 1, kind: input, shape index: {}]
  %s2 = inlined_call_operand.hbm [shape: f32[32,16], index: 2, kind: input, shape index: {}]
  %s3 = inlined_call_operand.hbm [shape: f32[18,256], index: 3, kind: input, shape index: {}]
  %s4 = inlined_call_operand.hbm [shape: f32[18,256], index: 4, kind: input, shape index: {}]
  %s5 = inlined_call_operand.hbm [shape: f32[128,384], index: 5, kind: input, shape index: {}]
  %s6 = inlined_call_operand.hbm [shape: f32[160,256], index: 6, kind: input, shape index: {}]
  %s7 = inlined_call_operand.hbm [shape: f32[160,256], index: 7, kind: input, shape index: {}]
  %s8 = inlined_call_operand.hbm [shape: f32[128,384], index: 8, kind: input, shape index: {}]
  %s9 = inlined_call_operand.hbm [shape: f32[192,128], index: 9, kind: input, shape index: {}]
  %s10 = inlined_call_operand.hbm [shape: f32[192,128], index: 10, kind: input, shape index: {}]
  %s11 = inlined_call_operand.hbm [shape: f32[64,192], index: 11, kind: input, shape index: {}]
  %s12 = inlined_call_operand.vmem [shape: f32[1,32], index: 12, kind: input, shape index: {}]
  %s13 = inlined_call_operand.vmem [shape: f32[2,1], index: 13, kind: output, shape index: {}]
  %s14 = sld [smem:[#allocation0]]
  $region110: #{find_cluster_forward.1} parent=0
    _
  %s16 = ssub.s32 1, %s14
  %s17 = scalar_select 0, %s16, %s14
  $region1: #{find_cluster_forward.1} parent=0
    #allocation2 [shape = 'u8[512]{0}', space=smem, size = 0x200, scoped, tag = 'input window, operand 0, single buffered']
    #allocation3 [shape = 's32[1]{0}', space=sflag, size = 0x4, scoped, tag = 'scoped memory for find_cluster_forward.1']
    #allocation4 [shape = 's32[1]{0}', space=sflag, size = 0x4, scoped, tag = 'scoped memory for find_cluster_forward.1']
    #allocation5 [shape = 'u8[16384]{0}', space=vmem, size = 0x4000, scoped, tag = 'input window, operand 1, single buffered']
    #allocation6 [shape = 'u8[16384]{0}', space=vmem, size = 0x4000, scoped, tag = 'input window, operand 2, single buffered']
    #allocation7 [shape = 's32[1]{0}', space=sflag, size = 0x4, scoped, tag = 'scoped memory for find_cluster_forward.1']
    #allocation8 [shape = 'u8[24576]{0}', space=vmem, size = 0x6000, scoped, tag = 'input window, operand 3, single buffered']
    #allocation9 [shape = 'u8[24576]{0}', space=vmem, size = 0x6000, scoped, tag = 'input window, operand 4, single buffered']
    #allocation10 [shape = 's32[1]{0}', space=sflag, size = 0x4, scoped, tag = 'scoped memory for find_cluster_forward.1']
    #allocation11 [shape = 'u8[196608]{0}', space=vmem, size = 0x30000, scoped, tag = 'input window, operand 5, single buffered']
    #allocation12 [shape = 'u8[163840]{0}', space=vmem, size = 0x28000, scoped, tag = 'input window, operand 6, single buffered']
    #allocation13 [shape = 's32[1]{0}', space=sflag, size = 0x4, scoped, tag = 'scoped memory for find_cluster_forward.1']
    #allocation14 [shape = 'u8[163840]{0}', space=vmem, size = 0x28000, scoped, tag = 'input window, operand 7, single buffered']
    #allocation15 [shape = 'u8[196608]{0}', space=vmem, size = 0x30000, scoped, tag = 'input window, operand 8, single buffered']
    #allocation16 [shape = 's32[1]{0}', space=sflag, size = 0x4, scoped, tag = 'scoped memory for find_cluster_forward.1']
    #allocation17 [shape = 'u8[98304]{0}', space=vmem, size = 0x18000, scoped, tag = 'input window, operand 9, single buffered']
    #allocation18 [shape = 'u8[98304]{0}', space=vmem, size = 0x18000, scoped, tag = 'input window, operand 10, single buffered']
    #allocation19 [shape = 's32[1]{0}', space=sflag, size = 0x4, scoped, tag = 'scoped memory for find_cluster_forward.1']
    #allocation20 [shape = 'u8[65536]{0}', space=vmem, size = 0x10000, scoped, tag = 'input window, operand 11, single buffered']
    %18 = vsyncpa [#allocation4], 0
    %19 = vsyncpa [#allocation3], 0
    %20 = vsyncpa [#allocation7], 0
    %21 = vsyncpa [#allocation10], 0
    %22 = vsyncpa [#allocation13], 0
    %23 = vsyncpa [#allocation16], 0
    %24 = vsyncpa [#allocation19], 0
    // Predicated region
    $region2: #{find_cluster_forward.1} parent=1 // pred_check
      _
    $region3: #{find_cluster_forward.1} parent=1 // pred_check_branch
      %26 = sbr.rel (0) target = $region5
    $region4: #{find_cluster_forward.1} parent=1 // pred_region
      %s28 = ssub.s32 16, 16
      %29 = vsyncadd [#allocation4], %s28
      %s31 = sshll.u32 %s0, 4
      %s32 = int_to_ptr.vmem [resolvable:$true] %s31
      %34 = dma.vmem_to_smem %s32, 16, [#allocation2], [#allocation4]
    $region5: #{find_cluster_forward.1} parent=1 // pred_fallthru
      _
    // Predicated region
    $region6: #{find_cluster_forward.1} parent=1 // pred_check
      _
    $region7: #{find_cluster_forward.1} parent=1 // pred_check_branch
      %36 = sbr.rel (0) target = $region9
    $region8: #{find_cluster_forward.1} parent=1 // pred_region
      %s38 = ssub.s32 512, 512
      %39 = vsyncadd [#allocation3], %s38
      %s40 = sshll.u32 [#allocation5], 4
      %s41 = int_to_ptr.vmem [resolvable:$true] %s40
      %46 = dma.hbm_to_vmem [thread:$0]  %s1, 512, %s41, [#allocation3], 128, 128, 8
    $region9: #{find_cluster_forward.1} parent=1 // pred_fallthru
      _
    // Predicated region
    $region10: #{find_cluster_forward.1} parent=1 // pred_check
      _
    $region11: #{find_cluster_forward.1} parent=1 // pred_check_branch
      %48 = sbr.rel (0) target = $region13
    $region12: #{find_cluster_forward.1} parent=1 // pred_region
      %s50 = ssub.s32 512, 512
      %51 = vsyncadd [#allocation7], %s50
      %s52 = sshll.u32 [#allocation6], 4
      %s53 = int_to_ptr.vmem [resolvable:$true] %s52
      %58 = dma.hbm_to_vmem [thread:$0]  %s2, 512, %s53, [#allocation7], 128, 128, 8
    $region13: #{find_cluster_forward.1} parent=1 // pred_fallthru
      _
    // Predicated region
    $region14: #{find_cluster_forward.1} parent=1 // pred_check
      _
    $region15: #{find_cluster_forward.1} parent=1 // pred_check_branch
      %60 = sbr.rel (0) target = $region17
    $region16: #{find_cluster_forward.1} parent=1 // pred_region
      %s62 = ssub.s32 768, 768
      %63 = vsyncadd [#allocation7], %s62
      %s64 = sshll.u32 [#allocation8], 4
      %s65 = int_to_ptr.vmem [resolvable:$true] %s64
      %70 = dma.hbm_to_vmem [thread:$0]  %s3, 768, %s65, [#allocation7], 256, 256, 16
    $region17: #{find_cluster_forward.1} parent=1 // pred_fallthru
      _
    // Predicated region
    $region18: #{find_cluster_forward.1} parent=1 // pred_check
      _
    $region19: #{find_cluster_forward.1} parent=1 // pred_check_branch
      %72 = sbr.rel (0) target = $region21
    $region20: #{find_cluster_forward.1} parent=1 // pred_region
      %s74 = ssub.s32 768, 768
      %75 = vsyncadd [#allocation10], %s74
      %s76 = sshll.u32 [#allocation9], 4
      %s77 = int_to_ptr.vmem [resolvable:$true] %s76
      %82 = dma.hbm_to_vmem [thread:$0]  %s4, 768, %s77, [#allocation10], 256, 256, 16
    $region21: #{find_cluster_forward.1} parent=1 // pred_fallthru
      _
    // Predicated region
    $region22: #{find_cluster_forward.1} parent=1 // pred_check
      _
    $region23: #{find_cluster_forward.1} parent=1 // pred_check_branch
      %84 = sbr.rel (0) target = $region25
    $region24: #{find_cluster_forward.1} parent=1 // pred_region
      %s86 = ssub.s32 6144, 6144
      %87 = vsyncadd [#allocation10], %s86
      %s88 = sshll.u32 [#allocation11], 4
      %s89 = int_to_ptr.vmem [resolvable:$true] %s88
      %94 = dma.hbm_to_vmem [thread:$0]  %s5, 6144, %s89, [#allocation10], 384, 384, 24
    $region25: #{find_cluster_forward.1} parent=1 // pred_fallthru
      _
    // Predicated region
    $region26: #{find_cluster_forward.1} parent=1 // pred_check
      _
    $region27: #{find_cluster_forward.1} parent=1 // pred_check_branch
      %96 = sbr.rel (0) target = $region29
    $region28: #{find_cluster_forward.1} parent=1 // pred_region
      %s98 = ssub.s32 5120, 5120
      %99 = vsyncadd [#allocation13], %s98
      %s100 = sshll.u32 [#allocation12], 4
      %s101 = int_to_ptr.vmem [resolvable:$true] %s100
      %106 = dma.hbm_to_vmem [thread:$0]  %s6, 5120, %s101, [#allocation13], 256, 256, 16
    $region29: #{find_cluster_forward.1} parent=1 // pred_fallthru
      _
    // Predicated region
    $region30: #{find_cluster_forward.1} parent=1 // pred_check
      _
    $region31: #{find_cluster_forward.1} parent=1 // pred_check_branch
      %108 = sbr.rel (0) target = $region33
    $region32: #{find_cluster_forward.1} parent=1 // pred_region
      %s110 = ssub.s32 5120, 5120
      %111 = vsyncadd [#allocation13], %s110
      %s112 = sshll.u32 [#allocation14], 4
      %s113 = int_to_ptr.vmem [resolvable:$true] %s112
      %118 = dma.hbm_to_vmem [thread:$0]  %s7, 5120, %s113, [#allocation13], 256, 256, 16
    $region33: #{find_cluster_forward.1} parent=1 // pred_fallthru
      _
    // Predicated region
    $region34: #{find_cluster_forward.1} parent=1 // pred_check
      _
    $region35: #{find_cluster_forward.1} parent=1 // pred_check_branch
      %120 = sbr.rel (0) target = $region37
    $region36: #{find_cluster_forward.1} parent=1 // pred_region
      %s122 = ssub.s32 6144, 6144
      %123 = vsyncadd [#allocation16], %s122
      %s124 = sshll.u32 [#allocation15], 4
      %s125 = int_to_ptr.vmem [resolvable:$true] %s124
      %130 = dma.hbm_to_vmem [thread:$0]  %s8, 6144, %s125, [#allocation16], 384, 384, 24
    $region37: #{find_cluster_forward.1} parent=1 // pred_fallthru
      _
    // Predicated region
    $region38: #{find_cluster_forward.1} parent=1 // pred_check
      _
    $region39: #{find_cluster_forward.1} parent=1 // pred_check_branch
      %132 = sbr.rel (0) target = $region41
    $region40: #{find_cluster_forward.1} parent=1 // pred_region
      %s134 = ssub.s32 3072, 3072
      %135 = vsyncadd [#allocation16], %s134
      %s136 = sshll.u32 [#allocation17], 4
      %s137 = int_to_ptr.vmem [resolvable:$true] %s136
      %142 = dma.hbm_to_vmem [thread:$0]  %s9, 3072, %s137, [#allocation16], 128, 128, 8
    $region41: #{find_cluster_forward.1} parent=1 // pred_fallthru
      _
    // Predicated region
    $region42: #{find_cluster_forward.1} parent=1 // pred_check
      _
    $region43: #{find_cluster_forward.1} parent=1 // pred_check_branch
      %144 = sbr.rel (0) target = $region45
    $region44: #{find_cluster_forward.1} parent=1 // pred_region
      %s146 = ssub.s32 3072, 3072
      %147 = vsyncadd [#allocation19], %s146
      %s148 = sshll.u32 [#allocation18], 4
      %s149 = int_to_ptr.vmem [resolvable:$true] %s148
      %154 = dma.hbm_to_vmem [thread:$0]  %s10, 3072, %s149, [#allocation19], 128, 128, 8
    $region45: #{find_cluster_forward.1} parent=1 // pred_fallthru
      _
    // Predicated region
    $region46: #{find_cluster_forward.1} parent=1 // pred_check
      _
    $region47: #{find_cluster_forward.1} parent=1 // pred_check_branch
      %156 = sbr.rel (0) target = $region49
    $region48: #{find_cluster_forward.1} parent=1 // pred_region
      %s158 = ssub.s32 2048, 2048
      %159 = vsyncadd [#allocation19], %s158
      %s160 = sshll.u32 [#allocation20], 4
      %s161 = int_to_ptr.vmem [resolvable:$true] %s160
      %166 = dma.hbm_to_vmem [thread:$0]  %s11, 2048, %s161, [#allocation19], 256, 256, 16
    $region49: #{find_cluster_forward.1} parent=1 // pred_fallthru
      _
    // Predicated region
    $region50: #{find_cluster_forward.1} parent=1 // pred_check
      _
    $region51: #{find_cluster_forward.1} parent=1 // pred_check_branch
      %168 = sbr.rel (0) target = $region53
    $region52: #{find_cluster_forward.1} parent=1 // pred_region
      _
    $region53: #{find_cluster_forward.1} parent=1 // pred_fallthru
      _
    // Predicated region
    $region54: #{find_cluster_forward.1} parent=1 // pred_check
      _
    $region55: #{find_cluster_forward.1} parent=1 // pred_check_branch
      %170 = sbr.rel (0) target = $region57
    $region56: #{find_cluster_forward.1} parent=1 // pred_region
      %171 = dma.done [#allocation4], 16
    $region57: #{find_cluster_forward.1} parent=1 // pred_fallthru
      _
    // Predicated region
    $region58: #{find_cluster_forward.1} parent=1 // pred_check
      _
    $region59: #{find_cluster_forward.1} parent=1 // pred_check_branch
      %173 = sbr.rel (0) target = $region61
    $region60: #{find_cluster_forward.1} parent=1 // pred_region
      %174 = dma.done [#allocation3], 512
    $region61: #{find_cluster_forward.1} parent=1 // pred_fallthru
      _
    // Predicated region
    $region62: #{find_cluster_forward.1} parent=1 // pred_check
      _
    $region63: #{find_cluster_forward.1} parent=1 // pred_check_branch
      %176 = sbr.rel (0) target = $region65
    $region64: #{find_cluster_forward.1} parent=1 // pred_region
      %177 = dma.done [#allocation7], 512
    $region65: #{find_cluster_forward.1} parent=1 // pred_fallthru
      _
    // Predicated region
    $region66: #{find_cluster_forward.1} parent=1 // pred_check
      _
    $region67: #{find_cluster_forward.1} parent=1 // pred_check_branch
      %179 = sbr.rel (0) target = $region69
    $region68: #{find_cluster_forward.1} parent=1 // pred_region
      %180 = dma.done [#allocation7], 768
    $region69: #{find_cluster_forward.1} parent=1 // pred_fallthru
      _
    // Predicated region
    $region70: #{find_cluster_forward.1} parent=1 // pred_check
      _
    $region71: #{find_cluster_forward.1} parent=1 // pred_check_branch
      %182 = sbr.rel (0) target = $region73
    $region72: #{find_cluster_forward.1} parent=1 // pred_region
      %183 = dma.done [#allocation10], 768
    $region73: #{find_cluster_forward.1} parent=1 // pred_fallthru
      _
    // Predicated region
    $region74: #{find_cluster_forward.1} parent=1 // pred_check
      _
    $region75: #{find_cluster_forward.1} parent=1 // pred_check_branch
      %185 = sbr.rel (0) target = $region77
    $region76: #{find_cluster_forward.1} parent=1 // pred_region
      %186 = dma.done [#allocation10], 6144
    $region77: #{find_cluster_forward.1} parent=1 // pred_fallthru
      _
    // Predicated region
    $region78: #{find_cluster_forward.1} parent=1 // pred_check
      _
    $region79: #{find_cluster_forward.1} parent=1 // pred_check_branch
      %188 = sbr.rel (0) target = $region81
    $region80: #{find_cluster_forward.1} parent=1 // pred_region
      %189 = dma.done [#allocation13], 5120
    $region81: #{find_cluster_forward.1} parent=1 // pred_fallthru
      _
    // Predicated region
    $region82: #{find_cluster_forward.1} parent=1 // pred_check
      _
    $region83: #{find_cluster_forward.1} parent=1 // pred_check_branch
      %191 = sbr.rel (0) target = $region85
    $region84: #{find_cluster_forward.1} parent=1 // pred_region
      %192 = dma.done [#allocation13], 5120
    $region85: #{find_cluster_forward.1} parent=1 // pred_fallthru
      _
    // Predicated region
    $region86: #{find_cluster_forward.1} parent=1 // pred_check
      _
    $region87: #{find_cluster_forward.1} parent=1 // pred_check_branch
      %194 = sbr.rel (0) target = $region89
    $region88: #{find_cluster_forward.1} parent=1 // pred_region
      %195 = dma.done [#allocation16], 6144
    $region89: #{find_cluster_forward.1} parent=1 // pred_fallthru
      _
    // Predicated region
    $region90: #{find_cluster_forward.1} parent=1 // pred_check
      _
    $region91: #{find_cluster_forward.1} parent=1 // pred_check_branch
      %197 = sbr.rel (0) target = $region93
    $region92: #{find_cluster_forward.1} parent=1 // pred_region
      %198 = dma.done [#allocation16], 3072
    $region93: #{find_cluster_forward.1} parent=1 // pred_fallthru
      _
    // Predicated region
    $region94: #{find_cluster_forward.1} parent=1 // pred_check
      _
    $region95: #{find_cluster_forward.1} parent=1 // pred_check_branch
      %200 = sbr.rel (0) target = $region97
    $region96: #{find_cluster_forward.1} parent=1 // pred_region
      %201 = dma.done [#allocation19], 3072
    $region97: #{find_cluster_forward.1} parent=1 // pred_fallthru
      _
    // Predicated region
    $region98: #{find_cluster_forward.1} parent=1 // pred_check
      _
    $region99: #{find_cluster_forward.1} parent=1 // pred_check_branch
      %203 = sbr.rel (0) target = $region101
    $region100: #{find_cluster_forward.1} parent=1 // pred_region
      %204 = dma.done [#allocation19], 2048
    $region101: #{find_cluster_forward.1} parent=1 // pred_fallthru
      _
    %205 = sfence
    %v206 = vld [vmem:[#allocation5] sm:$0xff]
    %v207 = vld [vmem:[#allocation5 + $0x8] sm:$0xff]
    %v208 = vld [vmem:[#allocation5 + $0x10] sm:$0xff]
    %v209 = vld [vmem:[#allocation5 + $0x18] sm:$0xff]
    %v210 = vld [vmem:[#allocation6] sm:$0xff]
    %v211 = vld [vmem:[#allocation6 + $0x8] sm:$0xff]
    %v212 = vld [vmem:[#allocation6 + $0x10] sm:$0xff]
    %v213 = vld [vmem:[#allocation6 + $0x18] sm:$0xff]
    %s214 = sld [smem:[#allocation2]]
    %s215 = sld [smem:[#allocation2 + $0x1]]
    %s216 = sld [smem:[#allocation2 + $0x2]]
    %s217 = sld [smem:[#allocation2 + $0x3]]
    %s218 = sld [smem:[#allocation2 + $0x4]]
    %v219 = vstv %s214
    %v220 = vadd.f32 %v206, %v219
    %v221 = vadd.f32 %v207, %v219
    %v222 = vadd.f32 %v208, %v219
    %v223 = vadd.f32 %v209, %v219
    %v224 = vadd.f32 %v210, %v219
    %v225 = vadd.f32 %v211, %v219
    %v226 = vadd.f32 %v212, %v219
    %v227 = vadd.f32 %v213, %v219
    %v228 = vld [vmem:[#allocation8] sm:$0xff]
    %v229 = vld [vmem:[#allocation8 + $0x8] sm:$0xff]
    %v230 = vld [vmem:[#allocation8 + $0x10] sm:$0xff]
    %v231 = vld [vmem:[#allocation8 + $0x18] sm:$0xff]
    %v232 = vld [vmem:[#allocation8 + $0x20] sm:$0x3]
    %v233 = vld [vmem:[#allocation8 + $0x28] sm:$0x3]
    %v234 = vld [vmem:[#allocation9] sm:$0xff]
    %v235 = vld [vmem:[#allocation9 + $0x8] sm:$0xff]
    %v236 = vld [vmem:[#allocation9 + $0x10] sm:$0xff]
    %v237 = vld [vmem:[#allocation9 + $0x18] sm:$0xff]
    %v238 = vld [vmem:[#allocation9 + $0x20] sm:$0x3]
    %v239 = vld [vmem:[#allocation9 + $0x28] sm:$0x3]
    %v240 = vld [vmem:[#allocation11] sm:$0xff]
    %v241 = vld [vmem:[#allocation11 + $0x8] sm:$0xff]
    %v242 = vld [vmem:[#allocation11 + $0x10] sm:$0xff]
    %v243 = vld [vmem:[#allocation11 + $0x18] sm:$0xff]
    %v244 = vld [vmem:[#allocation11 + $0x20] sm:$0xff]
    %v245 = vld [vmem:[#allocation11 + $0x28] sm:$0xff]
    %v246 = vld [vmem:[#allocation11 + $0x30] sm:$0xff]
    %v247 = vld [vmem:[#allocation11 + $0x38] sm:$0xff]
    %v248 = vld [vmem:[#allocation11 + $0x40] sm:$0xff]
    %v249 = vld [vmem:[#allocation11 + $0x48] sm:$0xff]
    %v250 = vld [vmem:[#allocation11 + $0x50] sm:$0xff]
    %v251 = vld [vmem:[#allocation11 + $0x58] sm:$0xff]
    %v252 = vld [vmem:[#allocation11 + $0x60] sm:$0xff]
    %v253 = vld [vmem:[#allocation11 + $0x68] sm:$0xff]
    %v254 = vld [vmem:[#allocation11 + $0x70] sm:$0xff]
    %v255 = vld [vmem:[#allocation11 + $0x78] sm:$0xff]
    %v256 = vld [vmem:[#allocation11 + $0x80] sm:$0xff]
    %v257 = vld [vmem:[#allocation11 + $0x88] sm:$0xff]
    %v258 = vld [vmem:[#allocation11 + $0x90] sm:$0xff]
    %v259 = vld [vmem:[#allocation11 + $0x98] sm:$0xff]
    %v260 = vld [vmem:[#allocation11 + $0xa0] sm:$0xff]
    %v261 = vld [vmem:[#allocation11 + $0xa8] sm:$0xff]
    %v262 = vld [vmem:[#allocation11 + $0xb0] sm:$0xff]
    %v263 = vld [vmem:[#allocation11 + $0xb8] sm:$0xff]
    %v264 = vld [vmem:[#allocation11 + $0xc0] sm:$0xff]
    %v265 = vld [vmem:[#allocation11 + $0xc8] sm:$0xff]
    %v266 = vld [vmem:[#allocation11 + $0xd0] sm:$0xff]
    %v267 = vld [vmem:[#allocation11 + $0xd8] sm:$0xff]
    %v268 = vld [vmem:[#allocation11 + $0xe0] sm:$0xff]
    %v269 = vld [vmem:[#allocation11 + $0xe8] sm:$0xff]
    %v270 = vld [vmem:[#allocation11 + $0xf0] sm:$0xff]
    %v271 = vld [vmem:[#allocation11 + $0xf8] sm:$0xff]
    %v272 = vld [vmem:[#allocation11 + $0x100] sm:$0xff]
    %v273 = vld [vmem:[#allocation11 + $0x108] sm:$0xff]
    %v274 = vld [vmem:[#allocation11 + $0x110] sm:$0xff]
    %v275 = vld [vmem:[#allocation11 + $0x118] sm:$0xff]
    %v276 = vld [vmem:[#allocation11 + $0x120] sm:$0xff]
    %v277 = vld [vmem:[#allocation11 + $0x128] sm:$0xff]
    %v278 = vld [vmem:[#allocation11 + $0x130] sm:$0xff]
    %v279 = vld [vmem:[#allocation11 + $0x138] sm:$0xff]
    %v280 = vld [vmem:[#allocation11 + $0x140] sm:$0xff]
    %v281 = vld [vmem:[#allocation11 + $0x148] sm:$0xff]
    %v282 = vld [vmem:[#allocation11 + $0x150] sm:$0xff]
    %v283 = vld [vmem:[#allocation11 + $0x158] sm:$0xff]
    %v284 = vld [vmem:[#allocation11 + $0x160] sm:$0xff]
    %v285 = vld [vmem:[#allocation11 + $0x168] sm:$0xff]
    %v286 = vld [vmem:[#allocation11 + $0x170] sm:$0xff]
    %v287 = vld [vmem:[#allocation11 + $0x178] sm:$0xff]
    %296 = vrot.lane.b32.xlu0 %v220, 1
    %v297 = vpop.permute.xlu0 %296
    %298 = vrot.lane.b32.xlu0 %v221, 1
    %v299 = vpop.permute.xlu0 %298
    %300 = vrot.lane.b32.xlu0 %v222, 1
    %v301 = vpop.permute.xlu0 %300
    %302 = vrot.lane.b32.xlu0 %v223, 1
    %v303 = vpop.permute.xlu0 %302
    %304 = vrot.lane.b32.xlu0 %v224, 1
    %v305 = vpop.permute.xlu0 %304
    %306 = vrot.lane.b32.xlu0 %v225, 1
    %v307 = vpop.permute.xlu0 %306
    %308 = vrot.lane.b32.xlu0 %v226, 1
    %v309 = vpop.permute.xlu0 %308
    %310 = vrot.lane.b32.xlu0 %v227, 1
    %v311 = vpop.permute.xlu0 %310
    %vm320 = vcmask 7168
    %v321 = vsel %vm320, 0.0, %v297
    %v322 = vsel %vm320, 0.0, %v299
    %v323 = vsel %vm320, 0.0, %v301
    %v324 = vsel %vm320, 0.0, %v303
    %v325 = vsel %vm320, 0.0, %v305
    %v326 = vsel %vm320, 0.0, %v307
    %v327 = vsel %vm320, 0.0, %v309
    %v328 = vsel %vm320, 0.0, %v311
    %vm329 = vcmask 138240
    %v330 = vsel %vm329, %v321, 0.0
    %v331 = vsel %vm329, %v322, 0.0
    %v332 = vsel %vm329, %v323, 0.0
    %v333 = vsel %vm329, %v324, 0.0
    %v334 = vsel %vm329, %v325, 0.0
    %v335 = vsel %vm329, %v326, 0.0
    %v336 = vsel %vm329, %v327, 0.0
    %v337 = vsel %vm329, %v328, 0.0
    %v339 = vrot.slane %v330, 1
    %v341 = vrot.slane %v330, 2
    %v343 = vrot.slane %v330, 3
    %v346 = vrot.slane %v331, 4
    %v348 = vrot.slane %v331, 5
    %v350 = vrot.slane %v331, 6
    %v352 = vrot.slane %v331, 7
    %v355 = vrot.slane %v332, 7
    %v357 = vrot.slane %v332, 1
    %v359 = vrot.slane %v332, 2
    %v362 = vrot.slane %v333, 3
    %v364 = vrot.slane %v333, 4
    %vm366 = vcmask 1040384
    %v367 = vsel %vm366, 0.0, %v330
    %vm368 = vcmask 1041408
    %v369 = vsel %vm368, %v367, %v339
    %vm370 = vcmask 1042432
    %v371 = vsel %vm370, %v369, %v341
    %vm372 = vcmask 1043456
    %v373 = vsel %vm372, %v371, %v343
    %vm374 = vcmask 1044480
    %v375 = vsel %vm374, %v373, %v346
    %vm376 = vcmask 1045504
    %v377 = vsel %vm376, %v375, %v348
    %vm378 = vcmask 1046528
    %v379 = vsel %vm378, %v377, %v350
    %v380 = vsel %vm366, %v352, 0.0
    %v381 = vsel %vm368, %v380, %v355
    %v382 = vsel %vm370, %v381, %v332
    %v383 = vsel %vm372, %v382, %v357
    %v384 = vsel %vm374, %v383, %v359
    %v385 = vsel %vm376, %v384, %v362
    %v386 = vsel %vm378, %v385, %v364
    %v387 = vrot.slane %v333, 5
    %v389 = vrot.slane %v333, 6
    %v392 = vrot.slane %v334, 6
    %v394 = vrot.slane %v334, 7
    %v396 = vrot.slane %v334, 1
    %v399 = vrot.slane %v335, 2
    %v401 = vrot.slane %v335, 3
    %v403 = vrot.slane %v335, 4
    %v405 = vrot.slane %v335, 5
    %v408 = vrot.slane %v336, 5
    %v410 = vrot.slane %v336, 6
    %v412 = vrot.slane %v336, 7
    %v414 = vsel %vm366, %v387, %v389
    %v415 = vsel %vm368, %v414, 0.0
    %v416 = vsel %vm370, %v415, %v392
    %v417 = vsel %vm372, %v416, %v394
    %v418 = vsel %vm374, %v417, %v334
    %v419 = vsel %vm376, %v418, %v396
    %v420 = vsel %vm378, %v419, %v399
    %v421 = vsel %vm366, %v401, %v403
    %v422 = vsel %vm368, %v421, %v405
    %v423 = vsel %vm370, %v422, 0.0
    %v424 = vsel %vm372, %v423, %v408
    %v425 = vsel %vm374, %v424, %v410
    %v426 = vsel %vm376, %v425, %v412
    %v427 = vsel %vm378, %v426, %v336
    %v429 = vrot.slane %v337, 1
    %v431 = vrot.slane %v337, 2
    %v433 = vrot.slane %v337, 3
    %v435 = vrot.slane %v337, 4
    %v437 = vsel %vm366, %v429, %v431
    %v438 = vsel %vm368, %v437, %v433
    %v439 = vsel %vm370, %v438, %v435
    %v440 = vsel %vm366, %v330, %v339
    %v441 = vsel %vm368, %v440, %v341
    %v442 = vsel %vm370, %v441, %v343
    %v443 = vsel %vm372, %v442, %v346
    %v444 = vsel %vm374, %v443, %v348
    %v445 = vsel %vm376, %v444, %v350
    %v446 = vsel %vm378, %v445, %v352
    %v447 = vsel %vm366, 0.0, %v355
    %v448 = vsel %vm368, %v447, %v332
    %v449 = vsel %vm370, %v448, %v357
    %v450 = vsel %vm372, %v449, %v359
    %v451 = vsel %vm374, %v450, %v362
    %v452 = vsel %vm376, %v451, %v364
    %v453 = vsel %vm378, %v452, %v387
    %v454 = vsel %vm366, %v389, 0.0
    %v455 = vsel %vm368, %v454, %v392
    %v456 = vsel %vm370, %v455, %v394
    %v457 = vsel %vm372, %v456, %v334
    %v458 = vsel %vm374, %v457, %v396
    %v459 = vsel %vm376, %v458, %v399
    %v460 = vsel %vm378, %v459, %v401
    %v461 = vsel %vm366, %v403, %v405
    %v462 = vsel %vm368, %v461, 0.0
    %v463 = vsel %vm370, %v462, %v408
    %v464 = vsel %vm372, %v463, %v410
    %v465 = vsel %vm374, %v464, %v412
    %v466 = vsel %vm376, %v465, %v336
    %v467 = vsel %vm378, %v466, %v429
    %v468 = vsel %vm366, %v431, %v433
    %v469 = vsel %vm368, %v468, %v435
    %v470 = vsel %vm370, %v469, 0.0
    %vm471 = vcmask 146432
    %v473 = vsel %vm471, %v379, 0
    %v476 = vsel %vm471, %v386, 0
    %v479 = vsel %vm471, %v420, 0
    %v482 = vsel %vm471, %v427, 0
    %v485 = vsel %vm471, %v439, 0
    %v488 = vsel %vm368, %v232, 0
    %v491 = vsel %vm368, %v233, 0
    %493 = vmatprep.subr.mxu0 0.0
    %494 = vmatpush1.msra.mxu0 0.0
    %495 = vmatprep.subr.mxu0 0.0
    %496 = vmatpush1.msra.mxu0 0.0
    %497 = vmatprep.subr.mxu0 0.0
    %498 = vmatpush1.msra.mxu0 0.0
    %499 = vmatprep.subr.mxu0 0.0
    %500 = vmatpush1.msra.mxu0 0.0
    %501 = vmatprep.subr.mxu0 0.0
    %502 = vmatpush1.msra.mxu0 0.0
    %503 = vmatprep.subr.mxu0 0.0
    %504 = vmatpush1.msra.mxu0 0.0
    %505 = vmatprep.subr.mxu0 0.0
    %506 = vmatpush1.msra.mxu0 0.0
    %507 = vmatprep.subr.mxu0 0.0
    %508 = vmatpush1.msra.mxu0 0.0
    %509 = vmatprep.subr.mxu0 0.0
    %510 = vmatpush1.msra.mxu0 0.0
    %511 = vmatprep.subr.mxu0 0.0
    %512 = vmatpush1.msra.mxu0 0.0
    %513 = vmatprep.subr.mxu0 0.0
    %514 = vmatpush1.msra.mxu0 0.0
    %515 = vmatprep.subr.mxu0 0.0
    %516 = vmatpush1.msra.mxu0 0.0
    %517 = vmatprep.subr.mxu0 0.0
    %518 = vmatpush1.msra.mxu0 0.0
    %519 = vmatprep.subr.mxu0 %v491
    %520 = vmatpush1.msra.mxu0 %v488
    %521 = vmatprep.subr.mxu0 %v231
    %522 = vmatpush1.msra.mxu0 %v230
    %523 = vmatprep.subr.mxu0 %v229
    %524 = vmatpush1.msra.mxu0 %v228
    %525 = vmatprep.subr.mxu0 0.0
    %526 = vmatpush2.msra.mxu0 0.0
    %527 = vmatprep.subr.mxu0 0.0
    %528 = vmatpush2.msra.mxu0 0.0
    %529 = vmatprep.subr.mxu0 0.0
    %530 = vmatpush2.msra.mxu0 0.0
    %531 = vmatprep.subr.mxu0 0.0
    %532 = vmatpush2.msra.mxu0 0.0
    %533 = vmatprep.subr.mxu0 0.0
    %534 = vmatpush2.msra.mxu0 0.0
    %535 = vmatprep.subr.mxu0 0.0
    %536 = vmatpush2.msra.mxu0 0.0
    %537 = vmatprep.subr.mxu0 0.0
    %538 = vmatpush2.msra.mxu0 0.0
    %539 = vmatprep.subr.mxu0 0.0
    %540 = vmatpush2.msra.mxu0 0.0
    %541 = vmatprep.subr.mxu0 0.0
    %542 = vmatpush2.msra.mxu0 0.0
    %543 = vmatprep.subr.mxu0 0.0
    %544 = vmatpush2.msra.mxu0 0.0
    %545 = vmatprep.subr.mxu0 0.0
    %546 = vmatpush2.msra.mxu0 0.0
    %547 = vmatprep.subr.mxu0 0.0
    %548 = vmatpush2.msra.mxu0 0.0
    %549 = vmatprep.subr.mxu0 0.0
    %550 = vmatpush2.msra.mxu0 0.0
    %551 = vmatprep.subr.mxu0 0.0
    %552 = vmatpush2.msra.mxu0 0.0
    %553 = vmatprep.subr.mxu0 0.0
    %554 = vmatpush2.msra.mxu0 0.0
    %555 = vmatprep.subr.mxu0 0.0
    %556 = vmatpush2.msra.mxu0 0.0
    %557 = vmatprep.mubr.f32.mxu0 0.0
    %558 = vmatmul.mubr.f32.gmra.mxu0 %v473
    %v559 = vpop.f32.mrf.mxu0
    %v560 = vadd.f32 0.0, %v559
    %v561 = vpop.f32.mrf.mxu0
    %v562 = vadd.f32 0.0, %v561
    %563 = vmatprep.mubr.f32.mxu0 0.0
    %564 = vmatmul.mubr.f32.gmra.mxu0 %v476
    %v565 = vpop.f32.mrf.mxu0
    %v566 = vadd.f32 0.0, %v565
    %v567 = vpop.f32.mrf.mxu0
    %v568 = vadd.f32 0.0, %v567
    %569 = vmatprep.mubr.f32.mxu0 0.0
    %570 = vmatmul.mubr.f32.gmra.mxu0 %v479
    %v571 = vpop.f32.mrf.mxu0
    %v572 = vadd.f32 0.0, %v571
    %v573 = vpop.f32.mrf.mxu0
    %v574 = vadd.f32 0.0, %v573
    %575 = vmatprep.mubr.f32.mxu0 0.0
    %576 = vmatmul.mubr.f32.gmra.mxu0 %v482
    %v577 = vpop.f32.mrf.mxu0
    %v578 = vadd.f32 0.0, %v577
    %v579 = vpop.f32.mrf.mxu0
    %v580 = vadd.f32 0.0, %v579
    %581 = vmatprep.mubr.f32.mxu0 0.0
    %582 = vmatmul.mubr.f32.gmra.mxu0 %v485
    %v583 = vpop.f32.mrf.mxu0
    %v584 = vadd.f32 0.0, %v583
    %v585 = vpop.f32.mrf.mxu0
    %v586 = vadd.f32 0.0, %v585
    %587 = vdwg.mxu0
    %v589 = vsel %vm471, %v446, 0
    %v592 = vsel %vm471, %v453, 0
    %v595 = vsel %vm471, %v460, 0
    %v598 = vsel %vm471, %v467, 0
    %v601 = vsel %vm471, %v470, 0
    %v604 = vsel %vm368, %v238, 0
    %v607 = vsel %vm368, %v239, 0
    %609 = vmatprep.subr.mxu0 0.0
    %610 = vmatpush1.msra.mxu0 0.0
    %611 = vmatprep.subr.mxu0 0.0
    %612 = vmatpush1.msra.mxu0 0.0
    %613 = vmatprep.subr.mxu0 0.0
    %614 = vmatpush1.msra.mxu0 0.0
    %615 = vmatprep.subr.mxu0 0.0
    %616 = vmatpush1.msra.mxu0 0.0
    %617 = vmatprep.subr.mxu0 0.0
    %618 = vmatpush1.msra.mxu0 0.0
    %619 = vmatprep.subr.mxu0 0.0
    %620 = vmatpush1.msra.mxu0 0.0
    %621 = vmatprep.subr.mxu0 0.0
    %622 = vmatpush1.msra.mxu0 0.0
    %623 = vmatprep.subr.mxu0 0.0
    %624 = vmatpush1.msra.mxu0 0.0
    %625 = vmatprep.subr.mxu0 0.0
    %626 = vmatpush1.msra.mxu0 0.0
    %627 = vmatprep.subr.mxu0 0.0
    %628 = vmatpush1.msra.mxu0 0.0
    %629 = vmatprep.subr.mxu0 0.0
    %630 = vmatpush1.msra.mxu0 0.0
    %631 = vmatprep.subr.mxu0 0.0
    %632 = vmatpush1.msra.mxu0 0.0
    %633 = vmatprep.subr.mxu0 0.0
    %634 = vmatpush1.msra.mxu0 0.0
    %635 = vmatprep.subr.mxu0 %v607
    %636 = vmatpush1.msra.mxu0 %v604
    %637 = vmatprep.subr.mxu0 %v237
    %638 = vmatpush1.msra.mxu0 %v236
    %639 = vmatprep.subr.mxu0 %v235
    %640 = vmatpush1.msra.mxu0 %v234
    %641 = vmatprep.subr.mxu0 0.0
    %642 = vmatpush2.msra.mxu0 0.0
    %643 = vmatprep.subr.mxu0 0.0
    %644 = vmatpush2.msra.mxu0 0.0
    %645 = vmatprep.subr.mxu0 0.0
    %646 = vmatpush2.msra.mxu0 0.0
    %647 = vmatprep.subr.mxu0 0.0
    %648 = vmatpush2.msra.mxu0 0.0
    %649 = vmatprep.subr.mxu0 0.0
    %650 = vmatpush2.msra.mxu0 0.0
    %651 = vmatprep.subr.mxu0 0.0
    %652 = vmatpush2.msra.mxu0 0.0
    %653 = vmatprep.subr.mxu0 0.0
    %654 = vmatpush2.msra.mxu0 0.0
    %655 = vmatprep.subr.mxu0 0.0
    %656 = vmatpush2.msra.mxu0 0.0
    %657 = vmatprep.subr.mxu0 0.0
    %658 = vmatpush2.msra.mxu0 0.0
    %659 = vmatprep.subr.mxu0 0.0
    %660 = vmatpush2.msra.mxu0 0.0
    %661 = vmatprep.subr.mxu0 0.0
    %662 = vmatpush2.msra.mxu0 0.0
    %663 = vmatprep.subr.mxu0 0.0
    %664 = vmatpush2.msra.mxu0 0.0
    %665 = vmatprep.subr.mxu0 0.0
    %666 = vmatpush2.msra.mxu0 0.0
    %667 = vmatprep.subr.mxu0 0.0
    %668 = vmatpush2.msra.mxu0 0.0
    %669 = vmatprep.subr.mxu0 0.0
    %670 = vmatpush2.msra.mxu0 0.0
    %671 = vmatprep.subr.mxu0 0.0
    %672 = vmatpush2.msra.mxu0 0.0
    %673 = vmatprep.mubr.f32.mxu0 0.0
    %674 = vmatmul.mubr.f32.gmra.mxu0 %v589
    %v675 = vpop.f32.mrf.mxu0
    %v676 = vadd.f32 0.0, %v675
    %v677 = vpop.f32.mrf.mxu0
    %v678 = vadd.f32 0.0, %v677
    %679 = vmatprep.mubr.f32.mxu0 0.0
    %680 = vmatmul.mubr.f32.gmra.mxu0 %v592
    %v681 = vpop.f32.mrf.mxu0
    %v682 = vadd.f32 0.0, %v681
    %v683 = vpop.f32.mrf.mxu0
    %v684 = vadd.f32 0.0, %v683
    %685 = vmatprep.mubr.f32.mxu0 0.0
    %686 = vmatmul.mubr.f32.gmra.mxu0 %v595
    %v687 = vpop.f32.mrf.mxu0
    %v688 = vadd.f32 0.0, %v687
    %v689 = vpop.f32.mrf.mxu0
    %v690 = vadd.f32 0.0, %v689
    %691 = vmatprep.mubr.f32.mxu0 0.0
    %692 = vmatmul.mubr.f32.gmra.mxu0 %v598
    %v693 = vpop.f32.mrf.mxu0
    %v694 = vadd.f32 0.0, %v693
    %v695 = vpop.f32.mrf.mxu0
    %v696 = vadd.f32 0.0, %v695
    %697 = vmatprep.mubr.f32.mxu0 0.0
    %698 = vmatmul.mubr.f32.gmra.mxu0 %v601
    %v699 = vpop.f32.mrf.mxu0
    %v700 = vadd.f32 0.0, %v699
    %v701 = vpop.f32.mrf.mxu0
    %v702 = vadd.f32 0.0, %v701
    %703 = vdwg.mxu0
    %v704 = vadd.f32 %v560, %v676
    %v705 = vadd.f32 %v566, %v682
    %v706 = vadd.f32 %v572, %v688
    %v707 = vadd.f32 %v578, %v694
    %v708 = vadd.f32 %v584, %v700
    %v711 = vrot.slane %v562, 1
    %v712 = vrot.slane %v568, 1
    %v713 = vsel %vm378, %v711, %v712
    %v715 = vadd.f32 %v704, %v713
    %v717 = vrot.slane %v574, 1
    %v718 = vsel %vm378, %v712, %v717
    %v721 = vadd.f32 %v705, %v718
    %v722 = vadd.f32 %v706, %v717
    %v724 = vrot.slane %v580, 1
    %v725 = vsel %vm378, %v717, %v724
    %v728 = vadd.f32 %v706, %v725
    %v729 = vadd.f32 %v707, %v724
    %v731 = vrot.slane %v586, 1
    %v732 = vsel %vm378, %v724, %v731
    %v735 = vadd.f32 %v707, %v732
    %v736 = vadd.f32 %v708, %v731
    %v739 = vrot.slane %v721, 1
    %v740 = vrot.slane %v722, 1
    %v741 = vsel %vm378, %v739, %v740
    %v745 = vrot.slane %v728, 2
    %v746 = vrot.slane %v729, 2
    %v747 = vsel %vm376, %v745, %v746
    %v751 = vrot.slane %v735, 3
    %v752 = vrot.slane %v736, 3
    %v753 = vsel %vm374, %v751, %v752
    %v757 = vrot.slane %v684, 1
    %v758 = vrot.slane %v690, 1
    %v759 = vsel %vm378, %v757, %v758
    %v762 = vrot.slane %v690, 2
    %v763 = vrot.slane %v696, 2
    %v764 = vsel %vm376, %v762, %v763
    %v767 = vrot.slane %v696, 3
    %v768 = vrot.slane %v702, 3
    %v769 = vsel %vm374, %v767, %v768
    %v771 = vstv %s215
    %v772 = vadd.f32 %v715, %v771
    %v773 = vadd.f32 %v741, %v771
    %v774 = vadd.f32 %v747, %v771
    %v775 = vadd.f32 %v753, %v771
    %v776 = vmax.f32 %v772, 0.0
    %v777 = vmax.f32 %v773, 0.0
    %v778 = vmax.f32 %v774, 0.0
    %v779 = vmax.f32 %v775, 0.0
    %v780 = vstv %s216
    %v781 = vadd.f32 %v776, %v780
    %v782 = vadd.f32 %v777, %v780
    %v783 = vadd.f32 %v778, %v780
    %v784 = vadd.f32 %v779, %v780
    %785 = vmatprep.subr.mxu0 %v286
    %786 = vmatpush1.msra.mxu0 %v285
    %787 = vmatprep.subr.mxu0 %v283
    %788 = vmatpush1.msra.mxu0 %v282
    %789 = vmatprep.subr.mxu0 %v280
    %790 = vmatpush1.msra.mxu0 %v279
    %791 = vmatprep.subr.mxu0 %v277
    %792 = vmatpush1.msra.mxu0 %v276
    %793 = vmatprep.subr.mxu0 %v274
    %794 = vmatpush1.msra.mxu0 %v273
    %795 = vmatprep.subr.mxu0 %v271
    %796 = vmatpush1.msra.mxu0 %v270
    %797 = vmatprep.subr.mxu0 %v268
    %798 = vmatpush1.msra.mxu0 %v267
    %799 = vmatprep.subr.mxu0 %v265
    %800 = vmatpush1.msra.mxu0 %v264
    %801 = vmatprep.subr.mxu0 %v262
    %802 = vmatpush1.msra.mxu0 %v261
    %803 = vmatprep.subr.mxu0 %v259
    %804 = vmatpush1.msra.mxu0 %v258
    %805 = vmatprep.subr.mxu0 %v256
    %806 = vmatpush1.msra.mxu0 %v255
    %807 = vmatprep.subr.mxu0 %v253
    %808 = vmatpush1.msra.mxu0 %v252
    %809 = vmatprep.subr.mxu0 %v250
    %810 = vmatpush1.msra.mxu0 %v249
    %811 = vmatprep.subr.mxu0 %v247
    %812 = vmatpush1.msra.mxu0 %v246
    %813 = vmatprep.subr.mxu0 %v244
    %814 = vmatpush1.msra.mxu0 %v243
    %815 = vmatprep.subr.mxu0 %v241
    %816 = vmatpush1.msra.mxu0 %v240
    %817 = vmatprep.subr.mxu0 0.0
    %818 = vmatpush2.msra.mxu0 0.0
    %819 = vmatprep.subr.mxu0 0.0
    %820 = vmatpush2.msra.mxu0 0.0
    %821 = vmatprep.subr.mxu0 0.0
    %822 = vmatpush2.msra.mxu0 0.0
    %823 = vmatprep.subr.mxu0 0.0
    %824 = vmatpush2.msra.mxu0 0.0
    %825 = vmatprep.subr.mxu0 0.0
    %826 = vmatpush2.msra.mxu0 0.0
    %827 = vmatprep.subr.mxu0 0.0
    %828 = vmatpush2.msra.mxu0 0.0
    %829 = vmatprep.subr.mxu0 0.0
    %830 = vmatpush2.msra.mxu0 0.0
    %831 = vmatprep.subr.mxu0 0.0
    %832 = vmatpush2.msra.mxu0 0.0
    %833 = vmatprep.subr.mxu0 0.0
    %834 = vmatpush2.msra.mxu0 0.0
    %835 = vmatprep.subr.mxu0 0.0
    %836 = vmatpush2.msra.mxu0 0.0
    %837 = vmatprep.subr.mxu0 0.0
    %838 = vmatpush2.msra.mxu0 0.0
    %839 = vmatprep.subr.mxu0 0.0
    %840 = vmatpush2.msra.mxu0 0.0
    %841 = vmatprep.subr.mxu0 0.0
    %842 = vmatpush2.msra.mxu0 0.0
    %843 = vmatprep.subr.mxu0 0.0
    %844 = vmatpush2.msra.mxu0 0.0
    %845 = vmatprep.subr.mxu0 0.0
    %846 = vmatpush2.msra.mxu0 0.0
    %847 = vmatprep.subr.mxu0 0.0
    %848 = vmatpush2.msra.mxu0 0.0
    %849 = vmatprep.mubr.f32.mxu0 0.0
    %850 = vmatmul.mubr.f32.gmra.mxu0 %v781
    %v851 = vpop.f32.mrf.mxu0
    %v852 = vadd.f32 0.0, %v851
    %v853 = vpop.f32.mrf.mxu0
    %v854 = vadd.f32 0.0, %v853
    %855 = vmatprep.mubr.f32.mxu0 0.0
    %856 = vmatmul.mubr.f32.gmra.mxu0 %v782
    %v857 = vpop.f32.mrf.mxu0
    %v858 = vadd.f32 0.0, %v857
    %v859 = vpop.f32.mrf.mxu0
    %v860 = vadd.f32 0.0, %v859
    %861 = vmatprep.mubr.f32.mxu0 0.0
    %862 = vmatmul.mubr.f32.gmra.mxu0 %v783
    %v863 = vpop.f32.mrf.mxu0
    %v864 = vadd.f32 0.0, %v863
    %v865 = vpop.f32.mrf.mxu0
    %v866 = vadd.f32 0.0, %v865
    %867 = vmatprep.mubr.f32.mxu0 0.0
    %868 = vmatmul.mubr.f32.gmra.mxu0 %v784
    %v869 = vpop.f32.mrf.mxu0
    %v870 = vadd.f32 0.0, %v869
    %v871 = vpop.f32.mrf.mxu0
    %v872 = vadd.f32 0.0, %v871
    %873 = vdwg.mxu0
    %874 = vmatprep.subr.mxu0 0.0
    %875 = vmatpush1.msra.mxu0 %v287
    %876 = vmatprep.subr.mxu0 0.0
    %877 = vmatpush1.msra.mxu0 %v284
    %878 = vmatprep.subr.mxu0 0.0
    %879 = vmatpush1.msra.mxu0 %v281
    %880 = vmatprep.subr.mxu0 0.0
    %881 = vmatpush1.msra.mxu0 %v278
    %882 = vmatprep.subr.mxu0 0.0
    %883 = vmatpush1.msra.mxu0 %v275
    %884 = vmatprep.subr.mxu0 0.0
    %885 = vmatpush1.msra.mxu0 %v272
    %886 = vmatprep.subr.mxu0 0.0
    %887 = vmatpush1.msra.mxu0 %v269
    %888 = vmatprep.subr.mxu0 0.0
    %889 = vmatpush1.msra.mxu0 %v266
    %890 = vmatprep.subr.mxu0 0.0
    %891 = vmatpush1.msra.mxu0 %v263
    %892 = vmatprep.subr.mxu0 0.0
    %893 = vmatpush1.msra.mxu0 %v260
    %894 = vmatprep.subr.mxu0 0.0
    %895 = vmatpush1.msra.mxu0 %v257
    %896 = vmatprep.subr.mxu0 0.0
    %897 = vmatpush1.msra.mxu0 %v254
    %898 = vmatprep.subr.mxu0 0.0
    %899 = vmatpush1.msra.mxu0 %v251
    %900 = vmatprep.subr.mxu0 0.0
    %901 = vmatpush1.msra.mxu0 %v248
    %902 = vmatprep.subr.mxu0 0.0
    %903 = vmatpush1.msra.mxu0 %v245
    %904 = vmatprep.subr.mxu0 0.0
    %905 = vmatpush1.msra.mxu0 %v242
    %906 = vmatprep.subr.mxu0 0.0
    %907 = vmatpush2.msra.mxu0 0.0
    %908 = vmatprep.subr.mxu0 0.0
    %909 = vmatpush2.msra.mxu0 0.0
    %910 = vmatprep.subr.mxu0 0.0
    %911 = vmatpush2.msra.mxu0 0.0
    %912 = vmatprep.subr.mxu0 0.0
    %913 = vmatpush2.msra.mxu0 0.0
    %914 = vmatprep.subr.mxu0 0.0
    %915 = vmatpush2.msra.mxu0 0.0
    %916 = vmatprep.subr.mxu0 0.0
    %917 = vmatpush2.msra.mxu0 0.0
    %918 = vmatprep.subr.mxu0 0.0
    %919 = vmatpush2.msra.mxu0 0.0
    %920 = vmatprep.subr.mxu0 0.0
    %921 = vmatpush2.msra.mxu0 0.0
    %922 = vmatprep.subr.mxu0 0.0
    %923 = vmatpush2.msra.mxu0 0.0
    %924 = vmatprep.subr.mxu0 0.0
    %925 = vmatpush2.msra.mxu0 0.0
    %926 = vmatprep.subr.mxu0 0.0
    %927 = vmatpush2.msra.mxu0 0.0
    %928 = vmatprep.subr.mxu0 0.0
    %929 = vmatpush2.msra.mxu0 0.0
    %930 = vmatprep.subr.mxu0 0.0
    %931 = vmatpush2.msra.mxu0 0.0
    %932 = vmatprep.subr.mxu0 0.0
    %933 = vmatpush2.msra.mxu0 0.0
    %934 = vmatprep.subr.mxu0 0.0
    %935 = vmatpush2.msra.mxu0 0.0
    %936 = vmatprep.subr.mxu0 0.0
    %937 = vmatpush2.msra.mxu0 0.0
    %938 = vmatprep.mubr.f32.mxu0 0.0
    %939 = vmatmul.mubr.f32.gmra.mxu0 %v781
    %v940 = vpop.f32.mrf.mxu0
    %v941 = vadd.f32 0.0, %v940
    %v942 = vpop.f32.mrf.mxu0
    %943 = vmatprep.mubr.f32.mxu0 0.0
    %944 = vmatmul.mubr.f32.gmra.mxu0 %v782
    %v945 = vpop.f32.mrf.mxu0
    %v946 = vadd.f32 0.0, %v945
    %v947 = vpop.f32.mrf.mxu0
    %948 = vmatprep.mubr.f32.mxu0 0.0
    %949 = vmatmul.mubr.f32.gmra.mxu0 %v783
    %v950 = vpop.f32.mrf.mxu0
    %v951 = vadd.f32 0.0, %v950
    %v952 = vpop.f32.mrf.mxu0
    %953 = vmatprep.mubr.f32.mxu0 0.0
    %954 = vmatmul.mubr.f32.gmra.mxu0 %v784
    %v955 = vpop.f32.mrf.mxu0
    %v956 = vadd.f32 0.0, %v955
    %v957 = vpop.f32.mrf.mxu0
    %958 = vdwg.mxu0
    %v960 = vrot.slane %v852, 7
    %v962 = vsel %vm366, 0.0, %v960
    %v963 = vadd.f32 %v854, %v962
    %v965 = vrot.slane %v941, 1
    %v967 = vsel %vm378, %v965, 0.0
    %v968 = vadd.f32 %v963, %v967
    %v970 = vrot.slane %v858, 7
    %v972 = vsel %vm366, 0.0, %v970
    %v973 = vadd.f32 %v860, %v972
    %v975 = vrot.slane %v946, 1
    %v977 = vsel %vm378, %v975, 0.0
    %v978 = vadd.f32 %v973, %v977
    %v980 = vrot.slane %v864, 7
    %v982 = vsel %vm366, 0.0, %v980
    %v983 = vadd.f32 %v866, %v982
    %v985 = vrot.slane %v951, 1
    %v987 = vsel %vm378, %v985, 0.0
    %v988 = vadd.f32 %v983, %v987
    %v990 = vrot.slane %v870, 7
    %v992 = vsel %vm366, 0.0, %v990
    %v993 = vadd.f32 %v872, %v992
    %v995 = vrot.slane %v956, 1
    %v997 = vsel %vm378, %v995, 0.0
    %v998 = vadd.f32 %v993, %v997
    %v999 = vstv %s217
    %v1000 = vmul.f32 %v968, %v999
    %v1001 = vmul.f32 %v978, %v999
    %v1002 = vmul.f32 %v988, %v999
    %v1003 = vmul.f32 %v998, %v999
    %v1004 = vstv %s218
    %v1005 = vadd.f32 %v1000, %v1004
    %v1006 = vadd.f32 %v1001, %v1004
    %v1007 = vadd.f32 %v1002, %v1004
    %v1008 = vadd.f32 %v1003, %v1004
    %v1009 = vadd.f32 %v1005, %v678
    %v1010 = vadd.f32 %v1006, %v759
    %v1011 = vadd.f32 %v1007, %v764
    %v1012 = vadd.f32 %v1008, %v769
    %v1013 = vmax.f32 %v1009, 0.0
    %v1014 = vmax.f32 %v1010, 0.0
    %v1015 = vmax.f32 %v1011, 0.0
    %v1016 = vmax.f32 %v1012, 0.0
    %s1017 = sld [smem:[#allocation2 + $0x5]]
    %s1018 = sld [smem:[#allocation2 + $0x6]]
    %s1019 = sld [smem:[#allocation2 + $0x7]]
    %s1020 = sld [smem:[#allocation2 + $0x8]]
    %s1021 = sld [smem:[#allocation2 + $0x9]]
    %v1022 = vstv %s1017
    %v1023 = vadd.f32 %v1013, %v1022
    %v1024 = vadd.f32 %v1014, %v1022
    %v1025 = vadd.f32 %v1015, %v1022
    %v1026 = vadd.f32 %v1016, %v1022
    %v1027 = vld [vmem:[#allocation12] sm:$0xff]
    %v1028 = vld [vmem:[#allocation12 + $0x8] sm:$0xff]
    %v1029 = vld [vmem:[#allocation12 + $0x10] sm:$0xff]
    %v1030 = vld [vmem:[#allocation12 + $0x18] sm:$0xff]
    %v1031 = vld [vmem:[#allocation12 + $0x20] sm:$0xff]
    %v1032 = vld [vmem:[#allocation12 + $0x28] sm:$0xff]
    %v1033 = vld [vmem:[#allocation12 + $0x30] sm:$0xff]
    %v1034 = vld [vmem:[#allocation12 + $0x38] sm:$0xff]
    %v1035 = vld [vmem:[#allocation12 + $0x40] sm:$0xff]
    %v1036 = vld [vmem:[#allocation12 + $0x48] sm:$0xff]
    %v1037 = vld [vmem:[#allocation12 + $0x50] sm:$0xff]
    %v1038 = vld [vmem:[#allocation12 + $0x58] sm:$0xff]
    %v1039 = vld [vmem:[#allocation12 + $0x60] sm:$0xff]
    %v1040 = vld [vmem:[#allocation12 + $0x68] sm:$0xff]
    %v1041 = vld [vmem:[#allocation12 + $0x70] sm:$0xff]
    %v1042 = vld [vmem:[#allocation12 + $0x78] sm:$0xff]
    %v1043 = vld [vmem:[#allocation12 + $0x80] sm:$0xff]
    %v1044 = vld [vmem:[#allocation12 + $0x88] sm:$0xff]
    %v1045 = vld [vmem:[#allocation12 + $0x90] sm:$0xff]
    %v1046 = vld [vmem:[#allocation12 + $0x98] sm:$0xff]
    %v1047 = vld [vmem:[#allocation12 + $0xa0] sm:$0xff]
    %v1048 = vld [vmem:[#allocation12 + $0xa8] sm:$0xff]
    %v1049 = vld [vmem:[#allocation12 + $0xb0] sm:$0xff]
    %v1050 = vld [vmem:[#allocation12 + $0xb8] sm:$0xff]
    %v1051 = vld [vmem:[#allocation12 + $0xc0] sm:$0xff]
    %v1052 = vld [vmem:[#allocation12 + $0xc8] sm:$0xff]
    %v1053 = vld [vmem:[#allocation12 + $0xd0] sm:$0xff]
    %v1054 = vld [vmem:[#allocation12 + $0xd8] sm:$0xff]
    %v1055 = vld [vmem:[#allocation12 + $0xe0] sm:$0xff]
    %v1056 = vld [vmem:[#allocation12 + $0xe8] sm:$0xff]
    %v1057 = vld [vmem:[#allocation12 + $0xf0] sm:$0xff]
    %v1058 = vld [vmem:[#allocation12 + $0xf8] sm:$0xff]
    %v1059 = vld [vmem:[#allocation12 + $0x100] sm:$0xff]
    %v1060 = vld [vmem:[#allocation12 + $0x108] sm:$0xff]
    %v1061 = vld [vmem:[#allocation12 + $0x110] sm:$0xff]
    %v1062 = vld [vmem:[#allocation12 + $0x118] sm:$0xff]
    %v1063 = vld [vmem:[#allocation12 + $0x120] sm:$0xff]
    %v1064 = vld [vmem:[#allocation12 + $0x128] sm:$0xff]
    %v1065 = vld [vmem:[#allocation12 + $0x130] sm:$0xff]
    %v1066 = vld [vmem:[#allocation12 + $0x138] sm:$0xff]
    %v1067 = vld [vmem:[#allocation14] sm:$0xff]
    %v1068 = vld [vmem:[#allocation14 + $0x8] sm:$0xff]
    %v1069 = vld [vmem:[#allocation14 + $0x10] sm:$0xff]
    %v1070 = vld [vmem:[#allocation14 + $0x18] sm:$0xff]
    %v1071 = vld [vmem:[#allocation14 + $0x20] sm:$0xff]
    %v1072 = vld [vmem:[#allocation14 + $0x28] sm:$0xff]
    %v1073 = vld [vmem:[#allocation14 + $0x30] sm:$0xff]
    %v1074 = vld [vmem:[#allocation14 + $0x38] sm:$0xff]
    %v1075 = vld [vmem:[#allocation14 + $0x40] sm:$0xff]
    %v1076 = vld [vmem:[#allocation14 + $0x48] sm:$0xff]
    %v1077 = vld [vmem:[#allocation14 + $0x50] sm:$0xff]
    %v1078 = vld [vmem:[#allocation14 + $0x58] sm:$0xff]
    %v1079 = vld [vmem:[#allocation14 + $0x60] sm:$0xff]
    %v1080 = vld [vmem:[#allocation14 + $0x68] sm:$0xff]
    %v1081 = vld [vmem:[#allocation14 + $0x70] sm:$0xff]
    %v1082 = vld [vmem:[#allocation14 + $0x78] sm:$0xff]
    %v1083 = vld [vmem:[#allocation14 + $0x80] sm:$0xff]
    %v1084 = vld [vmem:[#allocation14 + $0x88] sm:$0xff]
    %v1085 = vld [vmem:[#allocation14 + $0x90] sm:$0xff]
    %v1086 = vld [vmem:[#allocation14 + $0x98] sm:$0xff]
    %v1087 = vld [vmem:[#allocation14 + $0xa0] sm:$0xff]
    %v1088 = vld [vmem:[#allocation14 + $0xa8] sm:$0xff]
    %v1089 = vld [vmem:[#allocation14 + $0xb0] sm:$0xff]
    %v1090 = vld [vmem:[#allocation14 + $0xb8] sm:$0xff]
    %v1091 = vld [vmem:[#allocation14 + $0xc0] sm:$0xff]
    %v1092 = vld [vmem:[#allocation14 + $0xc8] sm:$0xff]
    %v1093 = vld [vmem:[#allocation14 + $0xd0] sm:$0xff]
    %v1094 = vld [vmem:[#allocation14 + $0xd8] sm:$0xff]
    %v1095 = vld [vmem:[#allocation14 + $0xe0] sm:$0xff]
    %v1096 = vld [vmem:[#allocation14 + $0xe8] sm:$0xff]
    %v1097 = vld [vmem:[#allocation14 + $0xf0] sm:$0xff]
    %v1098 = vld [vmem:[#allocation14 + $0xf8] sm:$0xff]
    %v1099 = vld [vmem:[#allocation14 + $0x100] sm:$0xff]
    %v1100 = vld [vmem:[#allocation14 + $0x108] sm:$0xff]
    %v1101 = vld [vmem:[#allocation14 + $0x110] sm:$0xff]
    %v1102 = vld [vmem:[#allocation14 + $0x118] sm:$0xff]
    %v1103 = vld [vmem:[#allocation14 + $0x120] sm:$0xff]
    %v1104 = vld [vmem:[#allocation14 + $0x128] sm:$0xff]
    %v1105 = vld [vmem:[#allocation14 + $0x130] sm:$0xff]
    %v1106 = vld [vmem:[#allocation14 + $0x138] sm:$0xff]
    %v1107 = vld [vmem:[#allocation15] sm:$0xff]
    %v1108 = vld [vmem:[#allocation15 + $0x8] sm:$0xff]
    %v1109 = vld [vmem:[#allocation15 + $0x10] sm:$0xff]
    %v1110 = vld [vmem:[#allocation15 + $0x18] sm:$0xff]
    %v1111 = vld [vmem:[#allocation15 + $0x20] sm:$0xff]
    %v1112 = vld [vmem:[#allocation15 + $0x28] sm:$0xff]
    %v1113 = vld [vmem:[#allocation15 + $0x30] sm:$0xff]
    %v1114 = vld [vmem:[#allocation15 + $0x38] sm:$0xff]
    %v1115 = vld [vmem:[#allocation15 + $0x40] sm:$0xff]
    %v1116 = vld [vmem:[#allocation15 + $0x48] sm:$0xff]
    %v1117 = vld [vmem:[#allocation15 + $0x50] sm:$0xff]
    %v1118 = vld [vmem:[#allocation15 + $0x58] sm:$0xff]
    %v1119 = vld [vmem:[#allocation15 + $0x60] sm:$0xff]
    %v1120 = vld [vmem:[#allocation15 + $0x68] sm:$0xff]
    %v1121 = vld [vmem:[#allocation15 + $0x70] sm:$0xff]
    %v1122 = vld [vmem:[#allocation15 + $0x78] sm:$0xff]
    %v1123 = vld [vmem:[#allocation15 + $0x80] sm:$0xff]
    %v1124 = vld [vmem:[#allocation15 + $0x88] sm:$0xff]
    %v1125 = vld [vmem:[#allocation15 + $0x90] sm:$0xff]
    %v1126 = vld [vmem:[#allocation15 + $0x98] sm:$0xff]
    %v1127 = vld [vmem:[#allocation15 + $0xa0] sm:$0xff]
    %v1128 = vld [vmem:[#allocation15 + $0xa8] sm:$0xff]
    %v1129 = vld [vmem:[#allocation15 + $0xb0] sm:$0xff]
    %v1130 = vld [vmem:[#allocation15 + $0xb8] sm:$0xff]
    %v1131 = vld [vmem:[#allocation15 + $0xc0] sm:$0xff]
    %v1132 = vld [vmem:[#allocation15 + $0xc8] sm:$0xff]
    %v1133 = vld [vmem:[#allocation15 + $0xd0] sm:$0xff]
    %v1134 = vld [vmem:[#allocation15 + $0xd8] sm:$0xff]
    %v1135 = vld [vmem:[#allocation15 + $0xe0] sm:$0xff]
    %v1136 = vld [vmem:[#allocation15 + $0xe8] sm:$0xff]
    %v1137 = vld [vmem:[#allocation15 + $0xf0] sm:$0xff]
    %v1138 = vld [vmem:[#allocation15 + $0xf8] sm:$0xff]
    %v1139 = vld [vmem:[#allocation15 + $0x100] sm:$0xff]
    %v1140 = vld [vmem:[#allocation15 + $0x108] sm:$0xff]
    %v1141 = vld [vmem:[#allocation15 + $0x110] sm:$0xff]
    %v1142 = vld [vmem:[#allocation15 + $0x118] sm:$0xff]
    %v1143 = vld [vmem:[#allocation15 + $0x120] sm:$0xff]
    %v1144 = vld [vmem:[#allocation15 + $0x128] sm:$0xff]
    %v1145 = vld [vmem:[#allocation15 + $0x130] sm:$0xff]
    %v1146 = vld [vmem:[#allocation15 + $0x138] sm:$0xff]
    %v1147 = vld [vmem:[#allocation15 + $0x140] sm:$0xff]
    %v1148 = vld [vmem:[#allocation15 + $0x148] sm:$0xff]
    %v1149 = vld [vmem:[#allocation15 + $0x150] sm:$0xff]
    %v1150 = vld [vmem:[#allocation15 + $0x158] sm:$0xff]
    %v1151 = vld [vmem:[#allocation15 + $0x160] sm:$0xff]
    %v1152 = vld [vmem:[#allocation15 + $0x168] sm:$0xff]
    %v1153 = vld [vmem:[#allocation15 + $0x170] sm:$0xff]
    %v1154 = vld [vmem:[#allocation15 + $0x178] sm:$0xff]
    %1159 = vrot.lane.b32.xlu0 %v1023, 16
    %v1160 = vpop.permute.xlu0 %1159
    %1161 = vrot.lane.b32.xlu0 %v1024, 16
    %v1162 = vpop.permute.xlu0 %1161
    %1163 = vrot.lane.b32.xlu0 %v1025, 16
    %v1164 = vpop.permute.xlu0 %1163
    %1165 = vrot.lane.b32.xlu0 %v1026, 16
    %v1166 = vpop.permute.xlu0 %1165
    %vm1171 = vcmask 130048
    %v1172 = vsel %vm1171, 0.0, %v1160
    %v1173 = vsel %vm1171, 0.0, %v1162
    %v1174 = vsel %vm1171, 0.0, %v1164
    %v1175 = vsel %vm1171, 0.0, %v1166
    %v1176 = vsel %vm1171, %v1160, 0.0
    %v1177 = vsel %vm1171, %v1162, 0.0
    %v1178 = vsel %vm1171, %v1164, 0.0
    %v1179 = vsel %vm1171, %v1166, 0.0
    %v1182 = vrot.slane %v1172, 1
    %v1183 = vrot.slane %v1176, 1
    %v1186 = vrot.slane %v1172, 2
    %v1187 = vrot.slane %v1176, 2
    %v1190 = vrot.slane %v1172, 3
    %v1191 = vrot.slane %v1176, 3
    %v1196 = vrot.slane %v1173, 3
    %v1197 = vrot.slane %v1177, 3
    %v1200 = vrot.slane %v1173, 4
    %v1201 = vrot.slane %v1177, 4
    %v1204 = vrot.slane %v1173, 5
    %v1205 = vrot.slane %v1177, 5
    %v1208 = vrot.slane %v1173, 6
    %v1209 = vrot.slane %v1177, 6
    %v1214 = vrot.slane %v1174, 6
    %v1215 = vrot.slane %v1178, 6
    %v1218 = vrot.slane %v1174, 7
    %v1219 = vrot.slane %v1178, 7
    %v1222 = vrot.slane %v1174, 1
    %v1223 = vrot.slane %v1178, 1
    %v1226 = vsel %vm366, 0.0, %v1172
    %v1227 = vsel %vm366, 0.0, %v1176
    %v1228 = vsel %vm368, %v1226, %v1182
    %v1229 = vsel %vm368, %v1227, %v1183
    %v1230 = vsel %vm370, %v1228, %v1186
    %v1231 = vsel %vm370, %v1229, %v1187
    %v1232 = vsel %vm372, %v1230, %v1190
    %v1233 = vsel %vm372, %v1231, %v1191
    %v1234 = vsel %vm374, %v1232, 0.0
    %v1235 = vsel %vm374, %v1233, 0.0
    %v1236 = vsel %vm376, %v1234, %v1196
    %v1237 = vsel %vm376, %v1235, %v1197
    %v1238 = vsel %vm378, %v1236, %v1200
    %v1239 = vsel %vm378, %v1237, %v1201
    %v1240 = vsel %vm366, %v1204, %v1208
    %v1241 = vsel %vm366, %v1205, %v1209
    %v1242 = vsel %vm368, %v1240, 0.0
    %v1243 = vsel %vm368, %v1241, 0.0
    %v1244 = vsel %vm370, %v1242, %v1214
    %v1245 = vsel %vm370, %v1243, %v1215
    %v1246 = vsel %vm372, %v1244, %v1218
    %v1247 = vsel %vm372, %v1245, %v1219
    %v1248 = vsel %vm374, %v1246, %v1174
    %v1249 = vsel %vm374, %v1247, %v1178
    %v1250 = vsel %vm376, %v1248, %v1222
    %v1251 = vsel %vm376, %v1249, %v1223
    %v1252 = vsel %vm378, %v1250, 0.0
    %v1253 = vsel %vm378, %v1251, 0.0
    %v1256 = vrot.slane %v1175, 1
    %v1257 = vrot.slane %v1179, 1
    %v1260 = vrot.slane %v1175, 2
    %v1261 = vrot.slane %v1179, 2
    %v1264 = vrot.slane %v1175, 3
    %v1265 = vrot.slane %v1179, 3
    %v1268 = vrot.slane %v1175, 4
    %v1269 = vrot.slane %v1179, 4
    %v1272 = vsel %vm366, %v1256, %v1260
    %v1273 = vsel %vm366, %v1257, %v1261
    %v1274 = vsel %vm368, %v1272, %v1264
    %v1275 = vsel %vm368, %v1273, %v1265
    %v1276 = vsel %vm370, %v1274, %v1268
    %v1277 = vsel %vm370, %v1275, %v1269
    %v1278 = vsel %vm366, %v1172, %v1182
    %v1279 = vsel %vm366, %v1176, %v1183
    %v1280 = vsel %vm368, %v1278, %v1186
    %v1281 = vsel %vm368, %v1279, %v1187
    %v1282 = vsel %vm370, %v1280, %v1190
    %v1283 = vsel %vm370, %v1281, %v1191
    %v1284 = vsel %vm372, %v1282, 0.0
    %v1285 = vsel %vm372, %v1283, 0.0
    %v1286 = vsel %vm374, %v1284, %v1196
    %v1287 = vsel %vm374, %v1285, %v1197
    %v1288 = vsel %vm376, %v1286, %v1200
    %v1289 = vsel %vm376, %v1287, %v1201
    %v1290 = vsel %vm378, %v1288, %v1204
    %v1291 = vsel %vm378, %v1289, %v1205
    %v1292 = vsel %vm366, %v1208, 0.0
    %v1293 = vsel %vm366, %v1209, 0.0
    %v1294 = vsel %vm368, %v1292, %v1214
    %v1295 = vsel %vm368, %v1293, %v1215
    %v1296 = vsel %vm370, %v1294, %v1218
    %v1297 = vsel %vm370, %v1295, %v1219
    %v1298 = vsel %vm372, %v1296, %v1174
    %v1299 = vsel %vm372, %v1297, %v1178
    %v1300 = vsel %vm374, %v1298, %v1222
    %v1301 = vsel %vm374, %v1299, %v1223
    %v1302 = vsel %vm376, %v1300, 0.0
    %v1303 = vsel %vm376, %v1301, 0.0
    %v1304 = vsel %vm378, %v1302, %v1256
    %v1305 = vsel %vm378, %v1303, %v1257
    %v1306 = vsel %vm366, %v1260, %v1264
    %v1307 = vsel %vm366, %v1261, %v1265
    %v1308 = vsel %vm368, %v1306, %v1268
    %v1309 = vsel %vm368, %v1307, %v1269
    %v1310 = vsel %vm370, %v1308, 0.0
    %v1311 = vsel %vm370, %v1309, 0.0
    %vm1312 = vcmask 261120
    %v1314 = vsel %vm1312, %v1239, 0
    %v1317 = vsel %vm1312, %v1253, 0
    %v1320 = vsel %vm1312, %v1277, 0
    %1322 = vmatprep.subr.mxu0 %v1058
    %1323 = vmatpush1.msra.mxu0 %v1057
    %1324 = vmatprep.subr.mxu0 %v1056
    %1325 = vmatpush1.msra.mxu0 %v1055
    %1326 = vmatprep.subr.mxu0 %v1054
    %1327 = vmatpush1.msra.mxu0 %v1053
    %1328 = vmatprep.subr.mxu0 %v1052
    %1329 = vmatpush1.msra.mxu0 %v1051
    %1330 = vmatprep.subr.mxu0 %v1050
    %1331 = vmatpush1.msra.mxu0 %v1049
    %1332 = vmatprep.subr.mxu0 %v1048
    %1333 = vmatpush1.msra.mxu0 %v1047
    %1334 = vmatprep.subr.mxu0 %v1046
    %1335 = vmatpush1.msra.mxu0 %v1045
    %1336 = vmatprep.subr.mxu0 %v1044
    %1337 = vmatpush1.msra.mxu0 %v1043
    %1338 = vmatprep.subr.mxu0 %v1042
    %1339 = vmatpush1.msra.mxu0 %v1041
    %1340 = vmatprep.subr.mxu0 %v1040
    %1341 = vmatpush1.msra.mxu0 %v1039
    %1342 = vmatprep.subr.mxu0 %v1038
    %1343 = vmatpush1.msra.mxu0 %v1037
    %1344 = vmatprep.subr.mxu0 %v1036
    %1345 = vmatpush1.msra.mxu0 %v1035
    %1346 = vmatprep.subr.mxu0 %v1034
    %1347 = vmatpush1.msra.mxu0 %v1033
    %1348 = vmatprep.subr.mxu0 %v1032
    %1349 = vmatpush1.msra.mxu0 %v1031
    %1350 = vmatprep.subr.mxu0 %v1030
    %1351 = vmatpush1.msra.mxu0 %v1029
    %1352 = vmatprep.subr.mxu0 %v1028
    %1353 = vmatpush1.msra.mxu0 %v1027
    %1354 = vmatprep.subr.mxu0 0.0
    %1355 = vmatpush2.msra.mxu0 0.0
    %1356 = vmatprep.subr.mxu0 0.0
    %1357 = vmatpush2.msra.mxu0 0.0
    %1358 = vmatprep.subr.mxu0 0.0
    %1359 = vmatpush2.msra.mxu0 0.0
    %1360 = vmatprep.subr.mxu0 0.0
    %1361 = vmatpush2.msra.mxu0 0.0
    %1362 = vmatprep.subr.mxu0 0.0
    %1363 = vmatpush2.msra.mxu0 0.0
    %1364 = vmatprep.subr.mxu0 0.0
    %1365 = vmatpush2.msra.mxu0 0.0
    %1366 = vmatprep.subr.mxu0 0.0
    %1367 = vmatpush2.msra.mxu0 0.0
    %1368 = vmatprep.subr.mxu0 0.0
    %1369 = vmatpush2.msra.mxu0 0.0
    %1370 = vmatprep.subr.mxu0 0.0
    %1371 = vmatpush2.msra.mxu0 0.0
    %1372 = vmatprep.subr.mxu0 0.0
    %1373 = vmatpush2.msra.mxu0 0.0
    %1374 = vmatprep.subr.mxu0 0.0
    %1375 = vmatpush2.msra.mxu0 0.0
    %1376 = vmatprep.subr.mxu0 0.0
    %1377 = vmatpush2.msra.mxu0 0.0
    %1378 = vmatprep.subr.mxu0 %v1066
    %1379 = vmatpush2.msra.mxu0 %v1065
    %1380 = vmatprep.subr.mxu0 %v1064
    %1381 = vmatpush2.msra.mxu0 %v1063
    %1382 = vmatprep.subr.mxu0 %v1062
    %1383 = vmatpush2.msra.mxu0 %v1061
    %1384 = vmatprep.subr.mxu0 %v1060
    %1385 = vmatpush2.msra.mxu0 %v1059
    %1386 = vmatprep.mubr.f32.mxu0 %v1314
    %1387 = vmatmul.mubr.f32.gmra.mxu0 %v1238
    %v1388 = vpop.f32.mrf.mxu0
    %v1389 = vadd.f32 0.0, %v1388
    %v1390 = vpop.f32.mrf.mxu0
    %v1391 = vadd.f32 0.0, %v1390
    %1392 = vmatprep.mubr.f32.mxu0 %v1317
    %1393 = vmatmul.mubr.f32.gmra.mxu0 %v1252
    %v1394 = vpop.f32.mrf.mxu0
    %v1395 = vadd.f32 0.0, %v1394
    %v1396 = vpop.f32.mrf.mxu0
    %v1397 = vadd.f32 0.0, %v1396
    %1398 = vmatprep.mubr.f32.mxu0 %v1320
    %1399 = vmatmul.mubr.f32.gmra.mxu0 %v1276
    %v1400 = vpop.f32.mrf.mxu0
    %v1401 = vadd.f32 0.0, %v1400
    %v1402 = vpop.f32.mrf.mxu0
    %v1403 = vadd.f32 0.0, %v1402
    %1404 = vdwg.mxu0
    %v1406 = vsel %vm1312, %v1291, 0
    %v1409 = vsel %vm1312, %v1305, 0
    %v1412 = vsel %vm1312, %v1311, 0
    %1414 = vmatprep.subr.mxu0 %v1098
    %1415 = vmatpush1.msra.mxu0 %v1097
    %1416 = vmatprep.subr.mxu0 %v1096
    %1417 = vmatpush1.msra.mxu0 %v1095
    %1418 = vmatprep.subr.mxu0 %v1094
    %1419 = vmatpush1.msra.mxu0 %v1093
    %1420 = vmatprep.subr.mxu0 %v1092
    %1421 = vmatpush1.msra.mxu0 %v1091
    %1422 = vmatprep.subr.mxu0 %v1090
    %1423 = vmatpush1.msra.mxu0 %v1089
    %1424 = vmatprep.subr.mxu0 %v1088
    %1425 = vmatpush1.msra.mxu0 %v1087
    %1426 = vmatprep.subr.mxu0 %v1086
    %1427 = vmatpush1.msra.mxu0 %v1085
    %1428 = vmatprep.subr.mxu0 %v1084
    %1429 = vmatpush1.msra.mxu0 %v1083
    %1430 = vmatprep.subr.mxu0 %v1082
    %1431 = vmatpush1.msra.mxu0 %v1081
    %1432 = vmatprep.subr.mxu0 %v1080
    %1433 = vmatpush1.msra.mxu0 %v1079
    %1434 = vmatprep.subr.mxu0 %v1078
    %1435 = vmatpush1.msra.mxu0 %v1077
    %1436 = vmatprep.subr.mxu0 %v1076
    %1437 = vmatpush1.msra.mxu0 %v1075
    %1438 = vmatprep.subr.mxu0 %v1074
    %1439 = vmatpush1.msra.mxu0 %v1073
    %1440 = vmatprep.subr.mxu0 %v1072
    %1441 = vmatpush1.msra.mxu0 %v1071
    %1442 = vmatprep.subr.mxu0 %v1070
    %1443 = vmatpush1.msra.mxu0 %v1069
    %1444 = vmatprep.subr.mxu0 %v1068
    %1445 = vmatpush1.msra.mxu0 %v1067
    %1446 = vmatprep.subr.mxu0 0.0
    %1447 = vmatpush2.msra.mxu0 0.0
    %1448 = vmatprep.subr.mxu0 0.0
    %1449 = vmatpush2.msra.mxu0 0.0
    %1450 = vmatprep.subr.mxu0 0.0
    %1451 = vmatpush2.msra.mxu0 0.0
    %1452 = vmatprep.subr.mxu0 0.0
    %1453 = vmatpush2.msra.mxu0 0.0
    %1454 = vmatprep.subr.mxu0 0.0
    %1455 = vmatpush2.msra.mxu0 0.0
    %1456 = vmatprep.subr.mxu0 0.0
    %1457 = vmatpush2.msra.mxu0 0.0
    %1458 = vmatprep.subr.mxu0 0.0
    %1459 = vmatpush2.msra.mxu0 0.0
    %1460 = vmatprep.subr.mxu0 0.0
    %1461 = vmatpush2.msra.mxu0 0.0
    %1462 = vmatprep.subr.mxu0 0.0
    %1463 = vmatpush2.msra.mxu0 0.0
    %1464 = vmatprep.subr.mxu0 0.0
    %1465 = vmatpush2.msra.mxu0 0.0
    %1466 = vmatprep.subr.mxu0 0.0
    %1467 = vmatpush2.msra.mxu0 0.0
    %1468 = vmatprep.subr.mxu0 0.0
    %1469 = vmatpush2.msra.mxu0 0.0
    %1470 = vmatprep.subr.mxu0 %v1106
    %1471 = vmatpush2.msra.mxu0 %v1105
    %1472 = vmatprep.subr.mxu0 %v1104
    %1473 = vmatpush2.msra.mxu0 %v1103
    %1474 = vmatprep.subr.mxu0 %v1102
    %1475 = vmatpush2.msra.mxu0 %v1101
    %1476 = vmatprep.subr.mxu0 %v1100
    %1477 = vmatpush2.msra.mxu0 %v1099
    %1478 = vmatprep.mubr.f32.mxu0 %v1406
    %1479 = vmatmul.mubr.f32.gmra.mxu0 %v1290
    %v1480 = vpop.f32.mrf.mxu0
    %v1481 = vadd.f32 0.0, %v1480
    %v1482 = vpop.f32.mrf.mxu0
    %v1483 = vadd.f32 0.0, %v1482
    %1484 = vmatprep.mubr.f32.mxu0 %v1409
    %1485 = vmatmul.mubr.f32.gmra.mxu0 %v1304
    %v1486 = vpop.f32.mrf.mxu0
    %v1487 = vadd.f32 0.0, %v1486
    %v1488 = vpop.f32.mrf.mxu0
    %v1489 = vadd.f32 0.0, %v1488
    %1490 = vmatprep.mubr.f32.mxu0 %v1412
    %1491 = vmatmul.mubr.f32.gmra.mxu0 %v1310
    %v1492 = vpop.f32.mrf.mxu0
    %v1493 = vadd.f32 0.0, %v1492
    %v1494 = vpop.f32.mrf.mxu0
    %v1495 = vadd.f32 0.0, %v1494
    %1496 = vdwg.mxu0
    %v1497 = vadd.f32 %v1389, %v1481
    %v1498 = vadd.f32 %v1395, %v1487
    %v1499 = vadd.f32 %v1401, %v1493
    %v1501 = vrot.slane %v1391, 1
    %v1503 = vadd.f32 %v1497, %v1501
    %v1505 = vrot.slane %v1397, 1
    %v1506 = vsel %vm378, %v1501, %v1505
    %v1509 = vadd.f32 %v1497, %v1506
    %v1510 = vadd.f32 %v1498, %v1505
    %v1512 = vrot.slane %v1403, 1
    %v1514 = vadd.f32 %v1498, %v1512
    %v1515 = vadd.f32 %v1499, %v1512
    %v1518 = vrot.slane %v1509, 1
    %v1519 = vrot.slane %v1510, 1
    %v1520 = vsel %vm378, %v1518, %v1519
    %v1522 = vrot.slane %v1510, 2
    %v1526 = vrot.slane %v1514, 3
    %v1527 = vrot.slane %v1515, 3
    %v1528 = vsel %vm374, %v1526, %v1527
    %v1530 = vsel %vm372, %v1503, %v1520
    %v1531 = vsel %vm372, %v1522, %v1528
    %v1534 = vrot.slane %v1483, 1
    %v1535 = vrot.slane %v1489, 1
    %v1536 = vsel %vm378, %v1534, %v1535
    %v1538 = vrot.slane %v1489, 2
    %v1541 = vrot.slane %v1489, 3
    %v1542 = vrot.slane %v1495, 3
    %v1543 = vsel %vm374, %v1541, %v1542
    %v1545 = vsel %vm372, %v1483, %v1536
    %v1546 = vsel %vm372, %v1538, %v1543
    %v1547 = vstv %s1018
    %v1548 = vadd.f32 %v1530, %v1547
    %v1549 = vadd.f32 %v1531, %v1547
    %v1550 = vmax.f32 %v1548, 0.0
    %v1551 = vmax.f32 %v1549, 0.0
    %v1552 = vstv %s1019
    %v1553 = vadd.f32 %v1550, %v1552
    %v1554 = vadd.f32 %v1551, %v1552
    %1555 = vmatprep.subr.mxu0 %v1153
    %1556 = vmatpush1.msra.mxu0 %v1152
    %1557 = vmatprep.subr.mxu0 %v1150
    %1558 = vmatpush1.msra.mxu0 %v1149
    %1559 = vmatprep.subr.mxu0 %v1147
    %1560 = vmatpush1.msra.mxu0 %v1146
    %1561 = vmatprep.subr.mxu0 %v1144
    %1562 = vmatpush1.msra.mxu0 %v1143
    %1563 = vmatprep.subr.mxu0 %v1141
    %1564 = vmatpush1.msra.mxu0 %v1140
    %1565 = vmatprep.subr.mxu0 %v1138
    %1566 = vmatpush1.msra.mxu0 %v1137
    %1567 = vmatprep.subr.mxu0 %v1135
    %1568 = vmatpush1.msra.mxu0 %v1134
    %1569 = vmatprep.subr.mxu0 %v1132
    %1570 = vmatpush1.msra.mxu0 %v1131
    %1571 = vmatprep.subr.mxu0 %v1129
    %1572 = vmatpush1.msra.mxu0 %v1128
    %1573 = vmatprep.subr.mxu0 %v1126
    %1574 = vmatpush1.msra.mxu0 %v1125
    %1575 = vmatprep.subr.mxu0 %v1123
    %1576 = vmatpush1.msra.mxu0 %v1122
    %1577 = vmatprep.subr.mxu0 %v1120
    %1578 = vmatpush1.msra.mxu0 %v1119
    %1579 = vmatprep.subr.mxu0 %v1117
    %1580 = vmatpush1.msra.mxu0 %v1116
    %1581 = vmatprep.subr.mxu0 %v1114
    %1582 = vmatpush1.msra.mxu0 %v1113
    %1583 = vmatprep.subr.mxu0 %v1111
    %1584 = vmatpush1.msra.mxu0 %v1110
    %1585 = vmatprep.subr.mxu0 %v1108
    %1586 = vmatpush1.msra.mxu0 %v1107
    %1587 = vmatprep.subr.mxu0 0.0
    %1588 = vmatpush2.msra.mxu0 0.0
    %1589 = vmatprep.subr.mxu0 0.0
    %1590 = vmatpush2.msra.mxu0 0.0
    %1591 = vmatprep.subr.mxu0 0.0
    %1592 = vmatpush2.msra.mxu0 0.0
    %1593 = vmatprep.subr.mxu0 0.0
    %1594 = vmatpush2.msra.mxu0 0.0
    %1595 = vmatprep.subr.mxu0 0.0
    %1596 = vmatpush2.msra.mxu0 0.0
    %1597 = vmatprep.subr.mxu0 0.0
    %1598 = vmatpush2.msra.mxu0 0.0
    %1599 = vmatprep.subr.mxu0 0.0
    %1600 = vmatpush2.msra.mxu0 0.0
    %1601 = vmatprep.subr.mxu0 0.0
    %1602 = vmatpush2.msra.mxu0 0.0
    %1603 = vmatprep.subr.mxu0 0.0
    %1604 = vmatpush2.msra.mxu0 0.0
    %1605 = vmatprep.subr.mxu0 0.0
    %1606 = vmatpush2.msra.mxu0 0.0
    %1607 = vmatprep.subr.mxu0 0.0
    %1608 = vmatpush2.msra.mxu0 0.0
    %1609 = vmatprep.subr.mxu0 0.0
    %1610 = vmatpush2.msra.mxu0 0.0
    %1611 = vmatprep.subr.mxu0 0.0
    %1612 = vmatpush2.msra.mxu0 0.0
    %1613 = vmatprep.subr.mxu0 0.0
    %1614 = vmatpush2.msra.mxu0 0.0
    %1615 = vmatprep.subr.mxu0 0.0
    %1616 = vmatpush2.msra.mxu0 0.0
    %1617 = vmatprep.subr.mxu0 0.0
    %1618 = vmatpush2.msra.mxu0 0.0
    %1619 = vmatprep.mubr.f32.mxu0 0.0
    %1620 = vmatmul.mubr.f32.gmra.mxu0 %v1553
    %v1621 = vpop.f32.mrf.mxu0
    %v1622 = vadd.f32 0.0, %v1621
    %v1623 = vpop.f32.mrf.mxu0
    %v1624 = vadd.f32 0.0, %v1623
    %1625 = vmatprep.mubr.f32.mxu0 0.0
    %1626 = vmatmul.mubr.f32.gmra.mxu0 %v1554
    %v1627 = vpop.f32.mrf.mxu0
    %v1628 = vadd.f32 0.0, %v1627
    %v1629 = vpop.f32.mrf.mxu0
    %v1630 = vadd.f32 0.0, %v1629
    %1631 = vdwg.mxu0
    %1632 = vmatprep.subr.mxu0 0.0
    %1633 = vmatpush1.msra.mxu0 %v1154
    %1634 = vmatprep.subr.mxu0 0.0
    %1635 = vmatpush1.msra.mxu0 %v1151
    %1636 = vmatprep.subr.mxu0 0.0
    %1637 = vmatpush1.msra.mxu0 %v1148
    %1638 = vmatprep.subr.mxu0 0.0
    %1639 = vmatpush1.msra.mxu0 %v1145
    %1640 = vmatprep.subr.mxu0 0.0
    %1641 = vmatpush1.msra.mxu0 %v1142
    %1642 = vmatprep.subr.mxu0 0.0
    %1643 = vmatpush1.msra.mxu0 %v1139
    %1644 = vmatprep.subr.mxu0 0.0
    %1645 = vmatpush1.msra.mxu0 %v1136
    %1646 = vmatprep.subr.mxu0 0.0
    %1647 = vmatpush1.msra.mxu0 %v1133
    %1648 = vmatprep.subr.mxu0 0.0
    %1649 = vmatpush1.msra.mxu0 %v1130
    %1650 = vmatprep.subr.mxu0 0.0
    %1651 = vmatpush1.msra.mxu0 %v1127
    %1652 = vmatprep.subr.mxu0 0.0
    %1653 = vmatpush1.msra.mxu0 %v1124
    %1654 = vmatprep.subr.mxu0 0.0
    %1655 = vmatpush1.msra.mxu0 %v1121
    %1656 = vmatprep.subr.mxu0 0.0
    %1657 = vmatpush1.msra.mxu0 %v1118
    %1658 = vmatprep.subr.mxu0 0.0
    %1659 = vmatpush1.msra.mxu0 %v1115
    %1660 = vmatprep.subr.mxu0 0.0
    %1661 = vmatpush1.msra.mxu0 %v1112
    %1662 = vmatprep.subr.mxu0 0.0
    %1663 = vmatpush1.msra.mxu0 %v1109
    %1664 = vmatprep.subr.mxu0 0.0
    %1665 = vmatpush2.msra.mxu0 0.0
    %1666 = vmatprep.subr.mxu0 0.0
    %1667 = vmatpush2.msra.mxu0 0.0
    %1668 = vmatprep.subr.mxu0 0.0
    %1669 = vmatpush2.msra.mxu0 0.0
    %1670 = vmatprep.subr.mxu0 0.0
    %1671 = vmatpush2.msra.mxu0 0.0
    %1672 = vmatprep.subr.mxu0 0.0
    %1673 = vmatpush2.msra.mxu0 0.0
    %1674 = vmatprep.subr.mxu0 0.0
    %1675 = vmatpush2.msra.mxu0 0.0
    %1676 = vmatprep.subr.mxu0 0.0
    %1677 = vmatpush2.msra.mxu0 0.0
    %1678 = vmatprep.subr.mxu0 0.0
    %1679 = vmatpush2.msra.mxu0 0.0
    %1680 = vmatprep.subr.mxu0 0.0
    %1681 = vmatpush2.msra.mxu0 0.0
    %1682 = vmatprep.subr.mxu0 0.0
    %1683 = vmatpush2.msra.mxu0 0.0
    %1684 = vmatprep.subr.mxu0 0.0
    %1685 = vmatpush2.msra.mxu0 0.0
    %1686 = vmatprep.subr.mxu0 0.0
    %1687 = vmatpush2.msra.mxu0 0.0
    %1688 = vmatprep.subr.mxu0 0.0
    %1689 = vmatpush2.msra.mxu0 0.0
    %1690 = vmatprep.subr.mxu0 0.0
    %1691 = vmatpush2.msra.mxu0 0.0
    %1692 = vmatprep.subr.mxu0 0.0
    %1693 = vmatpush2.msra.mxu0 0.0
    %1694 = vmatprep.subr.mxu0 0.0
    %1695 = vmatpush2.msra.mxu0 0.0
    %1696 = vmatprep.mubr.f32.mxu0 0.0
    %1697 = vmatmul.mubr.f32.gmra.mxu0 %v1553
    %v1698 = vpop.f32.mrf.mxu0
    %v1699 = vadd.f32 0.0, %v1698
    %v1700 = vpop.f32.mrf.mxu0
    %1701 = vmatprep.mubr.f32.mxu0 0.0
    %1702 = vmatmul.mubr.f32.gmra.mxu0 %v1554
    %v1703 = vpop.f32.mrf.mxu0
    %v1704 = vadd.f32 0.0, %v1703
    %v1705 = vpop.f32.mrf.mxu0
    %1706 = vdwg.mxu0
    %v1708 = vrot.slane %v1622, 7
    %v1710 = vsel %vm366, 0.0, %v1708
    %v1711 = vadd.f32 %v1624, %v1710
    %v1713 = vrot.slane %v1699, 1
    %v1715 = vsel %vm370, %v1713, 0.0
    %v1716 = vadd.f32 %v1711, %v1715
    %v1717 = vrot.slane %v1622, 3
    %v1719 = vsel %vm366, 0.0, %v1717
    %v1721 = vrot.slane %v1719, 4
    %v1723 = vadd.f32 %v1624, %v1721
    %v1724 = vrot.slane %v1699, 5
    %v1726 = vsel %vm370, %v1724, 0.0
    %v1728 = vrot.slane %v1726, 4
    %v1730 = vadd.f32 %v1723, %v1728
    %v1732 = vrot.slane %v1628, 7
    %v1734 = vsel %vm366, 0.0, %v1732
    %v1735 = vadd.f32 %v1630, %v1734
    %v1737 = vrot.slane %v1704, 1
    %v1739 = vsel %vm370, %v1737, 0.0
    %v1740 = vadd.f32 %v1735, %v1739
    %v1741 = vrot.slane %v1628, 3
    %v1743 = vsel %vm366, 0.0, %v1741
    %v1745 = vrot.slane %v1743, 4
    %v1747 = vadd.f32 %v1630, %v1745
    %v1748 = vrot.slane %v1704, 5
    %v1750 = vsel %vm370, %v1748, 0.0
    %v1752 = vrot.slane %v1750, 4
    %v1754 = vadd.f32 %v1747, %v1752
    %v1755 = vsel %vm372, %v1716, %v1730
    %v1756 = vsel %vm372, %v1740, %v1754
    %v1757 = vstv %s1020
    %v1758 = vmul.f32 %v1755, %v1757
    %v1759 = vmul.f32 %v1756, %v1757
    %v1760 = vstv %s1021
    %v1761 = vadd.f32 %v1758, %v1760
    %v1762 = vadd.f32 %v1759, %v1760
    %v1763 = vadd.f32 %v1761, %v1545
    %v1764 = vadd.f32 %v1762, %v1546
    %v1765 = vmax.f32 %v1763, 0.0
    %v1766 = vmax.f32 %v1764, 0.0
    %s1767 = sld [smem:[#allocation2 + $0xa]]
    %s1768 = sld [smem:[#allocation2 + $0xb]]
    %s1769 = sld [smem:[#allocation2 + $0xc]]
    %s1770 = sld [smem:[#allocation2 + $0xd]]
    %s1771 = sld [smem:[#allocation2 + $0xe]]
    %v1772 = vstv %s1767
    %v1773 = vadd.f32 %v1765, %v1772
    %v1774 = vadd.f32 %v1766, %v1772
    %v1775 = vld [vmem:[#allocation17] sm:$0xff]
    %v1776 = vld [vmem:[#allocation17 + $0x8] sm:$0xff]
    %v1777 = vld [vmem:[#allocation17 + $0x10] sm:$0xff]
    %v1778 = vld [vmem:[#allocation17 + $0x18] sm:$0xff]
    %v1779 = vld [vmem:[#allocation17 + $0x20] sm:$0xff]
    %v1780 = vld [vmem:[#allocation17 + $0x28] sm:$0xff]
    %v1781 = vld [vmem:[#allocation17 + $0x30] sm:$0xff]
    %v1782 = vld [vmem:[#allocation17 + $0x38] sm:$0xff]
    %v1783 = vld [vmem:[#allocation17 + $0x40] sm:$0xff]
    %v1784 = vld [vmem:[#allocation17 + $0x48] sm:$0xff]
    %v1785 = vld [vmem:[#allocation17 + $0x50] sm:$0xff]
    %v1786 = vld [vmem:[#allocation17 + $0x58] sm:$0xff]
    %v1787 = vld [vmem:[#allocation17 + $0x60] sm:$0xff]
    %v1788 = vld [vmem:[#allocation17 + $0x68] sm:$0xff]
    %v1789 = vld [vmem:[#allocation17 + $0x70] sm:$0xff]
    %v1790 = vld [vmem:[#allocation17 + $0x78] sm:$0xff]
    %v1791 = vld [vmem:[#allocation17 + $0x80] sm:$0xff]
    %v1792 = vld [vmem:[#allocation17 + $0x88] sm:$0xff]
    %v1793 = vld [vmem:[#allocation17 + $0x90] sm:$0xff]
    %v1794 = vld [vmem:[#allocation17 + $0x98] sm:$0xff]
    %v1795 = vld [vmem:[#allocation17 + $0xa0] sm:$0xff]
    %v1796 = vld [vmem:[#allocation17 + $0xa8] sm:$0xff]
    %v1797 = vld [vmem:[#allocation17 + $0xb0] sm:$0xff]
    %v1798 = vld [vmem:[#allocation17 + $0xb8] sm:$0xff]
    %v1799 = vld [vmem:[#allocation18] sm:$0xff]
    %v1800 = vld [vmem:[#allocation18 + $0x8] sm:$0xff]
    %v1801 = vld [vmem:[#allocation18 + $0x10] sm:$0xff]
    %v1802 = vld [vmem:[#allocation18 + $0x18] sm:$0xff]
    %v1803 = vld [vmem:[#allocation18 + $0x20] sm:$0xff]
    %v1804 = vld [vmem:[#allocation18 + $0x28] sm:$0xff]
    %v1805 = vld [vmem:[#allocation18 + $0x30] sm:$0xff]
    %v1806 = vld [vmem:[#allocation18 + $0x38] sm:$0xff]
    %v1807 = vld [vmem:[#allocation18 + $0x40] sm:$0xff]
    %v1808 = vld [vmem:[#allocation18 + $0x48] sm:$0xff]
    %v1809 = vld [vmem:[#allocation18 + $0x50] sm:$0xff]
    %v1810 = vld [vmem:[#allocation18 + $0x58] sm:$0xff]
    %v1811 = vld [vmem:[#allocation18 + $0x60] sm:$0xff]
    %v1812 = vld [vmem:[#allocation18 + $0x68] sm:$0xff]
    %v1813 = vld [vmem:[#allocation18 + $0x70] sm:$0xff]
    %v1814 = vld [vmem:[#allocation18 + $0x78] sm:$0xff]
    %v1815 = vld [vmem:[#allocation18 + $0x80] sm:$0xff]
    %v1816 = vld [vmem:[#allocation18 + $0x88] sm:$0xff]
    %v1817 = vld [vmem:[#allocation18 + $0x90] sm:$0xff]
    %v1818 = vld [vmem:[#allocation18 + $0x98] sm:$0xff]
    %v1819 = vld [vmem:[#allocation18 + $0xa0] sm:$0xff]
    %v1820 = vld [vmem:[#allocation18 + $0xa8] sm:$0xff]
    %v1821 = vld [vmem:[#allocation18 + $0xb0] sm:$0xff]
    %v1822 = vld [vmem:[#allocation18 + $0xb8] sm:$0xff]
    %v1823 = vld [vmem:[#allocation20] sm:$0xff]
    %v1824 = vld [vmem:[#allocation20 + $0x8] sm:$0xff]
    %v1825 = vld [vmem:[#allocation20 + $0x10] sm:$0xff]
    %v1826 = vld [vmem:[#allocation20 + $0x18] sm:$0xff]
    %v1827 = vld [vmem:[#allocation20 + $0x20] sm:$0xff]
    %v1828 = vld [vmem:[#allocation20 + $0x28] sm:$0xff]
    %v1829 = vld [vmem:[#allocation20 + $0x30] sm:$0xff]
    %v1830 = vld [vmem:[#allocation20 + $0x38] sm:$0xff]
    %v1831 = vld [vmem:[#allocation20 + $0x40] sm:$0xff]
    %v1832 = vld [vmem:[#allocation20 + $0x48] sm:$0xff]
    %v1833 = vld [vmem:[#allocation20 + $0x50] sm:$0xff]
    %v1834 = vld [vmem:[#allocation20 + $0x58] sm:$0xff]
    %v1835 = vld [vmem:[#allocation20 + $0x60] sm:$0xff]
    %v1836 = vld [vmem:[#allocation20 + $0x68] sm:$0xff]
    %v1837 = vld [vmem:[#allocation20 + $0x70] sm:$0xff]
    %v1838 = vld [vmem:[#allocation20 + $0x78] sm:$0xff]
    %1841 = vrot.lane.b32.xlu0 %v1773, 32
    %v1842 = vpop.permute.xlu0 %1841
    %1843 = vrot.lane.b32.xlu0 %v1774, 32
    %v1844 = vpop.permute.xlu0 %1843
    %v1847 = vsel %vm1312, 0.0, %v1842
    %v1848 = vsel %vm1312, 0.0, %v1844
    %v1849 = vsel %vm1312, %v1842, 0.0
    %v1850 = vsel %vm1312, %v1844, 0.0
    %v1853 = vrot.slane %v1847, 1
    %v1854 = vrot.slane %v1849, 1
    %v1857 = vrot.slane %v1847, 2
    %v1858 = vrot.slane %v1849, 2
    %v1863 = vrot.slane %v1848, 2
    %v1864 = vrot.slane %v1850, 2
    %v1867 = vrot.slane %v1848, 3
    %v1868 = vrot.slane %v1850, 3
    %v1871 = vrot.slane %v1848, 4
    %v1872 = vrot.slane %v1850, 4
    %v1875 = vsel %vm366, 0.0, %v1847
    %v1876 = vsel %vm366, 0.0, %v1849
    %v1877 = vsel %vm368, %v1875, %v1853
    %v1878 = vsel %vm368, %v1876, %v1854
    %v1879 = vsel %vm370, %v1877, 0.0
    %v1880 = vsel %vm370, %v1878, 0.0
    %v1881 = vsel %vm372, %v1879, %v1853
    %v1882 = vsel %vm372, %v1880, %v1854
    %v1883 = vsel %vm374, %v1881, %v1857
    %v1884 = vsel %vm374, %v1882, %v1858
    %v1885 = vsel %vm376, %v1883, 0.0
    %v1886 = vsel %vm376, %v1884, 0.0
    %v1887 = vsel %vm378, %v1885, %v1863
    %v1888 = vsel %vm378, %v1886, %v1864
    %v1889 = vsel %vm366, %v1867, 0.0
    %v1890 = vsel %vm366, %v1868, 0.0
    %v1891 = vsel %vm368, %v1889, %v1867
    %v1892 = vsel %vm368, %v1890, %v1868
    %v1893 = vsel %vm370, %v1891, %v1871
    %v1894 = vsel %vm370, %v1892, %v1872
    %v1895 = vsel %vm366, %v1847, %v1853
    %v1896 = vsel %vm366, %v1849, %v1854
    %v1897 = vsel %vm368, %v1895, 0.0
    %v1898 = vsel %vm368, %v1896, 0.0
    %v1899 = vsel %vm370, %v1897, %v1853
    %v1900 = vsel %vm370, %v1898, %v1854
    %v1901 = vsel %vm372, %v1899, %v1857
    %v1902 = vsel %vm372, %v1900, %v1858
    %v1903 = vsel %vm374, %v1901, 0.0
    %v1904 = vsel %vm374, %v1902, 0.0
    %v1905 = vsel %vm376, %v1903, %v1863
    %v1906 = vsel %vm376, %v1904, %v1864
    %v1907 = vsel %vm378, %v1905, %v1867
    %v1908 = vsel %vm378, %v1906, %v1868
    %v1909 = vsel %vm366, 0.0, %v1867
    %v1910 = vsel %vm366, 0.0, %v1868
    %v1911 = vsel %vm368, %v1909, %v1871
    %v1912 = vsel %vm368, %v1910, %v1872
    %v1913 = vsel %vm370, %v1911, 0.0
    %v1914 = vsel %vm370, %v1912, 0.0
    %vm1915 = vcmask 523264
    %v1917 = vsel %vm1915, %v1888, 0
    %v1920 = vsel %vm1915, %v1894, 0
    %1922 = vmatprep.subr.mxu0 0.0
    %1923 = vmatpush1.msra.mxu0 %v1790
    %1924 = vmatprep.subr.mxu0 0.0
    %1925 = vmatpush1.msra.mxu0 %v1789
    %1926 = vmatprep.subr.mxu0 0.0
    %1927 = vmatpush1.msra.mxu0 %v1788
    %1928 = vmatprep.subr.mxu0 0.0
    %1929 = vmatpush1.msra.mxu0 %v1787
    %1930 = vmatprep.subr.mxu0 0.0
    %1931 = vmatpush1.msra.mxu0 %v1786
    %1932 = vmatprep.subr.mxu0 0.0
    %1933 = vmatpush1.msra.mxu0 %v1785
    %1934 = vmatprep.subr.mxu0 0.0
    %1935 = vmatpush1.msra.mxu0 %v1784
    %1936 = vmatprep.subr.mxu0 0.0
    %1937 = vmatpush1.msra.mxu0 %v1783
    %1938 = vmatprep.subr.mxu0 0.0
    %1939 = vmatpush1.msra.mxu0 %v1782
    %1940 = vmatprep.subr.mxu0 0.0
    %1941 = vmatpush1.msra.mxu0 %v1781
    %1942 = vmatprep.subr.mxu0 0.0
    %1943 = vmatpush1.msra.mxu0 %v1780
    %1944 = vmatprep.subr.mxu0 0.0
    %1945 = vmatpush1.msra.mxu0 %v1779
    %1946 = vmatprep.subr.mxu0 0.0
    %1947 = vmatpush1.msra.mxu0 %v1778
    %1948 = vmatprep.subr.mxu0 0.0
    %1949 = vmatpush1.msra.mxu0 %v1777
    %1950 = vmatprep.subr.mxu0 0.0
    %1951 = vmatpush1.msra.mxu0 %v1776
    %1952 = vmatprep.subr.mxu0 0.0
    %1953 = vmatpush1.msra.mxu0 %v1775
    %1954 = vmatprep.subr.mxu0 0.0
    %1955 = vmatpush2.msra.mxu0 0.0
    %1956 = vmatprep.subr.mxu0 0.0
    %1957 = vmatpush2.msra.mxu0 0.0
    %1958 = vmatprep.subr.mxu0 0.0
    %1959 = vmatpush2.msra.mxu0 0.0
    %1960 = vmatprep.subr.mxu0 0.0
    %1961 = vmatpush2.msra.mxu0 0.0
    %1962 = vmatprep.subr.mxu0 0.0
    %1963 = vmatpush2.msra.mxu0 0.0
    %1964 = vmatprep.subr.mxu0 0.0
    %1965 = vmatpush2.msra.mxu0 0.0
    %1966 = vmatprep.subr.mxu0 0.0
    %1967 = vmatpush2.msra.mxu0 0.0
    %1968 = vmatprep.subr.mxu0 0.0
    %1969 = vmatpush2.msra.mxu0 0.0
    %1970 = vmatprep.subr.mxu0 0.0
    %1971 = vmatpush2.msra.mxu0 %v1798
    %1972 = vmatprep.subr.mxu0 0.0
    %1973 = vmatpush2.msra.mxu0 %v1797
    %1974 = vmatprep.subr.mxu0 0.0
    %1975 = vmatpush2.msra.mxu0 %v1796
    %1976 = vmatprep.subr.mxu0 0.0
    %1977 = vmatpush2.msra.mxu0 %v1795
    %1978 = vmatprep.subr.mxu0 0.0
    %1979 = vmatpush2.msra.mxu0 %v1794
    %1980 = vmatprep.subr.mxu0 0.0
    %1981 = vmatpush2.msra.mxu0 %v1793
    %1982 = vmatprep.subr.mxu0 0.0
    %1983 = vmatpush2.msra.mxu0 %v1792
    %1984 = vmatprep.subr.mxu0 0.0
    %1985 = vmatpush2.msra.mxu0 %v1791
    %1986 = vmatprep.mubr.f32.mxu0 %v1917
    %1987 = vmatmul.mubr.f32.gmra.mxu0 %v1887
    %v1988 = vpop.f32.mrf.mxu0
    %v1989 = vadd.f32 0.0, %v1988
    %v1990 = vpop.f32.mrf.mxu0
    %1991 = vmatprep.mubr.f32.mxu0 %v1920
    %1992 = vmatmul.mubr.f32.gmra.mxu0 %v1893
    %v1993 = vpop.f32.mrf.mxu0
    %v1994 = vadd.f32 0.0, %v1993
    %v1995 = vpop.f32.mrf.mxu0
    %1996 = vdwg.mxu0
    %v1998 = vsel %vm1915, %v1908, 0
    %v2001 = vsel %vm1915, %v1914, 0
    %2003 = vmatprep.subr.mxu0 0.0
    %2004 = vmatpush1.msra.mxu0 %v1814
    %2005 = vmatprep.subr.mxu0 0.0
    %2006 = vmatpush1.msra.mxu0 %v1813
    %2007 = vmatprep.subr.mxu0 0.0
    %2008 = vmatpush1.msra.mxu0 %v1812
    %2009 = vmatprep.subr.mxu0 0.0
    %2010 = vmatpush1.msra.mxu0 %v1811
    %2011 = vmatprep.subr.mxu0 0.0
    %2012 = vmatpush1.msra.mxu0 %v1810
    %2013 = vmatprep.subr.mxu0 0.0
    %2014 = vmatpush1.msra.mxu0 %v1809
    %2015 = vmatprep.subr.mxu0 0.0
    %2016 = vmatpush1.msra.mxu0 %v1808
    %2017 = vmatprep.subr.mxu0 0.0
    %2018 = vmatpush1.msra.mxu0 %v1807
    %2019 = vmatprep.subr.mxu0 0.0
    %2020 = vmatpush1.msra.mxu0 %v1806
    %2021 = vmatprep.subr.mxu0 0.0
    %2022 = vmatpush1.msra.mxu0 %v1805
    %2023 = vmatprep.subr.mxu0 0.0
    %2024 = vmatpush1.msra.mxu0 %v1804
    %2025 = vmatprep.subr.mxu0 0.0
    %2026 = vmatpush1.msra.mxu0 %v1803
    %2027 = vmatprep.subr.mxu0 0.0
    %2028 = vmatpush1.msra.mxu0 %v1802
    %2029 = vmatprep.subr.mxu0 0.0
    %2030 = vmatpush1.msra.mxu0 %v1801
    %2031 = vmatprep.subr.mxu0 0.0
    %2032 = vmatpush1.msra.mxu0 %v1800
    %2033 = vmatprep.subr.mxu0 0.0
    %2034 = vmatpush1.msra.mxu0 %v1799
    %2035 = vmatprep.subr.mxu0 0.0
    %2036 = vmatpush2.msra.mxu0 0.0
    %2037 = vmatprep.subr.mxu0 0.0
    %2038 = vmatpush2.msra.mxu0 0.0
    %2039 = vmatprep.subr.mxu0 0.0
    %2040 = vmatpush2.msra.mxu0 0.0
    %2041 = vmatprep.subr.mxu0 0.0
    %2042 = vmatpush2.msra.mxu0 0.0
    %2043 = vmatprep.subr.mxu0 0.0
    %2044 = vmatpush2.msra.mxu0 0.0
    %2045 = vmatprep.subr.mxu0 0.0
    %2046 = vmatpush2.msra.mxu0 0.0
    %2047 = vmatprep.subr.mxu0 0.0
    %2048 = vmatpush2.msra.mxu0 0.0
    %2049 = vmatprep.subr.mxu0 0.0
    %2050 = vmatpush2.msra.mxu0 0.0
    %2051 = vmatprep.subr.mxu0 0.0
    %2052 = vmatpush2.msra.mxu0 %v1822
    %2053 = vmatprep.subr.mxu0 0.0
    %2054 = vmatpush2.msra.mxu0 %v1821
    %2055 = vmatprep.subr.mxu0 0.0
    %2056 = vmatpush2.msra.mxu0 %v1820
    %2057 = vmatprep.subr.mxu0 0.0
    %2058 = vmatpush2.msra.mxu0 %v1819
    %2059 = vmatprep.subr.mxu0 0.0
    %2060 = vmatpush2.msra.mxu0 %v1818
    %2061 = vmatprep.subr.mxu0 0.0
    %2062 = vmatpush2.msra.mxu0 %v1817
    %2063 = vmatprep.subr.mxu0 0.0
    %2064 = vmatpush2.msra.mxu0 %v1816
    %2065 = vmatprep.subr.mxu0 0.0
    %2066 = vmatpush2.msra.mxu0 %v1815
    %2067 = vmatprep.mubr.f32.mxu0 %v1998
    %2068 = vmatmul.mubr.f32.gmra.mxu0 %v1907
    %v2069 = vpop.f32.mrf.mxu0
    %v2070 = vadd.f32 0.0, %v2069
    %v2071 = vpop.f32.mrf.mxu0
    %2072 = vmatprep.mubr.f32.mxu0 %v2001
    %2073 = vmatmul.mubr.f32.gmra.mxu0 %v1913
    %v2074 = vpop.f32.mrf.mxu0
    %v2075 = vadd.f32 0.0, %v2074
    %v2076 = vpop.f32.mrf.mxu0
    %2077 = vdwg.mxu0
    %v2078 = vadd.f32 %v1989, %v2070
    %v2079 = vadd.f32 %v1994, %v2075
    %v2081 = vrot.slane %v1989, 1
    %2082 = vrot.lane.b32.xlu0 %v2081, 64
    %v2083 = vpop.permute.xlu0 %2082
    %v2085 = vadd.f32 %v2078, %v2083
    %v2087 = vrot.slane %v1994, 1
    %v2088 = vsel %vm378, %v2081, %v2087
    %2089 = vrot.lane.b32.xlu0 %v2088, 64
    %v2090 = vpop.permute.xlu0 %2089
    %v2092 = vadd.f32 %v2078, %v2090
    %2093 = vrot.lane.b32.xlu0 %v2087, 64
    %v2094 = vpop.permute.xlu0 %2093
    %v2096 = vadd.f32 %v2079, %v2094
    %v2098 = vrot.slane %v2085, 1
    %v2101 = vrot.slane %v2092, 2
    %v2104 = vrot.slane %v2096, 3
    %v2106 = vsel %vm368, %v2085, %v2098
    %v2107 = vsel %vm372, %v2106, %v2101
    %v2108 = vsel %vm376, %v2107, %v2104
    %v2110 = vrot.slane %v2070, 1
    %v2112 = vrot.slane %v2070, 2
    %v2115 = vrot.slane %v2075, 3
    %v2117 = vsel %vm368, %v2070, %v2110
    %v2118 = vsel %vm372, %v2117, %v2112
    %v2119 = vsel %vm376, %v2118, %v2115
    %v2120 = vstv %s1768
    %v2121 = vadd.f32 %v2108, %v2120
    %v2122 = vmax.f32 %v2121, 0.0
    %v2123 = vstv %s1769
    %v2124 = vadd.f32 %v2122, %v2123
    %v2126 = vsel %vm1915, %v2124, 0
    %2128 = vmatprep.subr.mxu0 0.0
    %2129 = vmatpush1.msra.mxu0 0.0
    %2130 = vmatprep.subr.mxu0 0.0
    %2131 = vmatpush1.msra.mxu0 0.0
    %2132 = vmatprep.subr.mxu0 0.0
    %2133 = vmatpush1.msra.mxu0 0.0
    %2134 = vmatprep.subr.mxu0 0.0
    %2135 = vmatpush1.msra.mxu0 0.0
    %2136 = vmatprep.subr.mxu0 0.0
    %2137 = vmatpush1.msra.mxu0 0.0
    %2138 = vmatprep.subr.mxu0 0.0
    %2139 = vmatpush1.msra.mxu0 0.0
    %2140 = vmatprep.subr.mxu0 0.0
    %2141 = vmatpush1.msra.mxu0 0.0
    %2142 = vmatprep.subr.mxu0 0.0
    %2143 = vmatpush1.msra.mxu0 0.0
    %2144 = vmatprep.subr.mxu0 %v1838
    %2145 = vmatpush1.msra.mxu0 %v1837
    %2146 = vmatprep.subr.mxu0 %v1836
    %2147 = vmatpush1.msra.mxu0 %v1835
    %2148 = vmatprep.subr.mxu0 %v1834
    %2149 = vmatpush1.msra.mxu0 %v1833
    %2150 = vmatprep.subr.mxu0 %v1832
    %2151 = vmatpush1.msra.mxu0 %v1831
    %2152 = vmatprep.subr.mxu0 %v1830
    %2153 = vmatpush1.msra.mxu0 %v1829
    %2154 = vmatprep.subr.mxu0 %v1828
    %2155 = vmatpush1.msra.mxu0 %v1827
    %2156 = vmatprep.subr.mxu0 %v1826
    %2157 = vmatpush1.msra.mxu0 %v1825
    %2158 = vmatprep.subr.mxu0 %v1824
    %2159 = vmatpush1.msra.mxu0 %v1823
    %2160 = vmatprep.subr.mxu0 0.0
    %2161 = vmatpush2.msra.mxu0 0.0
    %2162 = vmatprep.subr.mxu0 0.0
    %2163 = vmatpush2.msra.mxu0 0.0
    %2164 = vmatprep.subr.mxu0 0.0
    %2165 = vmatpush2.msra.mxu0 0.0
    %2166 = vmatprep.subr.mxu0 0.0
    %2167 = vmatpush2.msra.mxu0 0.0
    %2168 = vmatprep.subr.mxu0 0.0
    %2169 = vmatpush2.msra.mxu0 0.0
    %2170 = vmatprep.subr.mxu0 0.0
    %2171 = vmatpush2.msra.mxu0 0.0
    %2172 = vmatprep.subr.mxu0 0.0
    %2173 = vmatpush2.msra.mxu0 0.0
    %2174 = vmatprep.subr.mxu0 0.0
    %2175 = vmatpush2.msra.mxu0 0.0
    %2176 = vmatprep.subr.mxu0 0.0
    %2177 = vmatpush2.msra.mxu0 0.0
    %2178 = vmatprep.subr.mxu0 0.0
    %2179 = vmatpush2.msra.mxu0 0.0
    %2180 = vmatprep.subr.mxu0 0.0
    %2181 = vmatpush2.msra.mxu0 0.0
    %2182 = vmatprep.subr.mxu0 0.0
    %2183 = vmatpush2.msra.mxu0 0.0
    %2184 = vmatprep.subr.mxu0 0.0
    %2185 = vmatpush2.msra.mxu0 0.0
    %2186 = vmatprep.subr.mxu0 0.0
    %2187 = vmatpush2.msra.mxu0 0.0
    %2188 = vmatprep.subr.mxu0 0.0
    %2189 = vmatpush2.msra.mxu0 0.0
    %2190 = vmatprep.subr.mxu0 0.0
    %2191 = vmatpush2.msra.mxu0 0.0
    %2192 = vmatprep.mubr.f32.mxu0 0.0
    %2193 = vmatmul.mubr.f32.gmra.mxu0 %v2126
    %v2194 = vpop.f32.mrf.mxu0
    %v2195 = vadd.f32 0.0, %v2194
    %v2196 = vpop.f32.mrf.mxu0
    %v2197 = vadd.f32 0.0, %v2196
    %2198 = vdwg.mxu0
    %v2200 = vrot.slane %v2195, 7
    %v2202 = vsel %vm366, 0.0, %v2200
    %2204 = vrot.lane.b32.xlu0 %v2202, 64
    %v2205 = vpop.permute.xlu0 %2204
    %v2207 = vadd.f32 %v2195, %v2205
    %v2209 = vrot.slane %v2197, 1
    %v2211 = vsel %vm366, %v2209, 0.0
    %2213 = vrot.lane.b32.xlu0 %v2211, 64
    %v2214 = vpop.permute.xlu0 %2213
    %v2216 = vadd.f32 %v2207, %v2214
    %v2217 = vrot.slane %v2195, 1
    %v2219 = vsel %vm366, 0.0, %v2217
    %v2221 = vrot.slane %v2219, 6
    %2222 = vrot.lane.b32.xlu0 %v2221, 64
    %v2223 = vpop.permute.xlu0 %2222
    %v2225 = vadd.f32 %v2195, %v2223
    %v2226 = vrot.slane %v2197, 3
    %v2228 = vsel %vm366, %v2226, 0.0
    %v2230 = vrot.slane %v2228, 6
    %2231 = vrot.lane.b32.xlu0 %v2230, 64
    %v2232 = vpop.permute.xlu0 %2231
    %v2234 = vadd.f32 %v2225, %v2232
    %v2235 = vrot.slane %v2195, 3
    %v2237 = vsel %vm366, 0.0, %v2235
    %v2239 = vrot.slane %v2237, 4
    %2240 = vrot.lane.b32.xlu0 %v2239, 64
    %v2241 = vpop.permute.xlu0 %2240
    %v2243 = vadd.f32 %v2195, %v2241
    %v2244 = vrot.slane %v2197, 5
    %v2246 = vsel %vm366, %v2244, 0.0
    %v2248 = vrot.slane %v2246, 4
    %2249 = vrot.lane.b32.xlu0 %v2248, 64
    %v2250 = vpop.permute.xlu0 %2249
    %v2252 = vadd.f32 %v2243, %v2250
    %v2253 = vrot.slane %v2195, 5
    %v2255 = vsel %vm366, 0.0, %v2253
    %v2257 = vrot.slane %v2255, 2
    %2258 = vrot.lane.b32.xlu0 %v2257, 64
    %v2259 = vpop.permute.xlu0 %2258
    %v2261 = vadd.f32 %v2195, %v2259
    %v2262 = vrot.slane %v2197, 7
    %v2264 = vsel %vm366, %v2262, 0.0
    %v2266 = vrot.slane %v2264, 2
    %2267 = vrot.lane.b32.xlu0 %v2266, 64
    %v2268 = vpop.permute.xlu0 %2267
    %v2270 = vadd.f32 %v2261, %v2268
    %v2271 = vsel %vm368, %v2216, %v2234
    %v2272 = vsel %vm372, %v2271, %v2252
    %v2273 = vsel %vm376, %v2272, %v2270
    %v2274 = vstv %s1770
    %v2275 = vmul.f32 %v2273, %v2274
    %v2276 = vstv %s1771
    %v2277 = vadd.f32 %v2275, %v2276
    %v2278 = vadd.f32 %v2277, %v2119
    %v2279 = vmax.f32 %v2278, 0.0
    %vm2280 = vcmask 1041920
    %v2281 = vsel %vm2280, %v2279, 0.0
    %v2282 = vrot.slane %v2281, 4
    %v2283 = vadd.f32 %v2281, %v2282
    %v2284 = vrot.slane %v2283, 2
    %v2285 = vadd.f32 %v2283, %v2284
    %v2286 = vrot.slane %v2285, 1
    %v2287 = vadd.f32 %v2285, %v2286
    %2289 = vrot.lane.b32.xlu0 %v2287, 96
    %v2290 = vpop.permute.xlu0 %2289
    %v2292 = vadd.f32 %v2287, %v2290
    %v2294 = vrot.slane %v2279, 2
    %v2296 = vsel %vm2280, %v2294, 0.0
    %v2297 = vrot.slane %v2296, 4
    %v2298 = vadd.f32 %v2296, %v2297
    %v2299 = vrot.slane %v2298, 2
    %v2300 = vadd.f32 %v2298, %v2299
    %v2301 = vrot.slane %v2300, 1
    %v2302 = vadd.f32 %v2300, %v2301
    %2304 = vrot.lane.b32.xlu0 %v2302, 96
    %v2305 = vpop.permute.xlu0 %2304
    %v2307 = vadd.f32 %v2302, %v2305
    %v2308 = vrot.slane %v2279, 4
    %v2310 = vsel %vm2280, %v2308, 0.0
    %v2311 = vrot.slane %v2310, 4
    %v2312 = vadd.f32 %v2310, %v2311
    %v2313 = vrot.slane %v2312, 2
    %v2314 = vadd.f32 %v2312, %v2313
    %v2315 = vrot.slane %v2314, 1
    %v2316 = vadd.f32 %v2314, %v2315
    %2318 = vrot.lane.b32.xlu0 %v2316, 96
    %v2319 = vpop.permute.xlu0 %2318
    %v2321 = vadd.f32 %v2316, %v2319
    %v2322 = vrot.slane %v2279, 6
    %v2324 = vsel %vm2280, %v2322, 0.0
    %v2325 = vrot.slane %v2324, 4
    %v2326 = vadd.f32 %v2324, %v2325
    %v2327 = vrot.slane %v2326, 2
    %v2328 = vadd.f32 %v2326, %v2327
    %v2329 = vrot.slane %v2328, 1
    %v2330 = vadd.f32 %v2328, %v2329
    %2332 = vrot.lane.b32.xlu0 %v2330, 96
    %v2333 = vpop.permute.xlu0 %2332
    %v2335 = vadd.f32 %v2330, %v2333
    %v2337 = vrot.slane %v2307, 7
    %v2340 = vrot.slane %v2321, 6
    %v2343 = vrot.slane %v2335, 5
    %v2345 = vsel %vm366, %v2292, %v2337
    %v2346 = vsel %vm368, %v2345, %v2340
    %v2347 = vsel %vm370, %v2346, %v2343
    %v2348 = vmul.f32 %v2347, 0.25
    %v2350 = vrot.slane %v2348, 2
    %v2352 = vsub.f32 %v2348, %v2350
    %v2353 = vmul.f32 %v2352, %v2352
    %s2354 = sld [smem:[#allocation2 + $0xf]]
    %v2355 = vld [vmem:[%s12] sm:$0x1]
    %v2357 = vlaneseq
    %v2358 = vshrl.u32 %v2357, 7
    %v2359 = vsub.s32 0, %v2358
    %v2360 = vrot.slane %v2355, %v2359
    %2361 = vrot.lane.b32.xlu0 %v2360, 64
    %v2362 = vpop.permute.xlu0 %2361
    %v2364 = vmul.f32 %v2353, %v2362
    %2366 = vrot.lane.b32.xlu0 %v2364, 64
    %v2367 = vpop.permute.xlu0 %2366
    %vm2369 = vcmask 254976
    %v2370 = vsel %vm2369, %v2367, 0.0
    %2371 = vadd.xlane.f32.xlu0 %v2370
    %v2372 = vpop.xlane.xlu0 %2371
    %v2373 = vstv %s2354
    %v2374 = vadd.f32 %v2372, %v2373
    %vm2375 = vcmask 1024
    %2376 = vst.msk [vmem:[%s13] sm:$0x3] %vm2375, %v2374
    // Predicated region
    $region102: #{find_cluster_forward.1} parent=1 // pred_check
      _
    $region103: #{find_cluster_forward.1} parent=1 // pred_check_branch
      %2378 = sbr.rel (0) target = $region105
    $region104: #{find_cluster_forward.1} parent=1 // pred_region
      _
    $region105: #{find_cluster_forward.1} parent=1 // pred_fallthru
      _
    // Predicated region
    $region106: #{find_cluster_forward.1} parent=1 // pred_check
      _
    $region107: #{find_cluster_forward.1} parent=1 // pred_check_branch
      %2380 = sbr.rel (0) target = $region109
    $region108: #{find_cluster_forward.1} parent=1 // pred_region
      _
    $region109: #{find_cluster_forward.1} parent=1 // pred_fallthru
      _
    %2381 = vsyncpa [#allocation3], 1
    %2382 = vsyncpa [#allocation7], 1
    %2383 = vsyncpa [#allocation10], 1
    %2384 = vsyncpa [#allocation13], 1
    %2385 = vsyncpa [#allocation16], 1
    %2386 = vsyncpa [#allocation19], 1
    %2387 = vsyncpa [#allocation4], 1

</llo_original>
